<compile_context>
chip_gen: v6e
topology: v6e:2x2x1
jax: 0.10.0
libtpu: 0.0.40
codegen_flags: <defaults>
</compile_context>

<pallas_src>
import functools

import jax
import jax.numpy as jnp
import numpy as np
from jax.experimental import pallas as pl
from jax.experimental.pallas import tpu as pltpu

SIGMA_MAX = 2.0   # only used by the conditioned_sigma head (see TODO below)
SIGMA_MIN = -20.0


# ----------------------------------------------------------------------------
# Fused kernel: multi-layer LSTM recurrence + actor mu-head in one invocation.
# ----------------------------------------------------------------------------
def _lstm_cell(gates, c_prev, H):
    # PyTorch gate ordering: i, f, g, o.  With the module default H=128 these
    # slices are whole 128-lane groups (lane-aligned, no relayout).
    i = jax.nn.sigmoid(gates[:, 0 * H:1 * H])
    f = jax.nn.sigmoid(gates[:, 1 * H:2 * H])
    g = jnp.tanh(gates[:, 2 * H:3 * H])
    o = jax.nn.sigmoid(gates[:, 3 * H:4 * H])
    c_new = f * c_prev + i * g
    h_new = o * jnp.tanh(c_new)
    return h_new, c_new


def _fused_kernel(*refs, T, B, I, H, L, max_action, unbounded, unroll,
                  mm_dtype):
    """Ref layout:
       inputs : x (T,B,I), wih0 (I,4H), whh0 (H,4H), b0 (1,4H),
                [wcat_l (2H,4H), b_l (1,4H)] * (L-1), wmu (H,A), bmu (1,A)
       outputs: mu (B,A), h_out (L,B,H), c_out (L,B,H)
       scratch: pre (T,B,4H)
    """
    f32 = jnp.float32
    x_ref = refs[0]
    wih0_ref, whh0_ref, b0_ref = refs[1], refs[2], refs[3]
    deep_refs = [(refs[4 + 2 * (l - 1)], refs[5 + 2 * (l - 1)])
                 for l in range(1, L)]
    wmu_ref = refs[4 + 2 * (L - 1)]
    bmu_ref = refs[5 + 2 * (L - 1)]
    mu_ref = refs[6 + 2 * (L - 1)]
    h_ref = refs[7 + 2 * (L - 1)]
    c_ref = refs[8 + 2 * (L - 1)]
    pre_scr = refs[9 + 2 * (L - 1)]

    # -- Hoisted layer-0 input projection: one MXU matmul for the whole seq. --
    # TODO(synk): for production T/B chunk this over T (T-tiled BlockSpec or
    # grid axis) so the (T,B,4H) scratch stays inside v7x's 64 MiB VMEM.
    x2 = x_ref[...].reshape(T * B, I).astype(mm_dtype)
    pre = jnp.dot(x2, wih0_ref[...], preferred_element_type=f32) + b0_ref[...]
    pre_scr[...] = pre.reshape(T, B, 4 * H)

    # -- Hoist loop-invariant weight / bias loads out of the time loop. -------
    whh0 = whh0_ref[...]
    deep_w = [(wr[...], br[...]) for (wr, br) in deep_refs]
    # TODO(synk): on v5e, hold whh0 / wcat in the MXU across the loop with
    # pltpu.matmul_push_rhs / matmul_acc_lhs / matmul_pop instead of jnp.dot.

    # -- Sequential recurrence; (h, c) state lives in the loop carry (vregs). -
    def step(t, carry):
        hs, cs = carry
        # Layer 0: x @ W_ih + b is already precomputed in pre_scr.
        gates = pre_scr[t] + jnp.dot(hs[0].astype(mm_dtype), whh0,
                                     preferred_element_type=f32)
        h_new, c_new = _lstm_cell(gates, cs[0], H)
        new_h, new_c = [h_new], [c_new]
        x_t = h_new
        # Layers 1..L-1: one fused matmul on [x_t || h_l] with [W_ih ; W_hh].
        for l in range(1, L):
            wcat, b = deep_w[l - 1]
            lhs = jnp.concatenate([x_t, hs[l]], axis=-1).astype(mm_dtype)
            gates = jnp.dot(lhs, wcat, preferred_element_type=f32) + b
            h_new, c_new = _lstm_cell(gates, cs[l], H)
            new_h.append(h_new)
            new_c.append(c_new)
            x_t = h_new
        return tuple(new_h), tuple(new_c)

    # TODO(synk): accept a caller-provided (h0, c0) for the state-is-not-None
    # path of the PyTorch module (currently only zero init / state=None).
    zero = jnp.zeros((B, H), f32)
    init = (tuple([zero] * L), tuple([zero] * L))
    hs, cs = jax.lax.fori_loop(0, T, step, init, unroll=unroll)

    # -- Single writeback of the final hidden / cell state. -------------------
    for l in range(L):
        h_ref[l] = hs[l]
        c_ref[l] = cs[l]

    # -- Actor head on the last layer's final hidden state (== s[:, -1]). -----
    mu = jnp.dot(hs[L - 1].astype(mm_dtype), wmu_ref[...],
                 preferred_element_type=f32) + bmu_ref[...]
    if not unbounded:
        mu = max_action * jnp.tanh(mu)
    mu_ref[...] = mu
    # TODO(synk): conditioned_sigma=True head (extra Linear + clamp to
    # [SIGMA_MIN, SIGMA_MAX] + exp) not needed for the default module config.


# ----------------------------------------------------------------------------
# Forward pass (matches RecurrentActorProb.forward with state=None)
# ----------------------------------------------------------------------------
def recurrent_actor_prob_forward(params, s, *, hidden_size, layer_num,
                                 max_action=1.0, unbounded=False,
                                 mm_dtype=jnp.float32):
    s = jnp.asarray(s, jnp.float32)
    if s.ndim == 2:                       # (B, I) -> (B, 1, I)
        s = s[:, None, :]
    B, T, I = s.shape
    H, L = hidden_size, layer_num
    A = params["wmu_t"].shape[-1]

    # Pad batch once to a multiple of 8 (f32 sublane count).
    Bp = ((B + 7) // 8) * 8
    if Bp != B:
        s = jnp.pad(s, ((0, Bp - B), (0, 0), (0, 0)))

    # Time-major layout for the recurrence.
    # TODO(synk): for production T*B*I fold this transpose into the hoisted
    # projection / a T-tiled BlockSpec so it never costs a standalone HBM pass.
    x = jnp.transpose(s, (1, 0, 2))       # (T, Bp, I)

    p0 = params["lstm"][0]
    inputs = [x, p0["wih_t"].astype(mm_dtype), p0["whh_t"].astype(mm_dtype),
              p0["b"]]
    for l in range(1, L):
        p = params["lstm"][l]
        wcat = jnp.concatenate([p["wih_t"], p["whh_t"]], axis=0)   # (2H, 4H)
        inputs += [wcat.astype(mm_dtype), p["b"]]
    inputs += [params["wmu_t"].astype(mm_dtype), params["bmu"]]

    # Full unroll for short sequences; partial unroll keeps LLO scheduling
    # visibility for longer ones without blowing vreg live ranges.
    unroll = True if T <= 16 else 4

    kern = functools.partial(
        _fused_kernel, T=T, B=Bp, I=I, H=H, L=L,
        max_action=float(max_action), unbounded=bool(unbounded),
        unroll=unroll, mm_dtype=mm_dtype)

    in_bytes = sum(int(np.prod(a.shape)) * a.dtype.itemsize for a in inputs)
    out_bytes = (Bp * A + 2 * L * Bp * H) * 4
    scr_bytes = T * Bp * 4 * H * 4
    flops = (2 * T * Bp * I * 4 * H                    # hoisted input proj
             + 2 * T * Bp * H * 4 * H                  # layer-0 recurrent
             + (L - 1) * 2 * T * Bp * 2 * H * 4 * H    # fused deep layers
             + 2 * Bp * H * A)                         # mu head
    transc = 5 * T * Bp * H * L + (0 if unbounded else Bp * A)
    cost = pl.CostEstimate(flops=int(flops), transcendentals=int(transc),
                           bytes_accessed=int(in_bytes + out_bytes))
    vmem_need = 2 * (in_bytes + out_bytes) + scr_bytes + (4 << 20)
    vmem_limit = int(min(max(vmem_need, 16 << 20), 64 << 20))

    # Single invocation (no grid): every operand maps to one full-array VMEM
    # block; the only HBM traffic is one DMA per operand.
    # TODO(synk): for production B, add a leading batch-tile grid axis marked
    # "parallel" (grid=(Bp//Btile,), Btile multiple of 8) for the second v7x
    # TensorCore and to cap per-invocation VMEM.
    mu, hT, cT = pl.pallas_call(
        kern,
        out_shape=(jax.ShapeDtypeStruct((Bp, A), jnp.float32),
                   jax.ShapeDtypeStruct((L, Bp, H), jnp.float32),
                   jax.ShapeDtypeStruct((L, Bp, H), jnp.float32)),
        scratch_shapes=[pltpu.VMEM((T, Bp, 4 * H), jnp.float32)],
        cost_estimate=cost,
        compiler_params=pltpu.CompilerParams(vmem_limit_bytes=vmem_limit),
    )(*inputs)

    mu = mu[:B]
    # sigma is input-independent: exp(sigma_param) broadcast to mu's shape.
    sigma = jnp.broadcast_to(jnp.exp(params["sigma_param"]), (B, A))
    # PyTorch returns h,c as (L, B, H); the module transposes to (B, L, H).
    h = jnp.transpose(hT, (1, 0, 2))[:B]
    c = jnp.transpose(cT, (1, 0, 2))[:B]
    return (mu, sigma), {"h": h, "c": c}


# ----------------------------------------------------------------------------
# Parameter construction (deterministic, PyTorch-style uniform init)
# ----------------------------------------------------------------------------
def init_params(key, layer_num, input_size, hidden_size, action_dim):
    k = 1.0 / np.sqrt(hidden_size)
    params = {"lstm": []}
    for layer in range(layer_num):
        in_sz = input_size if layer == 0 else hidden_size
        key, k1, k2, k3, k4 = jax.random.split(key, 5)
        wih = jax.random.uniform(k1, (4 * hidden_size, in_sz),
                                 minval=-k, maxval=k, dtype=jnp.float32)
        whh = jax.random.uniform(k2, (4 * hidden_size, hidden_size),
                                 minval=-k, maxval=k, dtype=jnp.float32)
        bih = jax.random.uniform(k3, (4 * hidden_size,),
                                 minval=-k, maxval=k, dtype=jnp.float32)
        bhh = jax.random.uniform(k4, (4 * hidden_size,),
                                 minval=-k, maxval=k, dtype=jnp.float32)
        params["lstm"].append({
            "wih_t": wih.T,                       # (in, 4H)
            "whh_t": whh.T,                       # (H, 4H)
            "b": (bih + bhh).reshape(1, -1),      # (1, 4H)
        })
    km = 1.0 / np.sqrt(hidden_size)
    key, k5, k6 = jax.random.split(key, 3)
    params["wmu_t"] = jax.random.uniform(
        k5, (hidden_size, action_dim), minval=-km, maxval=km, dtype=jnp.float32)
    params["bmu"] = jax.random.uniform(
        k6, (1, action_dim), minval=-km, maxval=km, dtype=jnp.float32)
    # nn.Parameter(torch.zeros(output_dim, 1)) -> viewed as (1, output_dim)
    params["sigma_param"] = jnp.zeros((1, action_dim), jnp.float32)
    return params


# ----------------------------------------------------------------------------
# Pure-JAX reference (lax.scan LSTM) for a correctness check
# ----------------------------------------------------------------------------
def _reference_forward(params, s, *, hidden_size, layer_num, max_action=1.0,
                       unbounded=False):
    s = jnp.asarray(s, jnp.float32)
    B, T, _ = s.shape
    x = jnp.transpose(s, (1, 0, 2))
    hs, cs = [], []
    for layer in range(layer_num):
        p = params["lstm"][layer]
        H = hidden_size

        def step(carry, xt, p=p, H=H):
            h, c = carry
            g = xt @ p["wih_t"] + h @ p["whh_t"] + p["b"]
            i = jax.nn.sigmoid(g[:, 0 * H:1 * H])
            f = jax.nn.sigmoid(g[:, 1 * H:2 * H])
            gg = jnp.tanh(g[:, 2 * H:3 * H])
            o = jax.nn.sigmoid(g[:, 3 * H:4 * H])
            c = f * c + i * gg
            h = o * jnp.tanh(c)
            return (h, c), h

        (hT, cT), ys = jax.lax.scan(
            step, (jnp.zeros((B, H), jnp.float32),
                   jnp.zeros((B, H), jnp.float32)), x)
        x = ys
        hs.append(hT)
        cs.append(cT)
    logits = x[-1]
    mu = logits @ params["wmu_t"] + params["bmu"]
    if not unbounded:
        mu = max_action * jnp.tanh(mu)
    sigma = jnp.exp(params["sigma_param"] + jnp.zeros_like(mu))
    h = jnp.transpose(jnp.stack(hs, 0), (1, 0, 2))
    c = jnp.transpose(jnp.stack(cs, 0), (1, 0, 2))
    return (mu, sigma), {"h": h, "c": c}


if __name__ == "__main__":
    # Module defaults: hidden_layer_size=128, max_action=1.0, unbounded=False,
    # conditioned_sigma=False.  Small shapes: state_shape=(4,), action=(2,).
    STATE_DIM, ACTION_DIM = 4, 2
    HIDDEN, LAYERS = 128, 2

    key = jax.random.PRNGKey(0)
    key, pkey = jax.random.split(key)
    params = init_params(pkey, LAYERS, STATE_DIM, HIDDEN, ACTION_DIM)

    def run_case(xkey, B, T, mm_dtype, rtol, atol):
        s = jax.random.normal(xkey, (B, T, STATE_DIM), jnp.float32)
        (mu, sigma), st = recurrent_actor_prob_forward(
            params, s, hidden_size=HIDDEN, layer_num=LAYERS, mm_dtype=mm_dtype)
        jax.block_until_ready((mu, sigma, st["h"], st["c"]))
        (mu_r, sigma_r), st_r = _reference_forward(
            params, s, hidden_size=HIDDEN, layer_num=LAYERS)
        assert mu.shape == (B, ACTION_DIM) and sigma.shape == (B, ACTION_DIM)
        assert st["h"].shape == (B, LAYERS, HIDDEN)
        assert st["c"].shape == (B, LAYERS, HIDDEN)
        np.testing.assert_allclose(np.asarray(mu), np.asarray(mu_r),
                                   rtol=rtol, atol=atol)
        np.testing.assert_allclose(np.asarray(sigma), np.asarray(sigma_r),
                                   rtol=rtol, atol=atol)
        np.testing.assert_allclose(np.asarray(st["h"]), np.asarray(st_r["h"]),
                                   rtol=rtol, atol=atol)
        np.testing.assert_allclose(np.asarray(st["c"]), np.asarray(st_r["c"]),
                                   rtol=rtol, atol=atol)

    k1, k2, k3 = jax.random.split(key, 3)
    # 1) default path: f32 MXU, fully-unrolled time loop (T <= 16).
    run_case(k1, B=8, T=8, mm_dtype=jnp.float32, rtol=2e-4, atol=2e-4)
    # 2) T > 16: exercises partial-unroll fori_loop + batch padding/slicing.
    run_case(k2, B=5, T=32, mm_dtype=jnp.float32, rtol=2e-4, atol=2e-4)
    # 3) bf16-MXU path (v6e/v7x-native matmuls, f32 accum); looser tolerance.
    run_case(k3, B=8, T=8, mm_dtype=jnp.bfloat16, rtol=5e-2, atol=5e-2)

    print("KERNEL_OK")
</pallas_src>

<mosaic_0001>
module attributes {stable_mosaic.version = 11 : i64} {
  func.func @_fused_kernel(%arg0: memref<8x8x4xf32, #tpu.memory_space<vmem>>, %arg1: memref<4x512xf32, #tpu.memory_space<vmem>>, %arg2: memref<128x512xf32, #tpu.memory_space<vmem>>, %arg3: memref<1x512xf32, #tpu.memory_space<vmem>>, %arg4: memref<256x512xf32, #tpu.memory_space<vmem>>, %arg5: memref<1x512xf32, #tpu.memory_space<vmem>>, %arg6: memref<128x2xf32, #tpu.memory_space<vmem>>, %arg7: memref<1x2xf32, #tpu.memory_space<vmem>>, %arg8: memref<8x2xf32, #tpu.memory_space<vmem>>, %arg9: memref<2x8x128xf32, #tpu.memory_space<vmem>>, %arg10: memref<2x8x128xf32, #tpu.memory_space<vmem>>, %arg11: memref<8x8x512xf32, #tpu.memory_space<vmem>>) attributes {dimension_semantics = [], scalar_prefetch = 0 : i64, scratch_operands = 1 : i64, tpu.core_type = #tpu.core_type<tc>} {
    %c0 = arith.constant 0 : index
    %c0_0 = arith.constant 0 : index
    %c0_1 = arith.constant 0 : index
    %0 = vector.load %arg0[%c0, %c0_0, %c0_1] : memref<8x8x4xf32, #tpu.memory_space<vmem>>, vector<8x8x4xf32>
    %1 = vector.shape_cast %0 : vector<8x8x4xf32> to vector<64x4xf32>
    %c0_2 = arith.constant 0 : index
    %c0_3 = arith.constant 0 : index
    %2 = vector.load %arg1[%c0_2, %c0_3] : memref<4x512xf32, #tpu.memory_space<vmem>>, vector<4x512xf32>
    %cst = arith.constant dense<0.000000e+00> : vector<64x512xf32>
    %3 = tpu.matmul %1, %2, %cst {dimension_numbers = #tpu.dot_dimension_numbers<[1], [0], [0], [1], [0, 0, 1, 1], [], []>} : vector<64x4xf32>, vector<4x512xf32>, vector<64x512xf32> -> vector<64x512xf32>
    %c0_4 = arith.constant 0 : index
    %c0_5 = arith.constant 0 : index
    %4 = vector.load %arg3[%c0_4, %c0_5] : memref<1x512xf32, #tpu.memory_space<vmem>>, vector<1x512xf32>
    %5 = vector.broadcast %4 : vector<1x512xf32> to vector<64x512xf32>
    %6 = arith.addf %3, %5 : vector<64x512xf32>
    %7 = vector.shape_cast %6 : vector<64x512xf32> to vector<8x8x512xf32>
    %c0_6 = arith.constant 0 : index
    %c0_7 = arith.constant 0 : index
    %c0_8 = arith.constant 0 : index
    %8 = vector.load %arg11[%c0_6, %c0_7, %c0_8] : memref<8x8x512xf32, #tpu.memory_space<vmem>>, vector<8x8x512xf32>
    tpu.vector_store %arg11[%c0_6, %c0_7, %c0_8], %7 {strides = array<i32>} : memref<8x8x512xf32, #tpu.memory_space<vmem>>, vector<8x8x512xf32>,
    %c0_9 = arith.constant 0 : index
    %c0_10 = arith.constant 0 : index
    %9 = vector.load %arg2[%c0_9, %c0_10] : memref<128x512xf32, #tpu.memory_space<vmem>>, vector<128x512xf32>
    %c0_11 = arith.constant 0 : index
    %c0_12 = arith.constant 0 : index
    %10 = vector.load %arg4[%c0_11, %c0_12] : memref<256x512xf32, #tpu.memory_space<vmem>>, vector<256x512xf32>
    %c0_13 = arith.constant 0 : index
    %c0_14 = arith.constant 0 : index
    %11 = vector.load %arg5[%c0_13, %c0_14] : memref<1x512xf32, #tpu.memory_space<vmem>>, vector<1x512xf32>
    %cst_15 = arith.constant 0.000000e+00 : f32
    %12 = vector.broadcast %cst_15 : f32 to vector<8x128xf32>
    %c0_i32 = arith.constant 0 : i32
    %13 = arith.index_cast %c0_i32 : i32 to index
    %c0_16 = arith.constant 0 : index
    %c0_17 = arith.constant 0 : index
    %14 = vector.load %arg11[%13, %c0_16, %c0_17] : memref<8x8x512xf32, #tpu.memory_space<vmem>>, vector<1x8x512xf32>
    %15 = vector.shape_cast %14 : vector<1x8x512xf32> to vector<8x512xf32>
    %cst_18 = arith.constant dense<0.000000e+00> : vector<8x512xf32>
    %16 = tpu.matmul %12, %9, %cst_18 {dimension_numbers = #tpu.dot_dimension_numbers<[1], [0], [0], [1], [0, 0, 1, 1], [], []>} : vector<8x128xf32>, vector<128x512xf32>, vector<8x512xf32> -> vector<8x512xf32>
    %17 = arith.addf %15, %16 : vector<8x512xf32>
    %18 = vector.extract_strided_slice %17 {offsets = [0, 0], sizes = [8, 128], strides = [1, 1]} : vector<8x512xf32> to vector<8x128xf32>
    %19 = arith.negf %18 : vector<8x128xf32>
    %20 = math.exp %19 : vector<8x128xf32>
    %cst_19 = arith.constant 1.000000e+00 : f32
    %21 = vector.broadcast %cst_19 : f32 to vector<8x128xf32>
    %22 = arith.addf %21, %20 : vector<8x128xf32>
    %23 = arith.divf %21, %22 : vector<8x128xf32>
    %24 = vector.extract_strided_slice %17 {offsets = [0, 128], sizes = [8, 128], strides = [1, 1]} : vector<8x512xf32> to vector<8x128xf32>
    %25 = arith.negf %24 : vector<8x128xf32>
    %26 = math.exp %25 : vector<8x128xf32>
    %cst_20 = arith.constant 1.000000e+00 : f32
    %27 = vector.broadcast %cst_20 : f32 to vector<8x128xf32>
    %28 = arith.addf %27, %26 : vector<8x128xf32>
    %29 = arith.divf %27, %28 : vector<8x128xf32>
    %30 = vector.extract_strided_slice %17 {offsets = [0, 256], sizes = [8, 128], strides = [1, 1]} : vector<8x512xf32> to vector<8x128xf32>
    %31 = math.tanh %30 : vector<8x128xf32>
    %32 = vector.extract_strided_slice %17 {offsets = [0, 384], sizes = [8, 128], strides = [1, 1]} : vector<8x512xf32> to vector<8x128xf32>
    %33 = arith.negf %32 : vector<8x128xf32>
    %34 = math.exp %33 : vector<8x128xf32>
    %cst_21 = arith.constant 1.000000e+00 : f32
    %35 = vector.broadcast %cst_21 : f32 to vector<8x128xf32>
    %36 = arith.addf %35, %34 : vector<8x128xf32>
    %37 = arith.divf %35, %36 : vector<8x128xf32>
    %38 = arith.mulf %29, %12 : vector<8x128xf32>
    %39 = arith.mulf %23, %31 : vector<8x128xf32>
    %40 = arith.addf %38, %39 : vector<8x128xf32>
    %41 = math.tanh %40 : vector<8x128xf32>
    %42 = arith.mulf %37, %41 : vector<8x128xf32>
    %43 = tpu.concatenate %42, %12 in 1 : vector<8x128xf32>, vector<8x128xf32> -> vector<8x256xf32>
    %cst_22 = arith.constant dense<0.000000e+00> : vector<8x512xf32>
    %44 = tpu.matmul %43, %10, %cst_22 {dimension_numbers = #tpu.dot_dimension_numbers<[1], [0], [0], [1], [0, 0, 1, 1], [], []>} : vector<8x256xf32>, vector<256x512xf32>, vector<8x512xf32> -> vector<8x512xf32>
    %45 = vector.broadcast %11 : vector<1x512xf32> to vector<8x512xf32>
    %46 = arith.addf %44, %45 : vector<8x512xf32>
    %47 = vector.extract_strided_slice %46 {offsets = [0, 0], sizes = [8, 128], strides = [1, 1]} : vector<8x512xf32> to vector<8x128xf32>
    %48 = arith.negf %47 : vector<8x128xf32>
    %49 = math.exp %48 : vector<8x128xf32>
    %cst_23 = arith.constant 1.000000e+00 : f32
    %50 = vector.broadcast %cst_23 : f32 to vector<8x128xf32>
    %51 = arith.addf %50, %49 : vector<8x128xf32>
    %52 = arith.divf %50, %51 : vector<8x128xf32>
    %53 = vector.extract_strided_slice %46 {offsets = [0, 128], sizes = [8, 128], strides = [1, 1]} : vector<8x512xf32> to vector<8x128xf32>
    %54 = arith.negf %53 : vector<8x128xf32>
    %55 = math.exp %54 : vector<8x128xf32>
    %cst_24 = arith.constant 1.000000e+00 : f32
    %56 = vector.broadcast %cst_24 : f32 to vector<8x128xf32>
    %57 = arith.addf %56, %55 : vector<8x128xf32>
    %58 = arith.divf %56, %57 : vector<8x128xf32>
    %59 = vector.extract_strided_slice %46 {offsets = [0, 256], sizes = [8, 128], strides = [1, 1]} : vector<8x512xf32> to vector<8x128xf32>
    %60 = math.tanh %59 : vector<8x128xf32>
    %61 = vector.extract_strided_slice %46 {offsets = [0, 384], sizes = [8, 128], strides = [1, 1]} : vector<8x512xf32> to vector<8x128xf32>
    %62 = arith.negf %61 : vector<8x128xf32>
    %63 = math.exp %62 : vector<8x128xf32>
    %cst_25 = arith.constant 1.000000e+00 : f32
    %64 = vector.broadcast %cst_25 : f32 to vector<8x128xf32>
    %65 = arith.addf %64, %63 : vector<8x128xf32>
    %66 = arith.divf %64, %65 : vector<8x128xf32>
    %67 = arith.mulf %58, %12 : vector<8x128xf32>
    %68 = arith.mulf %52, %60 : vector<8x128xf32>
    %69 = arith.addf %67, %68 : vector<8x128xf32>
    %70 = math.tanh %69 : vector<8x128xf32>
    %71 = arith.mulf %66, %70 : vector<8x128xf32>
    %c1_i32 = arith.constant 1 : i32
    %72 = arith.index_cast %c1_i32 : i32 to index
    %c0_26 = arith.constant 0 : index
    %c0_27 = arith.constant 0 : index
    %73 = vector.load %arg11[%72, %c0_26, %c0_27] : memref<8x8x512xf32, #tpu.memory_space<vmem>>, vector<1x8x512xf32>
    %74 = vector.shape_cast %73 : vector<1x8x512xf32> to vector<8x512xf32>
    %cst_28 = arith.constant dense<0.000000e+00> : vector<8x512xf32>
    %75 = tpu.matmul %42, %9, %cst_28 {dimension_numbers = #tpu.dot_dimension_numbers<[1], [0], [0], [1], [0, 0, 1, 1], [], []>} : vector<8x128xf32>, vector<128x512xf32>, vector<8x512xf32> -> vector<8x512xf32>
    %76 = arith.addf %74, %75 : vector<8x512xf32>
    %77 = vector.extract_strided_slice %76 {offsets = [0, 0], sizes = [8, 128], strides = [1, 1]} : vector<8x512xf32> to vector<8x128xf32>
    %78 = arith.negf %77 : vector<8x128xf32>
    %79 = math.exp %78 : vector<8x128xf32>
    %cst_29 = arith.constant 1.000000e+00 : f32
    %80 = vector.broadcast %cst_29 : f32 to vector<8x128xf32>
    %81 = arith.addf %80, %79 : vector<8x128xf32>
    %82 = arith.divf %80, %81 : vector<8x128xf32>
    %83 = vector.extract_strided_slice %76 {offsets = [0, 128], sizes = [8, 128], strides = [1, 1]} : vector<8x512xf32> to vector<8x128xf32>
    %84 = arith.negf %83 : vector<8x128xf32>
    %85 = math.exp %84 : vector<8x128xf32>
    %cst_30 = arith.constant 1.000000e+00 : f32
    %86 = vector.broadcast %cst_30 : f32 to vector<8x128xf32>
    %87 = arith.addf %86, %85 : vector<8x128xf32>
    %88 = arith.divf %86, %87 : vector<8x128xf32>
    %89 = vector.extract_strided_slice %76 {offsets = [0, 256], sizes = [8, 128], strides = [1, 1]} : vector<8x512xf32> to vector<8x128xf32>
    %90 = math.tanh %89 : vector<8x128xf32>
    %91 = vector.extract_strided_slice %76 {offsets = [0, 384], sizes = [8, 128], strides = [1, 1]} : vector<8x512xf32> to vector<8x128xf32>
    %92 = arith.negf %91 : vector<8x128xf32>
    %93 = math.exp %92 : vector<8x128xf32>
    %cst_31 = arith.constant 1.000000e+00 : f32
    %94 = vector.broadcast %cst_31 : f32 to vector<8x128xf32>
    %95 = arith.addf %94, %93 : vector<8x128xf32>
    %96 = arith.divf %94, %95 : vector<8x128xf32>
    %97 = arith.mulf %88, %40 : vector<8x128xf32>
    %98 = arith.mulf %82, %90 : vector<8x128xf32>
    %99 = arith.addf %97, %98 : vector<8x128xf32>
    %100 = math.tanh %99 : vector<8x128xf32>
    %101 = arith.mulf %96, %100 : vector<8x128xf32>
    %102 = tpu.concatenate %101, %71 in 1 : vector<8x128xf32>, vector<8x128xf32> -> vector<8x256xf32>
    %cst_32 = arith.constant dense<0.000000e+00> : vector<8x512xf32>
    %103 = tpu.matmul %102, %10, %cst_32 {dimension_numbers = #tpu.dot_dimension_numbers<[1], [0], [0], [1], [0, 0, 1, 1], [], []>} : vector<8x256xf32>, vector<256x512xf32>, vector<8x512xf32> -> vector<8x512xf32>
    %104 = vector.broadcast %11 : vector<1x512xf32> to vector<8x512xf32>
    %105 = arith.addf %103, %104 : vector<8x512xf32>
    %106 = vector.extract_strided_slice %105 {offsets = [0, 0], sizes = [8, 128], strides = [1, 1]} : vector<8x512xf32> to vector<8x128xf32>
    %107 = arith.negf %106 : vector<8x128xf32>
    %108 = math.exp %107 : vector<8x128xf32>
    %cst_33 = arith.constant 1.000000e+00 : f32
    %109 = vector.broadcast %cst_33 : f32 to vector<8x128xf32>
    %110 = arith.addf %109, %108 : vector<8x128xf32>
    %111 = arith.divf %109, %110 : vector<8x128xf32>
    %112 = vector.extract_strided_slice %105 {offsets = [0, 128], sizes = [8, 128], strides = [1, 1]} : vector<8x512xf32> to vector<8x128xf32>
    %113 = arith.negf %112 : vector<8x128xf32>
    %114 = math.exp %113 : vector<8x128xf32>
    %cst_34 = arith.constant 1.000000e+00 : f32
    %115 = vector.broadcast %cst_34 : f32 to vector<8x128xf32>
    %116 = arith.addf %115, %114 : vector<8x128xf32>
    %117 = arith.divf %115, %116 : vector<8x128xf32>
    %118 = vector.extract_strided_slice %105 {offsets = [0, 256], sizes = [8, 128], strides = [1, 1]} : vector<8x512xf32> to vector<8x128xf32>
    %119 = math.tanh %118 : vector<8x128xf32>
    %120 = vector.extract_strided_slice %105 {offsets = [0, 384], sizes = [8, 128], strides = [1, 1]} : vector<8x512xf32> to vector<8x128xf32>
    %121 = arith.negf %120 : vector<8x128xf32>
    %122 = math.exp %121 : vector<8x128xf32>
    %cst_35 = arith.constant 1.000000e+00 : f32
    %123 = vector.broadcast %cst_35 : f32 to vector<8x128xf32>
    %124 = arith.addf %123, %122 : vector<8x128xf32>
    %125 = arith.divf %123, %124 : vector<8x128xf32>
    %126 = arith.mulf %117, %69 : vector<8x128xf32>
    %127 = arith.mulf %111, %119 : vector<8x128xf32>
    %128 = arith.addf %126, %127 : vector<8x128xf32>
    %129 = math.tanh %128 : vector<8x128xf32>
    %130 = arith.mulf %125, %129 : vector<8x128xf32>
    %c2_i32 = arith.constant 2 : i32
    %131 = arith.index_cast %c2_i32 : i32 to index
    %c0_36 = arith.constant 0 : index
    %c0_37 = arith.constant 0 : index
    %132 = vector.load %arg11[%131, %c0_36, %c0_37] : memref<8x8x512xf32, #tpu.memory_space<vmem>>, vector<1x8x512xf32>
    %133 = vector.shape_cast %132 : vector<1x8x512xf32> to vector<8x512xf32>
    %cst_38 = arith.constant dense<0.000000e+00> : vector<8x512xf32>
    %134 = tpu.matmul %101, %9, %cst_38 {dimension_numbers = #tpu.dot_dimension_numbers<[1], [0], [0], [1], [0, 0, 1, 1], [], []>} : vector<8x128xf32>, vector<128x512xf32>, vector<8x512xf32> -> vector<8x512xf32>
    %135 = arith.addf %133, %134 : vector<8x512xf32>
    %136 = vector.extract_strided_slice %135 {offsets = [0, 0], sizes = [8, 128], strides = [1, 1]} : vector<8x512xf32> to vector<8x128xf32>
    %137 = arith.negf %136 : vector<8x128xf32>
    %138 = math.exp %137 : vector<8x128xf32>
    %cst_39 = arith.constant 1.000000e+00 : f32
    %139 = vector.broadcast %cst_39 : f32 to vector<8x128xf32>
    %140 = arith.addf %139, %138 : vector<8x128xf32>
    %141 = arith.divf %139, %140 : vector<8x128xf32>
    %142 = vector.extract_strided_slice %135 {offsets = [0, 128], sizes = [8, 128], strides = [1, 1]} : vector<8x512xf32> to vector<8x128xf32>
    %143 = arith.negf %142 : vector<8x128xf32>
    %144 = math.exp %143 : vector<8x128xf32>
    %cst_40 = arith.constant 1.000000e+00 : f32
    %145 = vector.broadcast %cst_40 : f32 to vector<8x128xf32>
    %146 = arith.addf %145, %144 : vector<8x128xf32>
    %147 = arith.divf %145, %146 : vector<8x128xf32>
    %148 = vector.extract_strided_slice %135 {offsets = [0, 256], sizes = [8, 128], strides = [1, 1]} : vector<8x512xf32> to vector<8x128xf32>
    %149 = math.tanh %148 : vector<8x128xf32>
    %150 = vector.extract_strided_slice %135 {offsets = [0, 384], sizes = [8, 128], strides = [1, 1]} : vector<8x512xf32> to vector<8x128xf32>
    %151 = arith.negf %150 : vector<8x128xf32>
    %152 = math.exp %151 : vector<8x128xf32>
    %cst_41 = arith.constant 1.000000e+00 : f32
    %153 = vector.broadcast %cst_41 : f32 to vector<8x128xf32>
    %154 = arith.addf %153, %152 : vector<8x128xf32>
    %155 = arith.divf %153, %154 : vector<8x128xf32>
    %156 = arith.mulf %147, %99 : vector<8x128xf32>
    %157 = arith.mulf %141, %149 : vector<8x128xf32>
    %158 = arith.addf %156, %157 : vector<8x128xf32>
    %159 = math.tanh %158 : vector<8x128xf32>
    %160 = arith.mulf %155, %159 : vector<8x128xf32>
    %161 = tpu.concatenate %160, %130 in 1 : vector<8x128xf32>, vector<8x128xf32> -> vector<8x256xf32>
    %cst_42 = arith.constant dense<0.000000e+00> : vector<8x512xf32>
    %162 = tpu.matmul %161, %10, %cst_42 {dimension_numbers = #tpu.dot_dimension_numbers<[1], [0], [0], [1], [0, 0, 1, 1], [], []>} : vector<8x256xf32>, vector<256x512xf32>, vector<8x512xf32> -> vector<8x512xf32>
    %163 = vector.broadcast %11 : vector<1x512xf32> to vector<8x512xf32>
    %164 = arith.addf %162, %163 : vector<8x512xf32>
    %165 = vector.extract_strided_slice %164 {offsets = [0, 0], sizes = [8, 128], strides = [1, 1]} : vector<8x512xf32> to vector<8x128xf32>
    %166 = arith.negf %165 : vector<8x128xf32>
    %167 = math.exp %166 : vector<8x128xf32>
    %cst_43 = arith.constant 1.000000e+00 : f32
    %168 = vector.broadcast %cst_43 : f32 to vector<8x128xf32>
    %169 = arith.addf %168, %167 : vector<8x128xf32>
    %170 = arith.divf %168, %169 : vector<8x128xf32>
    %171 = vector.extract_strided_slice %164 {offsets = [0, 128], sizes = [8, 128], strides = [1, 1]} : vector<8x512xf32> to vector<8x128xf32>
    %172 = arith.negf %171 : vector<8x128xf32>
    %173 = math.exp %172 : vector<8x128xf32>
    %cst_44 = arith.constant 1.000000e+00 : f32
    %174 = vector.broadcast %cst_44 : f32 to vector<8x128xf32>
    %175 = arith.addf %174, %173 : vector<8x128xf32>
    %176 = arith.divf %174, %175 : vector<8x128xf32>
    %177 = vector.extract_strided_slice %164 {offsets = [0, 256], sizes = [8, 128], strides = [1, 1]} : vector<8x512xf32> to vector<8x128xf32>
    %178 = math.tanh %177 : vector<8x128xf32>
    %179 = vector.extract_strided_slice %164 {offsets = [0, 384], sizes = [8, 128], strides = [1, 1]} : vector<8x512xf32> to vector<8x128xf32>
    %180 = arith.negf %179 : vector<8x128xf32>
    %181 = math.exp %180 : vector<8x128xf32>
    %cst_45 = arith.constant 1.000000e+00 : f32
    %182 = vector.broadcast %cst_45 : f32 to vector<8x128xf32>
    %183 = arith.addf %182, %181 : vector<8x128xf32>
    %184 = arith.divf %182, %183 : vector<8x128xf32>
    %185 = arith.mulf %176, %128 : vector<8x128xf32>
    %186 = arith.mulf %170, %178 : vector<8x128xf32>
    %187 = arith.addf %185, %186 : vector<8x128xf32>
    %188 = math.tanh %187 : vector<8x128xf32>
    %189 = arith.mulf %184, %188 : vector<8x128xf32>
    %c3_i32 = arith.constant 3 : i32
    %190 = arith.index_cast %c3_i32 : i32 to index
    %c0_46 = arith.constant 0 : index
    %c0_47 = arith.constant 0 : index
    %191 = vector.load %arg11[%190, %c0_46, %c0_47] : memref<8x8x512xf32, #tpu.memory_space<vmem>>, vector<1x8x512xf32>
    %192 = vector.shape_cast %191 : vector<1x8x512xf32> to vector<8x512xf32>
    %cst_48 = arith.constant dense<0.000000e+00> : vector<8x512xf32>
    %193 = tpu.matmul %160, %9, %cst_48 {dimension_numbers = #tpu.dot_dimension_numbers<[1], [0], [0], [1], [0, 0, 1, 1], [], []>} : vector<8x128xf32>, vector<128x512xf32>, vector<8x512xf32> -> vector<8x512xf32>
    %194 = arith.addf %192, %193 : vector<8x512xf32>
    %195 = vector.extract_strided_slice %194 {offsets = [0, 0], sizes = [8, 128], strides = [1, 1]} : vector<8x512xf32> to vector<8x128xf32>
    %196 = arith.negf %195 : vector<8x128xf32>
    %197 = math.exp %196 : vector<8x128xf32>
    %cst_49 = arith.constant 1.000000e+00 : f32
    %198 = vector.broadcast %cst_49 : f32 to vector<8x128xf32>
    %199 = arith.addf %198, %197 : vector<8x128xf32>
    %200 = arith.divf %198, %199 : vector<8x128xf32>
    %201 = vector.extract_strided_slice %194 {offsets = [0, 128], sizes = [8, 128], strides = [1, 1]} : vector<8x512xf32> to vector<8x128xf32>
    %202 = arith.negf %201 : vector<8x128xf32>
    %203 = math.exp %202 : vector<8x128xf32>
    %cst_50 = arith.constant 1.000000e+00 : f32
    %204 = vector.broadcast %cst_50 : f32 to vector<8x128xf32>
    %205 = arith.addf %204, %203 : vector<8x128xf32>
    %206 = arith.divf %204, %205 : vector<8x128xf32>
    %207 = vector.extract_strided_slice %194 {offsets = [0, 256], sizes = [8, 128], strides = [1, 1]} : vector<8x512xf32> to vector<8x128xf32>
    %208 = math.tanh %207 : vector<8x128xf32>
    %209 = vector.extract_strided_slice %194 {offsets = [0, 384], sizes = [8, 128], strides = [1, 1]} : vector<8x512xf32> to vector<8x128xf32>
    %210 = arith.negf %209 : vector<8x128xf32>
    %211 = math.exp %210 : vector<8x128xf32>
    %cst_51 = arith.constant 1.000000e+00 : f32
    %212 = vector.broadcast %cst_51 : f32 to vector<8x128xf32>
    %213 = arith.addf %212, %211 : vector<8x128xf32>
    %214 = arith.divf %212, %213 : vector<8x128xf32>
    %215 = arith.mulf %206, %158 : vector<8x128xf32>
    %216 = arith.mulf %200, %208 : vector<8x128xf32>
    %217 = arith.addf %215, %216 : vector<8x128xf32>
    %218 = math.tanh %217 : vector<8x128xf32>
    %219 = arith.mulf %214, %218 : vector<8x128xf32>
    %220 = tpu.concatenate %219, %189 in 1 : vector<8x128xf32>, vector<8x128xf32> -> vector<8x256xf32>
    %cst_52 = arith.constant dense<0.000000e+00> : vector<8x512xf32>
    %221 = tpu.matmul %220, %10, %cst_52 {dimension_numbers = #tpu.dot_dimension_numbers<[1], [0], [0], [1], [0, 0, 1, 1], [], []>} : vector<8x256xf32>, vector<256x512xf32>, vector<8x512xf32> -> vector<8x512xf32>
    %222 = vector.broadcast %11 : vector<1x512xf32> to vector<8x512xf32>
    %223 = arith.addf %221, %222 : vector<8x512xf32>
    %224 = vector.extract_strided_slice %223 {offsets = [0, 0], sizes = [8, 128], strides = [1, 1]} : vector<8x512xf32> to vector<8x128xf32>
    %225 = arith.negf %224 : vector<8x128xf32>
    %226 = math.exp %225 : vector<8x128xf32>
    %cst_53 = arith.constant 1.000000e+00 : f32
    %227 = vector.broadcast %cst_53 : f32 to vector<8x128xf32>
    %228 = arith.addf %227, %226 : vector<8x128xf32>
    %229 = arith.divf %227, %228 : vector<8x128xf32>
    %230 = vector.extract_strided_slice %223 {offsets = [0, 128], sizes = [8, 128], strides = [1, 1]} : vector<8x512xf32> to vector<8x128xf32>
    %231 = arith.negf %230 : vector<8x128xf32>
    %232 = math.exp %231 : vector<8x128xf32>
    %cst_54 = arith.constant 1.000000e+00 : f32
    %233 = vector.broadcast %cst_54 : f32 to vector<8x128xf32>
    %234 = arith.addf %233, %232 : vector<8x128xf32>
    %235 = arith.divf %233, %234 : vector<8x128xf32>
    %236 = vector.extract_strided_slice %223 {offsets = [0, 256], sizes = [8, 128], strides = [1, 1]} : vector<8x512xf32> to vector<8x128xf32>
    %237 = math.tanh %236 : vector<8x128xf32>
    %238 = vector.extract_strided_slice %223 {offsets = [0, 384], sizes = [8, 128], strides = [1, 1]} : vector<8x512xf32> to vector<8x128xf32>
    %239 = arith.negf %238 : vector<8x128xf32>
    %240 = math.exp %239 : vector<8x128xf32>
    %cst_55 = arith.constant 1.000000e+00 : f32
    %241 = vector.broadcast %cst_55 : f32 to vector<8x128xf32>
    %242 = arith.addf %241, %240 : vector<8x128xf32>
    %243 = arith.divf %241, %242 : vector<8x128xf32>
    %244 = arith.mulf %235, %187 : vector<8x128xf32>
    %245 = arith.mulf %229, %237 : vector<8x128xf32>
    %246 = arith.addf %244, %245 : vector<8x128xf32>
    %247 = math.tanh %246 : vector<8x128xf32>
    %248 = arith.mulf %243, %247 : vector<8x128xf32>
    %c4_i32 = arith.constant 4 : i32
    %249 = arith.index_cast %c4_i32 : i32 to index
    %c0_56 = arith.constant 0 : index
    %c0_57 = arith.constant 0 : index
    %250 = vector.load %arg11[%249, %c0_56, %c0_57] : memref<8x8x512xf32, #tpu.memory_space<vmem>>, vector<1x8x512xf32>
    %251 = vector.shape_cast %250 : vector<1x8x512xf32> to vector<8x512xf32>
    %cst_58 = arith.constant dense<0.000000e+00> : vector<8x512xf32>
    %252 = tpu.matmul %219, %9, %cst_58 {dimension_numbers = #tpu.dot_dimension_numbers<[1], [0], [0], [1], [0, 0, 1, 1], [], []>} : vector<8x128xf32>, vector<128x512xf32>, vector<8x512xf32> -> vector<8x512xf32>
    %253 = arith.addf %251, %252 : vector<8x512xf32>
    %254 = vector.extract_strided_slice %253 {offsets = [0, 0], sizes = [8, 128], strides = [1, 1]} : vector<8x512xf32> to vector<8x128xf32>
    %255 = arith.negf %254 : vector<8x128xf32>
    %256 = math.exp %255 : vector<8x128xf32>
    %cst_59 = arith.constant 1.000000e+00 : f32
    %257 = vector.broadcast %cst_59 : f32 to vector<8x128xf32>
    %258 = arith.addf %257, %256 : vector<8x128xf32>
    %259 = arith.divf %257, %258 : vector<8x128xf32>
    %260 = vector.extract_strided_slice %253 {offsets = [0, 128], sizes = [8, 128], strides = [1, 1]} : vector<8x512xf32> to vector<8x128xf32>
    %261 = arith.negf %260 : vector<8x128xf32>
    %262 = math.exp %261 : vector<8x128xf32>
    %cst_60 = arith.constant 1.000000e+00 : f32
    %263 = vector.broadcast %cst_60 : f32 to vector<8x128xf32>
    %264 = arith.addf %263, %262 : vector<8x128xf32>
    %265 = arith.divf %263, %264 : vector<8x128xf32>
    %266 = vector.extract_strided_slice %253 {offsets = [0, 256], sizes = [8, 128], strides = [1, 1]} : vector<8x512xf32> to vector<8x128xf32>
    %267 = math.tanh %266 : vector<8x128xf32>
    %268 = vector.extract_strided_slice %253 {offsets = [0, 384], sizes = [8, 128], strides = [1, 1]} : vector<8x512xf32> to vector<8x128xf32>
    %269 = arith.negf %268 : vector<8x128xf32>
    %270 = math.exp %269 : vector<8x128xf32>
    %cst_61 = arith.constant 1.000000e+00 : f32
    %271 = vector.broadcast %cst_61 : f32 to vector<8x128xf32>
    %272 = arith.addf %271, %270 : vector<8x128xf32>
    %273 = arith.divf %271, %272 : vector<8x128xf32>
    %274 = arith.mulf %265, %217 : vector<8x128xf32>
    %275 = arith.mulf %259, %267 : vector<8x128xf32>
    %276 = arith.addf %274, %275 : vector<8x128xf32>
    %277 = math.tanh %276 : vector<8x128xf32>
    %278 = arith.mulf %273, %277 : vector<8x128xf32>
    %279 = tpu.concatenate %278, %248 in 1 : vector<8x128xf32>, vector<8x128xf32> -> vector<8x256xf32>
    %cst_62 = arith.constant dense<0.000000e+00> : vector<8x512xf32>
    %280 = tpu.matmul %279, %10, %cst_62 {dimension_numbers = #tpu.dot_dimension_numbers<[1], [0], [0], [1], [0, 0, 1, 1], [], []>} : vector<8x256xf32>, vector<256x512xf32>, vector<8x512xf32> -> vector<8x512xf32>
    %281 = vector.broadcast %11 : vector<1x512xf32> to vector<8x512xf32>
    %282 = arith.addf %280, %281 : vector<8x512xf32>
    %283 = vector.extract_strided_slice %282 {offsets = [0, 0], sizes = [8, 128], strides = [1, 1]} : vector<8x512xf32> to vector<8x128xf32>
    %284 = arith.negf %283 : vector<8x128xf32>
    %285 = math.exp %284 : vector<8x128xf32>
    %cst_63 = arith.constant 1.000000e+00 : f32
    %286 = vector.broadcast %cst_63 : f32 to vector<8x128xf32>
    %287 = arith.addf %286, %285 : vector<8x128xf32>
    %288 = arith.divf %286, %287 : vector<8x128xf32>
    %289 = vector.extract_strided_slice %282 {offsets = [0, 128], sizes = [8, 128], strides = [1, 1]} : vector<8x512xf32> to vector<8x128xf32>
    %290 = arith.negf %289 : vector<8x128xf32>
    %291 = math.exp %290 : vector<8x128xf32>
    %cst_64 = arith.constant 1.000000e+00 : f32
    %292 = vector.broadcast %cst_64 : f32 to vector<8x128xf32>
    %293 = arith.addf %292, %291 : vector<8x128xf32>
    %294 = arith.divf %292, %293 : vector<8x128xf32>
    %295 = vector.extract_strided_slice %282 {offsets = [0, 256], sizes = [8, 128], strides = [1, 1]} : vector<8x512xf32> to vector<8x128xf32>
    %296 = math.tanh %295 : vector<8x128xf32>
    %297 = vector.extract_strided_slice %282 {offsets = [0, 384], sizes = [8, 128], strides = [1, 1]} : vector<8x512xf32> to vector<8x128xf32>
    %298 = arith.negf %297 : vector<8x128xf32>
    %299 = math.exp %298 : vector<8x128xf32>
    %cst_65 = arith.constant 1.000000e+00 : f32
    %300 = vector.broadcast %cst_65 : f32 to vector<8x128xf32>
    %301 = arith.addf %300, %299 : vector<8x128xf32>
    %302 = arith.divf %300, %301 : vector<8x128xf32>
    %303 = arith.mulf %294, %246 : vector<8x128xf32>
    %304 = arith.mulf %288, %296 : vector<8x128xf32>
    %305 = arith.addf %303, %304 : vector<8x128xf32>
    %306 = math.tanh %305 : vector<8x128xf32>
    %307 = arith.mulf %302, %306 : vector<8x128xf32>
    %c5_i32 = arith.constant 5 : i32
    %308 = arith.index_cast %c5_i32 : i32 to index
    %c0_66 = arith.constant 0 : index
    %c0_67 = arith.constant 0 : index
    %309 = vector.load %arg11[%308, %c0_66, %c0_67] : memref<8x8x512xf32, #tpu.memory_space<vmem>>, vector<1x8x512xf32>
    %310 = vector.shape_cast %309 : vector<1x8x512xf32> to vector<8x512xf32>
    %cst_68 = arith.constant dense<0.000000e+00> : vector<8x512xf32>
    %311 = tpu.matmul %278, %9, %cst_68 {dimension_numbers = #tpu.dot_dimension_numbers<[1], [0], [0], [1], [0, 0, 1, 1], [], []>} : vector<8x128xf32>, vector<128x512xf32>, vector<8x512xf32> -> vector<8x512xf32>
    %312 = arith.addf %310, %311 : vector<8x512xf32>
    %313 = vector.extract_strided_slice %312 {offsets = [0, 0], sizes = [8, 128], strides = [1, 1]} : vector<8x512xf32> to vector<8x128xf32>
    %314 = arith.negf %313 : vector<8x128xf32>
    %315 = math.exp %314 : vector<8x128xf32>
    %cst_69 = arith.constant 1.000000e+00 : f32
    %316 = vector.broadcast %cst_69 : f32 to vector<8x128xf32>
    %317 = arith.addf %316, %315 : vector<8x128xf32>
    %318 = arith.divf %316, %317 : vector<8x128xf32>
    %319 = vector.extract_strided_slice %312 {offsets = [0, 128], sizes = [8, 128], strides = [1, 1]} : vector<8x512xf32> to vector<8x128xf32>
    %320 = arith.negf %319 : vector<8x128xf32>
    %321 = math.exp %320 : vector<8x128xf32>
    %cst_70 = arith.constant 1.000000e+00 : f32
    %322 = vector.broadcast %cst_70 : f32 to vector<8x128xf32>
    %323 = arith.addf %322, %321 : vector<8x128xf32>
    %324 = arith.divf %322, %323 : vector<8x128xf32>
    %325 = vector.extract_strided_slice %312 {offsets = [0, 256], sizes = [8, 128], strides = [1, 1]} : vector<8x512xf32> to vector<8x128xf32>
    %326 = math.tanh %325 : vector<8x128xf32>
    %327 = vector.extract_strided_slice %312 {offsets = [0, 384], sizes = [8, 128], strides = [1, 1]} : vector<8x512xf32> to vector<8x128xf32>
    %328 = arith.negf %327 : vector<8x128xf32>
    %329 = math.exp %328 : vector<8x128xf32>
    %cst_71 = arith.constant 1.000000e+00 : f32
    %330 = vector.broadcast %cst_71 : f32 to vector<8x128xf32>
    %331 = arith.addf %330, %329 : vector<8x128xf32>
    %332 = arith.divf %330, %331 : vector<8x128xf32>
    %333 = arith.mulf %324, %276 : vector<8x128xf32>
    %334 = arith.mulf %318, %326 : vector<8x128xf32>
    %335 = arith.addf %333, %334 : vector<8x128xf32>
    %336 = math.tanh %335 : vector<8x128xf32>
    %337 = arith.mulf %332, %336 : vector<8x128xf32>
    %338 = tpu.concatenate %337, %307 in 1 : vector<8x128xf32>, vector<8x128xf32> -> vector<8x256xf32>
    %cst_72 = arith.constant dense<0.000000e+00> : vector<8x512xf32>
    %339 = tpu.matmul %338, %10, %cst_72 {dimension_numbers = #tpu.dot_dimension_numbers<[1], [0], [0], [1], [0, 0, 1, 1], [], []>} : vector<8x256xf32>, vector<256x512xf32>, vector<8x512xf32> -> vector<8x512xf32>
    %340 = vector.broadcast %11 : vector<1x512xf32> to vector<8x512xf32>
    %341 = arith.addf %339, %340 : vector<8x512xf32>
    %342 = vector.extract_strided_slice %341 {offsets = [0, 0], sizes = [8, 128], strides = [1, 1]} : vector<8x512xf32> to vector<8x128xf32>
    %343 = arith.negf %342 : vector<8x128xf32>
    %344 = math.exp %343 : vector<8x128xf32>
    %cst_73 = arith.constant 1.000000e+00 : f32
    %345 = vector.broadcast %cst_73 : f32 to vector<8x128xf32>
    %346 = arith.addf %345, %344 : vector<8x128xf32>
    %347 = arith.divf %345, %346 : vector<8x128xf32>
    %348 = vector.extract_strided_slice %341 {offsets = [0, 128], sizes = [8, 128], strides = [1, 1]} : vector<8x512xf32> to vector<8x128xf32>
    %349 = arith.negf %348 : vector<8x128xf32>
    %350 = math.exp %349 : vector<8x128xf32>
    %cst_74 = arith.constant 1.000000e+00 : f32
    %351 = vector.broadcast %cst_74 : f32 to vector<8x128xf32>
    %352 = arith.addf %351, %350 : vector<8x128xf32>
    %353 = arith.divf %351, %352 : vector<8x128xf32>
    %354 = vector.extract_strided_slice %341 {offsets = [0, 256], sizes = [8, 128], strides = [1, 1]} : vector<8x512xf32> to vector<8x128xf32>
    %355 = math.tanh %354 : vector<8x128xf32>
    %356 = vector.extract_strided_slice %341 {offsets = [0, 384], sizes = [8, 128], strides = [1, 1]} : vector<8x512xf32> to vector<8x128xf32>
    %357 = arith.negf %356 : vector<8x128xf32>
    %358 = math.exp %357 : vector<8x128xf32>
    %cst_75 = arith.constant 1.000000e+00 : f32
    %359 = vector.broadcast %cst_75 : f32 to vector<8x128xf32>
    %360 = arith.addf %359, %358 : vector<8x128xf32>
    %361 = arith.divf %359, %360 : vector<8x128xf32>
    %362 = arith.mulf %353, %305 : vector<8x128xf32>
    %363 = arith.mulf %347, %355 : vector<8x128xf32>
    %364 = arith.addf %362, %363 : vector<8x128xf32>
    %365 = math.tanh %364 : vector<8x128xf32>
    %366 = arith.mulf %361, %365 : vector<8x128xf32>
    %c6_i32 = arith.constant 6 : i32
    %367 = arith.index_cast %c6_i32 : i32 to index
    %c0_76 = arith.constant 0 : index
    %c0_77 = arith.constant 0 : index
    %368 = vector.load %arg11[%367, %c0_76, %c0_77] : memref<8x8x512xf32, #tpu.memory_space<vmem>>, vector<1x8x512xf32>
    %369 = vector.shape_cast %368 : vector<1x8x512xf32> to vector<8x512xf32>
    %cst_78 = arith.constant dense<0.000000e+00> : vector<8x512xf32>
    %370 = tpu.matmul %337, %9, %cst_78 {dimension_numbers = #tpu.dot_dimension_numbers<[1], [0], [0], [1], [0, 0, 1, 1], [], []>} : vector<8x128xf32>, vector<128x512xf32>, vector<8x512xf32> -> vector<8x512xf32>
    %371 = arith.addf %369, %370 : vector<8x512xf32>
    %372 = vector.extract_strided_slice %371 {offsets = [0, 0], sizes = [8, 128], strides = [1, 1]} : vector<8x512xf32> to vector<8x128xf32>
    %373 = arith.negf %372 : vector<8x128xf32>
    %374 = math.exp %373 : vector<8x128xf32>
    %cst_79 = arith.constant 1.000000e+00 : f32
    %375 = vector.broadcast %cst_79 : f32 to vector<8x128xf32>
    %376 = arith.addf %375, %374 : vector<8x128xf32>
    %377 = arith.divf %375, %376 : vector<8x128xf32>
    %378 = vector.extract_strided_slice %371 {offsets = [0, 128], sizes = [8, 128], strides = [1, 1]} : vector<8x512xf32> to vector<8x128xf32>
    %379 = arith.negf %378 : vector<8x128xf32>
    %380 = math.exp %379 : vector<8x128xf32>
    %cst_80 = arith.constant 1.000000e+00 : f32
    %381 = vector.broadcast %cst_80 : f32 to vector<8x128xf32>
    %382 = arith.addf %381, %380 : vector<8x128xf32>
    %383 = arith.divf %381, %382 : vector<8x128xf32>
    %384 = vector.extract_strided_slice %371 {offsets = [0, 256], sizes = [8, 128], strides = [1, 1]} : vector<8x512xf32> to vector<8x128xf32>
    %385 = math.tanh %384 : vector<8x128xf32>
    %386 = vector.extract_strided_slice %371 {offsets = [0, 384], sizes = [8, 128], strides = [1, 1]} : vector<8x512xf32> to vector<8x128xf32>
    %387 = arith.negf %386 : vector<8x128xf32>
    %388 = math.exp %387 : vector<8x128xf32>
    %cst_81 = arith.constant 1.000000e+00 : f32
    %389 = vector.broadcast %cst_81 : f32 to vector<8x128xf32>
    %390 = arith.addf %389, %388 : vector<8x128xf32>
    %391 = arith.divf %389, %390 : vector<8x128xf32>
    %392 = arith.mulf %383, %335 : vector<8x128xf32>
    %393 = arith.mulf %377, %385 : vector<8x128xf32>
    %394 = arith.addf %392, %393 : vector<8x128xf32>
    %395 = math.tanh %394 : vector<8x128xf32>
    %396 = arith.mulf %391, %395 : vector<8x128xf32>
    %397 = tpu.concatenate %396, %366 in 1 : vector<8x128xf32>, vector<8x128xf32> -> vector<8x256xf32>
    %cst_82 = arith.constant dense<0.000000e+00> : vector<8x512xf32>
    %398 = tpu.matmul %397, %10, %cst_82 {dimension_numbers = #tpu.dot_dimension_numbers<[1], [0], [0], [1], [0, 0, 1, 1], [], []>} : vector<8x256xf32>, vector<256x512xf32>, vector<8x512xf32> -> vector<8x512xf32>
    %399 = vector.broadcast %11 : vector<1x512xf32> to vector<8x512xf32>
    %400 = arith.addf %398, %399 : vector<8x512xf32>
    %401 = vector.extract_strided_slice %400 {offsets = [0, 0], sizes = [8, 128], strides = [1, 1]} : vector<8x512xf32> to vector<8x128xf32>
    %402 = arith.negf %401 : vector<8x128xf32>
    %403 = math.exp %402 : vector<8x128xf32>
    %cst_83 = arith.constant 1.000000e+00 : f32
    %404 = vector.broadcast %cst_83 : f32 to vector<8x128xf32>
    %405 = arith.addf %404, %403 : vector<8x128xf32>
    %406 = arith.divf %404, %405 : vector<8x128xf32>
    %407 = vector.extract_strided_slice %400 {offsets = [0, 128], sizes = [8, 128], strides = [1, 1]} : vector<8x512xf32> to vector<8x128xf32>
    %408 = arith.negf %407 : vector<8x128xf32>
    %409 = math.exp %408 : vector<8x128xf32>
    %cst_84 = arith.constant 1.000000e+00 : f32
    %410 = vector.broadcast %cst_84 : f32 to vector<8x128xf32>
    %411 = arith.addf %410, %409 : vector<8x128xf32>
    %412 = arith.divf %410, %411 : vector<8x128xf32>
    %413 = vector.extract_strided_slice %400 {offsets = [0, 256], sizes = [8, 128], strides = [1, 1]} : vector<8x512xf32> to vector<8x128xf32>
    %414 = math.tanh %413 : vector<8x128xf32>
    %415 = vector.extract_strided_slice %400 {offsets = [0, 384], sizes = [8, 128], strides = [1, 1]} : vector<8x512xf32> to vector<8x128xf32>
    %416 = arith.negf %415 : vector<8x128xf32>
    %417 = math.exp %416 : vector<8x128xf32>
    %cst_85 = arith.constant 1.000000e+00 : f32
    %418 = vector.broadcast %cst_85 : f32 to vector<8x128xf32>
    %419 = arith.addf %418, %417 : vector<8x128xf32>
    %420 = arith.divf %418, %419 : vector<8x128xf32>
    %421 = arith.mulf %412, %364 : vector<8x128xf32>
    %422 = arith.mulf %406, %414 : vector<8x128xf32>
    %423 = arith.addf %421, %422 : vector<8x128xf32>
    %424 = math.tanh %423 : vector<8x128xf32>
    %425 = arith.mulf %420, %424 : vector<8x128xf32>
    %c7_i32 = arith.constant 7 : i32
    %426 = arith.index_cast %c7_i32 : i32 to index
    %c0_86 = arith.constant 0 : index
    %c0_87 = arith.constant 0 : index
    %427 = vector.load %arg11[%426, %c0_86, %c0_87] : memref<8x8x512xf32, #tpu.memory_space<vmem>>, vector<1x8x512xf32>
    %428 = vector.shape_cast %427 : vector<1x8x512xf32> to vector<8x512xf32>
    %cst_88 = arith.constant dense<0.000000e+00> : vector<8x512xf32>
    %429 = tpu.matmul %396, %9, %cst_88 {dimension_numbers = #tpu.dot_dimension_numbers<[1], [0], [0], [1], [0, 0, 1, 1], [], []>} : vector<8x128xf32>, vector<128x512xf32>, vector<8x512xf32> -> vector<8x512xf32>
    %430 = arith.addf %428, %429 : vector<8x512xf32>
    %431 = vector.extract_strided_slice %430 {offsets = [0, 0], sizes = [8, 128], strides = [1, 1]} : vector<8x512xf32> to vector<8x128xf32>
    %432 = arith.negf %431 : vector<8x128xf32>
    %433 = math.exp %432 : vector<8x128xf32>
    %cst_89 = arith.constant 1.000000e+00 : f32
    %434 = vector.broadcast %cst_89 : f32 to vector<8x128xf32>
    %435 = arith.addf %434, %433 : vector<8x128xf32>
    %436 = arith.divf %434, %435 : vector<8x128xf32>
    %437 = vector.extract_strided_slice %430 {offsets = [0, 128], sizes = [8, 128], strides = [1, 1]} : vector<8x512xf32> to vector<8x128xf32>
    %438 = arith.negf %437 : vector<8x128xf32>
    %439 = math.exp %438 : vector<8x128xf32>
    %cst_90 = arith.constant 1.000000e+00 : f32
    %440 = vector.broadcast %cst_90 : f32 to vector<8x128xf32>
    %441 = arith.addf %440, %439 : vector<8x128xf32>
    %442 = arith.divf %440, %441 : vector<8x128xf32>
    %443 = vector.extract_strided_slice %430 {offsets = [0, 256], sizes = [8, 128], strides = [1, 1]} : vector<8x512xf32> to vector<8x128xf32>
    %444 = math.tanh %443 : vector<8x128xf32>
    %445 = vector.extract_strided_slice %430 {offsets = [0, 384], sizes = [8, 128], strides = [1, 1]} : vector<8x512xf32> to vector<8x128xf32>
    %446 = arith.negf %445 : vector<8x128xf32>
    %447 = math.exp %446 : vector<8x128xf32>
    %cst_91 = arith.constant 1.000000e+00 : f32
    %448 = vector.broadcast %cst_91 : f32 to vector<8x128xf32>
    %449 = arith.addf %448, %447 : vector<8x128xf32>
    %450 = arith.divf %448, %449 : vector<8x128xf32>
    %451 = arith.mulf %442, %394 : vector<8x128xf32>
    %452 = arith.mulf %436, %444 : vector<8x128xf32>
    %453 = arith.addf %451, %452 : vector<8x128xf32>
    %454 = math.tanh %453 : vector<8x128xf32>
    %455 = arith.mulf %450, %454 : vector<8x128xf32>
    %456 = tpu.concatenate %455, %425 in 1 : vector<8x128xf32>, vector<8x128xf32> -> vector<8x256xf32>
    %cst_92 = arith.constant dense<0.000000e+00> : vector<8x512xf32>
    %457 = tpu.matmul %456, %10, %cst_92 {dimension_numbers = #tpu.dot_dimension_numbers<[1], [0], [0], [1], [0, 0, 1, 1], [], []>} : vector<8x256xf32>, vector<256x512xf32>, vector<8x512xf32> -> vector<8x512xf32>
    %458 = vector.broadcast %11 : vector<1x512xf32> to vector<8x512xf32>
    %459 = arith.addf %457, %458 : vector<8x512xf32>
    %460 = vector.extract_strided_slice %459 {offsets = [0, 0], sizes = [8, 128], strides = [1, 1]} : vector<8x512xf32> to vector<8x128xf32>
    %461 = arith.negf %460 : vector<8x128xf32>
    %462 = math.exp %461 : vector<8x128xf32>
    %cst_93 = arith.constant 1.000000e+00 : f32
    %463 = vector.broadcast %cst_93 : f32 to vector<8x128xf32>
    %464 = arith.addf %463, %462 : vector<8x128xf32>
    %465 = arith.divf %463, %464 : vector<8x128xf32>
    %466 = vector.extract_strided_slice %459 {offsets = [0, 128], sizes = [8, 128], strides = [1, 1]} : vector<8x512xf32> to vector<8x128xf32>
    %467 = arith.negf %466 : vector<8x128xf32>
    %468 = math.exp %467 : vector<8x128xf32>
    %cst_94 = arith.constant 1.000000e+00 : f32
    %469 = vector.broadcast %cst_94 : f32 to vector<8x128xf32>
    %470 = arith.addf %469, %468 : vector<8x128xf32>
    %471 = arith.divf %469, %470 : vector<8x128xf32>
    %472 = vector.extract_strided_slice %459 {offsets = [0, 256], sizes = [8, 128], strides = [1, 1]} : vector<8x512xf32> to vector<8x128xf32>
    %473 = math.tanh %472 : vector<8x128xf32>
    %474 = vector.extract_strided_slice %459 {offsets = [0, 384], sizes = [8, 128], strides = [1, 1]} : vector<8x512xf32> to vector<8x128xf32>
    %475 = arith.negf %474 : vector<8x128xf32>
    %476 = math.exp %475 : vector<8x128xf32>
    %cst_95 = arith.constant 1.000000e+00 : f32
    %477 = vector.broadcast %cst_95 : f32 to vector<8x128xf32>
    %478 = arith.addf %477, %476 : vector<8x128xf32>
    %479 = arith.divf %477, %478 : vector<8x128xf32>
    %480 = arith.mulf %471, %423 : vector<8x128xf32>
    %481 = arith.mulf %465, %473 : vector<8x128xf32>
    %482 = arith.addf %480, %481 : vector<8x128xf32>
    %483 = math.tanh %482 : vector<8x128xf32>
    %484 = arith.mulf %479, %483 : vector<8x128xf32>
    %c8_i32 = arith.constant 8 : i32
    %c0_96 = arith.constant 0 : index
    %c0_97 = arith.constant 0 : index
    %c0_98 = arith.constant 0 : index
    %485 = vector.load %arg9[%c0_96, %c0_97, %c0_98] : memref<2x8x128xf32, #tpu.memory_space<vmem>>, vector<1x8x128xf32>
    %486 = vector.shape_cast %485 : vector<1x8x128xf32> to vector<8x128xf32>
    %487 = vector.shape_cast %455 : vector<8x128xf32> to vector<1x8x128xf32>
    tpu.vector_store %arg9[%c0_96, %c0_97, %c0_98], %487 {strides = array<i32>} : memref<2x8x128xf32, #tpu.memory_space<vmem>>, vector<1x8x128xf32>,
    %c0_99 = arith.constant 0 : index
    %c0_100 = arith.constant 0 : index
    %c0_101 = arith.constant 0 : index
    %488 = vector.load %arg10[%c0_99, %c0_100, %c0_101] : memref<2x8x128xf32, #tpu.memory_space<vmem>>, vector<1x8x128xf32>
    %489 = vector.shape_cast %488 : vector<1x8x128xf32> to vector<8x128xf32>
    %490 = vector.shape_cast %453 : vector<8x128xf32> to vector<1x8x128xf32>
    tpu.vector_store %arg10[%c0_99, %c0_100, %c0_101], %490 {strides = array<i32>} : memref<2x8x128xf32, #tpu.memory_space<vmem>>, vector<1x8x128xf32>,
    %c1 = arith.constant 1 : index
    %c0_102 = arith.constant 0 : index
    %c0_103 = arith.constant 0 : index
    %491 = vector.load %arg9[%c1, %c0_102, %c0_103] : memref<2x8x128xf32, #tpu.memory_space<vmem>>, vector<1x8x128xf32>
    %492 = vector.shape_cast %491 : vector<1x8x128xf32> to vector<8x128xf32>
    %493 = vector.shape_cast %484 : vector<8x128xf32> to vector<1x8x128xf32>
    tpu.vector_store %arg9[%c1, %c0_102, %c0_103], %493 {strides = array<i32>} : memref<2x8x128xf32, #tpu.memory_space<vmem>>, vector<1x8x128xf32>,
    %c1_104 = arith.constant 1 : index
    %c0_105 = arith.constant 0 : index
    %c0_106 = arith.constant 0 : index
    %494 = vector.load %arg10[%c1_104, %c0_105, %c0_106] : memref<2x8x128xf32, #tpu.memory_space<vmem>>, vector<1x8x128xf32>
    %495 = vector.shape_cast %494 : vector<1x8x128xf32> to vector<8x128xf32>
    %496 = vector.shape_cast %482 : vector<8x128xf32> to vector<1x8x128xf32>
    tpu.vector_store %arg10[%c1_104, %c0_105, %c0_106], %496 {strides = array<i32>} : memref<2x8x128xf32, #tpu.memory_space<vmem>>, vector<1x8x128xf32>,
    %c0_107 = arith.constant 0 : index
    %c0_108 = arith.constant 0 : index
    %497 = vector.load %arg6[%c0_107, %c0_108] : memref<128x2xf32, #tpu.memory_space<vmem>>, vector<128x2xf32>
    %cst_109 = arith.constant dense<0.000000e+00> : vector<8x2xf32>
    %498 = tpu.matmul %484, %497, %cst_109 {dimension_numbers = #tpu.dot_dimension_numbers<[1], [0], [0], [1], [0, 0, 1, 1], [], []>} : vector<8x128xf32>, vector<128x2xf32>, vector<8x2xf32> -> vector<8x2xf32>
    %c0_110 = arith.constant 0 : index
    %c0_111 = arith.constant 0 : index
    %499 = vector.load %arg7[%c0_110, %c0_111] : memref<1x2xf32, #tpu.memory_space<vmem>>, vector<1x2xf32>
    %500 = vector.broadcast %499 : vector<1x2xf32> to vector<8x2xf32>
    %501 = arith.addf %498, %500 : vector<8x2xf32>
    %502 = math.tanh %501 : vector<8x2xf32>
    %cst_112 = arith.constant 1.000000e+00 : f32
    %503 = vector.broadcast %cst_112 : f32 to vector<8x2xf32>
    %504 = arith.mulf %503, %502 : vector<8x2xf32>
    %c0_113 = arith.constant 0 : index
    %c0_114 = arith.constant 0 : index
    %505 = vector.load %arg8[%c0_113, %c0_114] : memref<8x2xf32, #tpu.memory_space<vmem>>, vector<8x2xf32>
    tpu.vector_store %arg8[%c0_113, %c0_114], %504 {strides = array<i32>} : memref<8x2xf32, #tpu.memory_space<vmem>>, vector<8x2xf32>,
    return
  }
}

</mosaic_0001>

<llo_original>
// kernel: tpu_custom_call.1
$region0: #{tpu_custom_call.1}
  #allocation0 [shape = 'u32[]', space=smem, size = 0x4, offset = 0x4, fixed_abs, tag = 'smem constant byte address 0x4 - core index']
  #allocation1 [shape = 'u32[144,128]{1,0:T(1,128)}', space=vmem, size = 0x12000, scoped, tag = 'internal scratch']
  #allocation2 [shape = 'f32[8,8,512]{2,1,0:T(8,128)}', space=vmem, size = 0x20000, scoped, tag = 'scratch operand']
  %s0 = inlined_call_operand.vmem [shape: f32[8,8,4], index: 0, kind: input, shape index: {}]
  %s1 = inlined_call_operand.vmem [shape: f32[4,512], index: 1, kind: input, shape index: {}]
  %s2 = inlined_call_operand.hbm [shape: f32[128,512], index: 2, kind: input, shape index: {}]
  %s3 = inlined_call_operand.vmem [shape: f32[1,512], index: 3, kind: input, shape index: {}]
  %s4 = inlined_call_operand.hbm [shape: f32[256,512], index: 4, kind: input, shape index: {}]
  %s5 = inlined_call_operand.vmem [shape: f32[1,512], index: 5, kind: input, shape index: {}]
  %s6 = inlined_call_operand.vmem [shape: f32[128,2], index: 6, kind: input, shape index: {}]
  %s7 = inlined_call_operand.vmem [shape: f32[1,2], index: 7, kind: input, shape index: {}]
  %s8 = inlined_call_operand.vmem [shape: f32[8,2], index: 8, kind: output, shape index: {0}]
  %s9 = inlined_call_operand.hbm [shape: f32[2,8,128], index: 9, kind: output, shape index: {1}]
  %s10 = inlined_call_operand.hbm [shape: f32[2,8,128], index: 10, kind: output, shape index: {2}]
  %11 = xla_tuple %s8, %s9, %s10
  %s12 = sld [smem:[#allocation0]]
  $region66: #{tpu_custom_call.1} parent=0
    _
  %s14 = ssub.s32 1, %s12
  %s15 = scalar_select 0, %s14, %s12
  $region1: #{tpu_custom_call.1} parent=0
    #allocation3 [shape = 'u8[262144]{0}', space=vmem, size = 0x40000, scoped, tag = 'input window, operand 2, single buffered']
    #allocation4 [shape = 's32[1]{0}', space=sflag, size = 0x4, scoped, tag = 'scoped memory for tpu_custom_call.1']
    #allocation5 [shape = 's32[1]{0}', space=sflag, size = 0x4, scoped, tag = 'scoped memory for tpu_custom_call.1']
    #allocation6 [shape = 'u8[524288]{0}', space=vmem, size = 0x80000, scoped, tag = 'input window, operand 4, single buffered']
    #allocation7 [shape = 's32[1]{0}', space=sflag, size = 0x4, scoped, tag = 'scoped memory for tpu_custom_call.1']
    #allocation8 [shape = 'u8[8192]{0}', space=vmem, size = 0x2000, scoped, tag = 'output window, operand 1, single buffered']
    #allocation9 [shape = 'u8[8192]{0}', space=vmem, size = 0x2000, scoped, tag = 'output window, operand 2, single buffered']
    #allocation10 [shape = 's32[1]{0}', space=sflag, size = 0x4, scoped, tag = 'scoped memory for tpu_custom_call.1']
    %16 = vsyncpa [#allocation4], 0
    %17 = vsyncpa [#allocation7], 0
    %18 = vsyncpa [#allocation5], 0
    %19 = vsyncpa [#allocation10], 0
    // Predicated region
    $region2: #{tpu_custom_call.1} parent=1 // pred_check
      _
    $region3: #{tpu_custom_call.1} parent=1 // pred_check_branch
      %21 = sbr.rel (0) target = $region5
    $region4: #{tpu_custom_call.1} parent=1 // pred_region
      _
    $region5: #{tpu_custom_call.1} parent=1 // pred_fallthru
      _
    // Predicated region
    $region6: #{tpu_custom_call.1} parent=1 // pred_check
      _
    $region7: #{tpu_custom_call.1} parent=1 // pred_check_branch
      %23 = sbr.rel (0) target = $region9
    $region8: #{tpu_custom_call.1} parent=1 // pred_region
      _
    $region9: #{tpu_custom_call.1} parent=1 // pred_fallthru
      _
    // Predicated region
    $region10: #{tpu_custom_call.1} parent=1 // pred_check
      _
    $region11: #{tpu_custom_call.1} parent=1 // pred_check_branch
      %25 = sbr.rel (0) target = $region13
    $region12: #{tpu_custom_call.1} parent=1 // pred_region
      %s27 = ssub.s32 8192, 8192
      %28 = vsyncadd [#allocation4], %s27
      %s29 = sshll.u32 [#allocation3], 4
      %s30 = int_to_ptr.vmem [resolvable:$true] %s29
      %35 = dma.hbm_to_vmem [thread:$0]  %s2, 8192, %s30, [#allocation4], 512, 512, 32
    $region13: #{tpu_custom_call.1} parent=1 // pred_fallthru
      _
    // Predicated region
    $region14: #{tpu_custom_call.1} parent=1 // pred_check
      _
    $region15: #{tpu_custom_call.1} parent=1 // pred_check_branch
      %37 = sbr.rel (0) target = $region17
    $region16: #{tpu_custom_call.1} parent=1 // pred_region
      _
    $region17: #{tpu_custom_call.1} parent=1 // pred_fallthru
      _
    // Predicated region
    $region18: #{tpu_custom_call.1} parent=1 // pred_check
      _
    $region19: #{tpu_custom_call.1} parent=1 // pred_check_branch
      %39 = sbr.rel (0) target = $region21
    $region20: #{tpu_custom_call.1} parent=1 // pred_region
      %s41 = ssub.s32 16384, 16384
      %42 = vsyncadd [#allocation7], %s41
      %s43 = sshll.u32 [#allocation6], 4
      %s44 = int_to_ptr.vmem [resolvable:$true] %s43
      %49 = dma.hbm_to_vmem [thread:$0]  %s4, 16384, %s44, [#allocation7], 512, 512, 32
    $region21: #{tpu_custom_call.1} parent=1 // pred_fallthru
      _
    // Predicated region
    $region22: #{tpu_custom_call.1} parent=1 // pred_check
      _
    $region23: #{tpu_custom_call.1} parent=1 // pred_check_branch
      %51 = sbr.rel (0) target = $region25
    $region24: #{tpu_custom_call.1} parent=1 // pred_region
      _
    $region25: #{tpu_custom_call.1} parent=1 // pred_fallthru
      _
    // Predicated region
    $region26: #{tpu_custom_call.1} parent=1 // pred_check
      _
    $region27: #{tpu_custom_call.1} parent=1 // pred_check_branch
      %53 = sbr.rel (0) target = $region29
    $region28: #{tpu_custom_call.1} parent=1 // pred_region
      _
    $region29: #{tpu_custom_call.1} parent=1 // pred_fallthru
      _
    // Predicated region
    $region30: #{tpu_custom_call.1} parent=1 // pred_check
      _
    $region31: #{tpu_custom_call.1} parent=1 // pred_check_branch
      %55 = sbr.rel (0) target = $region33
    $region32: #{tpu_custom_call.1} parent=1 // pred_region
      _
    $region33: #{tpu_custom_call.1} parent=1 // pred_fallthru
      _
    // Predicated region
    $region34: #{tpu_custom_call.1} parent=1 // pred_check
      _
    $region35: #{tpu_custom_call.1} parent=1 // pred_check_branch
      %57 = sbr.rel (0) target = $region37
    $region36: #{tpu_custom_call.1} parent=1 // pred_region
      %58 = dma.done [#allocation4], 8192
    $region37: #{tpu_custom_call.1} parent=1 // pred_fallthru
      _
    // Predicated region
    $region38: #{tpu_custom_call.1} parent=1 // pred_check
      _
    $region39: #{tpu_custom_call.1} parent=1 // pred_check_branch
      %60 = sbr.rel (0) target = $region41
    $region40: #{tpu_custom_call.1} parent=1 // pred_region
      %61 = dma.done [#allocation7], 16384
    $region41: #{tpu_custom_call.1} parent=1 // pred_fallthru
      _
    %v62 = vld [vmem:[%s0] sm:$0xff]
    %v63 = vld [vmem:[%s0 + $0x8] sm:$0xff]
    %v64 = vld [vmem:[%s0 + $0x10] sm:$0xff]
    %v65 = vld [vmem:[%s0 + $0x18] sm:$0xff]
    %v66 = vld [vmem:[%s0 + $0x20] sm:$0xff]
    %v67 = vld [vmem:[%s0 + $0x28] sm:$0xff]
    %v68 = vld [vmem:[%s0 + $0x30] sm:$0xff]
    %v69 = vld [vmem:[%s0 + $0x38] sm:$0xff]
    %v70 = vld [vmem:[%s1] sm:$0xff]
    %v71 = vld [vmem:[%s1 + $0x8] sm:$0xff]
    %v72 = vld [vmem:[%s3] sm:$0xf]
    %v74 = vlaneseq
    %v75 = vshrl.u32 %v74, 7
    %v76 = vsub.s32 0, %v75
    %v77 = vrot.slane %v72, %v76
    %v78 = vlaneseq
    %v79 = vshrl.u32 %v78, 7
    %v80 = vsub.s32 1, %v79
    %v81 = vrot.slane %v72, %v80
    %v82 = vlaneseq
    %v83 = vshrl.u32 %v82, 7
    %v84 = vsub.s32 2, %v83
    %v85 = vrot.slane %v72, %v84
    %v86 = vlaneseq
    %v87 = vshrl.u32 %v86, 7
    %v88 = vsub.s32 3, %v87
    %v89 = vrot.slane %v72, %v88
    %v96 = vcombine.high %v70, %v70
    %v97 = vcombine.high %v71, %v71
    %vm98 = vcmask 31744
    %v100 = vsel %vm98, %v62, 0
    %v103 = vsel %vm98, %v63, 0
    %v106 = vsel %vm98, %v64, 0
    %v109 = vsel %vm98, %v65, 0
    %v112 = vsel %vm98, %v66, 0
    %v115 = vsel %vm98, %v67, 0
    %v118 = vsel %vm98, %v68, 0
    %v121 = vsel %vm98, %v69, 0
    %vm123 = vcmask 1043456
    %v124 = vsel %vm123, %v70, 0
    %v126 = vsel %vm123, %v96, 0
    %v128 = vsel %vm123, %v71, 0
    %v130 = vsel %vm123, %v97, 0
    %132 = vmatprep.subr.mxu0 0.0
    %133 = vmatpush1.msra.mxu0 0.0
    %134 = vmatprep.subr.mxu0 0.0
    %135 = vmatpush1.msra.mxu0 0.0
    %136 = vmatprep.subr.mxu0 0.0
    %137 = vmatpush1.msra.mxu0 0.0
    %138 = vmatprep.subr.mxu0 0.0
    %139 = vmatpush1.msra.mxu0 0.0
    %140 = vmatprep.subr.mxu0 0.0
    %141 = vmatpush1.msra.mxu0 0.0
    %142 = vmatprep.subr.mxu0 0.0
    %143 = vmatpush1.msra.mxu0 0.0
    %144 = vmatprep.subr.mxu0 0.0
    %145 = vmatpush1.msra.mxu0 0.0
    %146 = vmatprep.subr.mxu0 0.0
    %147 = vmatpush1.msra.mxu0 0.0
    %148 = vmatprep.subr.mxu0 0.0
    %149 = vmatpush1.msra.mxu0 0.0
    %150 = vmatprep.subr.mxu0 0.0
    %151 = vmatpush1.msra.mxu0 0.0
    %152 = vmatprep.subr.mxu0 0.0
    %153 = vmatpush1.msra.mxu0 0.0
    %154 = vmatprep.subr.mxu0 0.0
    %155 = vmatpush1.msra.mxu0 0.0
    %156 = vmatprep.subr.mxu0 0.0
    %157 = vmatpush1.msra.mxu0 0.0
    %158 = vmatprep.subr.mxu0 0.0
    %159 = vmatpush1.msra.mxu0 0.0
    %160 = vmatprep.subr.mxu0 0.0
    %161 = vmatpush1.msra.mxu0 0.0
    %162 = vmatprep.subr.mxu0 %v126
    %163 = vmatpush1.msra.mxu0 %v124
    %164 = vmatprep.subr.mxu0 0.0
    %165 = vmatpush2.msra.mxu0 0.0
    %166 = vmatprep.subr.mxu0 0.0
    %167 = vmatpush2.msra.mxu0 0.0
    %168 = vmatprep.subr.mxu0 0.0
    %169 = vmatpush2.msra.mxu0 0.0
    %170 = vmatprep.subr.mxu0 0.0
    %171 = vmatpush2.msra.mxu0 0.0
    %172 = vmatprep.subr.mxu0 0.0
    %173 = vmatpush2.msra.mxu0 0.0
    %174 = vmatprep.subr.mxu0 0.0
    %175 = vmatpush2.msra.mxu0 0.0
    %176 = vmatprep.subr.mxu0 0.0
    %177 = vmatpush2.msra.mxu0 0.0
    %178 = vmatprep.subr.mxu0 0.0
    %179 = vmatpush2.msra.mxu0 0.0
    %180 = vmatprep.subr.mxu0 0.0
    %181 = vmatpush2.msra.mxu0 0.0
    %182 = vmatprep.subr.mxu0 0.0
    %183 = vmatpush2.msra.mxu0 0.0
    %184 = vmatprep.subr.mxu0 0.0
    %185 = vmatpush2.msra.mxu0 0.0
    %186 = vmatprep.subr.mxu0 0.0
    %187 = vmatpush2.msra.mxu0 0.0
    %188 = vmatprep.subr.mxu0 0.0
    %189 = vmatpush2.msra.mxu0 0.0
    %190 = vmatprep.subr.mxu0 0.0
    %191 = vmatpush2.msra.mxu0 0.0
    %192 = vmatprep.subr.mxu0 0.0
    %193 = vmatpush2.msra.mxu0 0.0
    %194 = vmatprep.subr.mxu0 0.0
    %195 = vmatpush2.msra.mxu0 0.0
    %196 = vmatprep.mubr.f32.mxu0 0.0
    %197 = vmatmul.mubr.f32.gmra.mxu0 %v100
    %v198 = vpop.f32.mrf.mxu0
    %v199 = vadd.f32 %v77, %v198
    %v200 = vpop.f32.mrf.mxu0
    %v201 = vadd.f32 %v81, %v200
    %202 = vmatprep.mubr.f32.mxu0 0.0
    %203 = vmatmul.mubr.f32.gmra.mxu0 %v103
    %v204 = vpop.f32.mrf.mxu0
    %v205 = vadd.f32 %v77, %v204
    %v206 = vpop.f32.mrf.mxu0
    %v207 = vadd.f32 %v81, %v206
    %208 = vmatprep.mubr.f32.mxu0 0.0
    %209 = vmatmul.mubr.f32.gmra.mxu0 %v106
    %v210 = vpop.f32.mrf.mxu0
    %v211 = vadd.f32 %v77, %v210
    %v212 = vpop.f32.mrf.mxu0
    %v213 = vadd.f32 %v81, %v212
    %214 = vmatprep.mubr.f32.mxu0 0.0
    %215 = vmatmul.mubr.f32.gmra.mxu0 %v109
    %v216 = vpop.f32.mrf.mxu0
    %v217 = vadd.f32 %v77, %v216
    %v218 = vpop.f32.mrf.mxu0
    %v219 = vadd.f32 %v81, %v218
    %220 = vmatprep.mubr.f32.mxu0 0.0
    %221 = vmatmul.mubr.f32.gmra.mxu0 %v112
    %v222 = vpop.f32.mrf.mxu0
    %v223 = vadd.f32 %v77, %v222
    %v224 = vpop.f32.mrf.mxu0
    %v225 = vadd.f32 %v81, %v224
    %226 = vmatprep.mubr.f32.mxu0 0.0
    %227 = vmatmul.mubr.f32.gmra.mxu0 %v115
    %v228 = vpop.f32.mrf.mxu0
    %v229 = vadd.f32 %v77, %v228
    %v230 = vpop.f32.mrf.mxu0
    %v231 = vadd.f32 %v81, %v230
    %232 = vmatprep.mubr.f32.mxu0 0.0
    %233 = vmatmul.mubr.f32.gmra.mxu0 %v118
    %v234 = vpop.f32.mrf.mxu0
    %v235 = vadd.f32 %v77, %v234
    %v236 = vpop.f32.mrf.mxu0
    %v237 = vadd.f32 %v81, %v236
    %238 = vmatprep.mubr.f32.mxu0 0.0
    %239 = vmatmul.mubr.f32.gmra.mxu0 %v121
    %v240 = vpop.f32.mrf.mxu0
    %v241 = vadd.f32 %v77, %v240
    %v242 = vpop.f32.mrf.mxu0
    %v243 = vadd.f32 %v81, %v242
    %244 = vdwg.mxu0
    %245 = vmatprep.subr.mxu0 0.0
    %246 = vmatpush1.msra.mxu0 0.0
    %247 = vmatprep.subr.mxu0 0.0
    %248 = vmatpush1.msra.mxu0 0.0
    %249 = vmatprep.subr.mxu0 0.0
    %250 = vmatpush1.msra.mxu0 0.0
    %251 = vmatprep.subr.mxu0 0.0
    %252 = vmatpush1.msra.mxu0 0.0
    %253 = vmatprep.subr.mxu0 0.0
    %254 = vmatpush1.msra.mxu0 0.0
    %255 = vmatprep.subr.mxu0 0.0
    %256 = vmatpush1.msra.mxu0 0.0
    %257 = vmatprep.subr.mxu0 0.0
    %258 = vmatpush1.msra.mxu0 0.0
    %259 = vmatprep.subr.mxu0 0.0
    %260 = vmatpush1.msra.mxu0 0.0
    %261 = vmatprep.subr.mxu0 0.0
    %262 = vmatpush1.msra.mxu0 0.0
    %263 = vmatprep.subr.mxu0 0.0
    %264 = vmatpush1.msra.mxu0 0.0
    %265 = vmatprep.subr.mxu0 0.0
    %266 = vmatpush1.msra.mxu0 0.0
    %267 = vmatprep.subr.mxu0 0.0
    %268 = vmatpush1.msra.mxu0 0.0
    %269 = vmatprep.subr.mxu0 0.0
    %270 = vmatpush1.msra.mxu0 0.0
    %271 = vmatprep.subr.mxu0 0.0
    %272 = vmatpush1.msra.mxu0 0.0
    %273 = vmatprep.subr.mxu0 0.0
    %274 = vmatpush1.msra.mxu0 0.0
    %275 = vmatprep.subr.mxu0 %v130
    %276 = vmatpush1.msra.mxu0 %v128
    %277 = vmatprep.subr.mxu0 0.0
    %278 = vmatpush2.msra.mxu0 0.0
    %279 = vmatprep.subr.mxu0 0.0
    %280 = vmatpush2.msra.mxu0 0.0
    %281 = vmatprep.subr.mxu0 0.0
    %282 = vmatpush2.msra.mxu0 0.0
    %283 = vmatprep.subr.mxu0 0.0
    %284 = vmatpush2.msra.mxu0 0.0
    %285 = vmatprep.subr.mxu0 0.0
    %286 = vmatpush2.msra.mxu0 0.0
    %287 = vmatprep.subr.mxu0 0.0
    %288 = vmatpush2.msra.mxu0 0.0
    %289 = vmatprep.subr.mxu0 0.0
    %290 = vmatpush2.msra.mxu0 0.0
    %291 = vmatprep.subr.mxu0 0.0
    %292 = vmatpush2.msra.mxu0 0.0
    %293 = vmatprep.subr.mxu0 0.0
    %294 = vmatpush2.msra.mxu0 0.0
    %295 = vmatprep.subr.mxu0 0.0
    %296 = vmatpush2.msra.mxu0 0.0
    %297 = vmatprep.subr.mxu0 0.0
    %298 = vmatpush2.msra.mxu0 0.0
    %299 = vmatprep.subr.mxu0 0.0
    %300 = vmatpush2.msra.mxu0 0.0
    %301 = vmatprep.subr.mxu0 0.0
    %302 = vmatpush2.msra.mxu0 0.0
    %303 = vmatprep.subr.mxu0 0.0
    %304 = vmatpush2.msra.mxu0 0.0
    %305 = vmatprep.subr.mxu0 0.0
    %306 = vmatpush2.msra.mxu0 0.0
    %307 = vmatprep.subr.mxu0 0.0
    %308 = vmatpush2.msra.mxu0 0.0
    %309 = vmatprep.mubr.f32.mxu0 0.0
    %310 = vmatmul.mubr.f32.gmra.mxu0 %v100
    %v311 = vpop.f32.mrf.mxu0
    %v312 = vadd.f32 %v85, %v311
    %v313 = vpop.f32.mrf.mxu0
    %v314 = vadd.f32 %v89, %v313
    %315 = vmatprep.mubr.f32.mxu0 0.0
    %316 = vmatmul.mubr.f32.gmra.mxu0 %v103
    %v317 = vpop.f32.mrf.mxu0
    %v318 = vadd.f32 %v85, %v317
    %v319 = vpop.f32.mrf.mxu0
    %v320 = vadd.f32 %v89, %v319
    %321 = vmatprep.mubr.f32.mxu0 0.0
    %322 = vmatmul.mubr.f32.gmra.mxu0 %v106
    %v323 = vpop.f32.mrf.mxu0
    %v324 = vadd.f32 %v85, %v323
    %v325 = vpop.f32.mrf.mxu0
    %v326 = vadd.f32 %v89, %v325
    %327 = vmatprep.mubr.f32.mxu0 0.0
    %328 = vmatmul.mubr.f32.gmra.mxu0 %v109
    %v329 = vpop.f32.mrf.mxu0
    %v330 = vadd.f32 %v85, %v329
    %v331 = vpop.f32.mrf.mxu0
    %v332 = vadd.f32 %v89, %v331
    %333 = vmatprep.mubr.f32.mxu0 0.0
    %334 = vmatmul.mubr.f32.gmra.mxu0 %v112
    %v335 = vpop.f32.mrf.mxu0
    %v336 = vadd.f32 %v85, %v335
    %v337 = vpop.f32.mrf.mxu0
    %v338 = vadd.f32 %v89, %v337
    %339 = vmatprep.mubr.f32.mxu0 0.0
    %340 = vmatmul.mubr.f32.gmra.mxu0 %v115
    %v341 = vpop.f32.mrf.mxu0
    %v342 = vadd.f32 %v85, %v341
    %v343 = vpop.f32.mrf.mxu0
    %v344 = vadd.f32 %v89, %v343
    %345 = vmatprep.mubr.f32.mxu0 0.0
    %346 = vmatmul.mubr.f32.gmra.mxu0 %v118
    %v347 = vpop.f32.mrf.mxu0
    %v348 = vadd.f32 %v85, %v347
    %v349 = vpop.f32.mrf.mxu0
    %v350 = vadd.f32 %v89, %v349
    %351 = vmatprep.mubr.f32.mxu0 0.0
    %352 = vmatmul.mubr.f32.gmra.mxu0 %v121
    %v353 = vpop.f32.mrf.mxu0
    %v354 = vadd.f32 %v85, %v353
    %v355 = vpop.f32.mrf.mxu0
    %v356 = vadd.f32 %v89, %v355
    %357 = vdwg.mxu0
    %358 = vst [vmem:[#allocation2] sm:$0xff] %v199
    %359 = vst [vmem:[#allocation2 + $0x8] sm:$0xff] %v201
    %360 = vst [vmem:[#allocation2 + $0x10] sm:$0xff] %v312
    %361 = vst [vmem:[#allocation2 + $0x18] sm:$0xff] %v314
    %362 = vst [vmem:[#allocation2 + $0x20] sm:$0xff] %v205
    %363 = vst [vmem:[#allocation2 + $0x28] sm:$0xff] %v207
    %364 = vst [vmem:[#allocation2 + $0x30] sm:$0xff] %v318
    %365 = vst [vmem:[#allocation2 + $0x38] sm:$0xff] %v320
    %366 = vst [vmem:[#allocation2 + $0x40] sm:$0xff] %v211
    %367 = vst [vmem:[#allocation2 + $0x48] sm:$0xff] %v213
    %368 = vst [vmem:[#allocation2 + $0x50] sm:$0xff] %v324
    %369 = vst [vmem:[#allocation2 + $0x58] sm:$0xff] %v326
    %370 = vst [vmem:[#allocation2 + $0x60] sm:$0xff] %v217
    %371 = vst [vmem:[#allocation2 + $0x68] sm:$0xff] %v219
    %372 = vst [vmem:[#allocation2 + $0x70] sm:$0xff] %v330
    %373 = vst [vmem:[#allocation2 + $0x78] sm:$0xff] %v332
    %374 = vst [vmem:[#allocation2 + $0x80] sm:$0xff] %v223
    %375 = vst [vmem:[#allocation2 + $0x88] sm:$0xff] %v225
    %376 = vst [vmem:[#allocation2 + $0x90] sm:$0xff] %v336
    %377 = vst [vmem:[#allocation2 + $0x98] sm:$0xff] %v338
    %378 = vst [vmem:[#allocation2 + $0xa0] sm:$0xff] %v229
    %379 = vst [vmem:[#allocation2 + $0xa8] sm:$0xff] %v231
    %380 = vst [vmem:[#allocation2 + $0xb0] sm:$0xff] %v342
    %381 = vst [vmem:[#allocation2 + $0xb8] sm:$0xff] %v344
    %382 = vst [vmem:[#allocation2 + $0xc0] sm:$0xff] %v235
    %383 = vst [vmem:[#allocation2 + $0xc8] sm:$0xff] %v237
    %384 = vst [vmem:[#allocation2 + $0xd0] sm:$0xff] %v348
    %385 = vst [vmem:[#allocation2 + $0xd8] sm:$0xff] %v350
    %386 = vst [vmem:[#allocation2 + $0xe0] sm:$0xff] %v241
    %387 = vst [vmem:[#allocation2 + $0xe8] sm:$0xff] %v243
    %388 = vst [vmem:[#allocation2 + $0xf0] sm:$0xff] %v354
    %389 = vst [vmem:[#allocation2 + $0xf8] sm:$0xff] %v356
    %v390 = vld [vmem:[#allocation3] sm:$0xff]
    %v391 = vld [vmem:[#allocation3 + $0x8] sm:$0xff]
    %v392 = vld [vmem:[#allocation3 + $0x10] sm:$0xff]
    %v393 = vld [vmem:[#allocation3 + $0x18] sm:$0xff]
    %v394 = vld [vmem:[#allocation3 + $0x20] sm:$0xff]
    %v395 = vld [vmem:[#allocation3 + $0x28] sm:$0xff]
    %v396 = vld [vmem:[#allocation3 + $0x30] sm:$0xff]
    %v397 = vld [vmem:[#allocation3 + $0x38] sm:$0xff]
    %v398 = vld [vmem:[#allocation3 + $0x40] sm:$0xff]
    %v399 = vld [vmem:[#allocation3 + $0x48] sm:$0xff]
    %v400 = vld [vmem:[#allocation3 + $0x50] sm:$0xff]
    %v401 = vld [vmem:[#allocation3 + $0x58] sm:$0xff]
    %v402 = vld [vmem:[#allocation3 + $0x60] sm:$0xff]
    %v403 = vld [vmem:[#allocation3 + $0x68] sm:$0xff]
    %v404 = vld [vmem:[#allocation3 + $0x70] sm:$0xff]
    %v405 = vld [vmem:[#allocation3 + $0x78] sm:$0xff]
    %v406 = vld [vmem:[#allocation3 + $0x80] sm:$0xff]
    %v407 = vld [vmem:[#allocation3 + $0x88] sm:$0xff]
    %v408 = vld [vmem:[#allocation3 + $0x90] sm:$0xff]
    %v409 = vld [vmem:[#allocation3 + $0x98] sm:$0xff]
    %v410 = vld [vmem:[#allocation3 + $0xa0] sm:$0xff]
    %v411 = vld [vmem:[#allocation3 + $0xa8] sm:$0xff]
    %v412 = vld [vmem:[#allocation3 + $0xb0] sm:$0xff]
    %v413 = vld [vmem:[#allocation3 + $0xb8] sm:$0xff]
    %v414 = vld [vmem:[#allocation3 + $0xc0] sm:$0xff]
    %v415 = vld [vmem:[#allocation3 + $0xc8] sm:$0xff]
    %v416 = vld [vmem:[#allocation3 + $0xd0] sm:$0xff]
    %v417 = vld [vmem:[#allocation3 + $0xd8] sm:$0xff]
    %v418 = vld [vmem:[#allocation3 + $0xe0] sm:$0xff]
    %v419 = vld [vmem:[#allocation3 + $0xe8] sm:$0xff]
    %v420 = vld [vmem:[#allocation3 + $0xf0] sm:$0xff]
    %v421 = vld [vmem:[#allocation3 + $0xf8] sm:$0xff]
    %v422 = vld [vmem:[#allocation3 + $0x100] sm:$0xff]
    %v423 = vld [vmem:[#allocation3 + $0x108] sm:$0xff]
    %v424 = vld [vmem:[#allocation3 + $0x110] sm:$0xff]
    %v425 = vld [vmem:[#allocation3 + $0x118] sm:$0xff]
    %v426 = vld [vmem:[#allocation3 + $0x120] sm:$0xff]
    %v427 = vld [vmem:[#allocation3 + $0x128] sm:$0xff]
    %v428 = vld [vmem:[#allocation3 + $0x130] sm:$0xff]
    %v429 = vld [vmem:[#allocation3 + $0x138] sm:$0xff]
    %v430 = vld [vmem:[#allocation3 + $0x140] sm:$0xff]
    %v431 = vld [vmem:[#allocation3 + $0x148] sm:$0xff]
    %v432 = vld [vmem:[#allocation3 + $0x150] sm:$0xff]
    %v433 = vld [vmem:[#allocation3 + $0x158] sm:$0xff]
    %v434 = vld [vmem:[#allocation3 + $0x160] sm:$0xff]
    %v435 = vld [vmem:[#allocation3 + $0x168] sm:$0xff]
    %v436 = vld [vmem:[#allocation3 + $0x170] sm:$0xff]
    %v437 = vld [vmem:[#allocation3 + $0x178] sm:$0xff]
    %v438 = vld [vmem:[#allocation3 + $0x180] sm:$0xff]
    %v439 = vld [vmem:[#allocation3 + $0x188] sm:$0xff]
    %v440 = vld [vmem:[#allocation3 + $0x190] sm:$0xff]
    %v441 = vld [vmem:[#allocation3 + $0x198] sm:$0xff]
    %v442 = vld [vmem:[#allocation3 + $0x1a0] sm:$0xff]
    %v443 = vld [vmem:[#allocation3 + $0x1a8] sm:$0xff]
    %v444 = vld [vmem:[#allocation3 + $0x1b0] sm:$0xff]
    %v445 = vld [vmem:[#allocation3 + $0x1b8] sm:$0xff]
    %v446 = vld [vmem:[#allocation3 + $0x1c0] sm:$0xff]
    %v447 = vld [vmem:[#allocation3 + $0x1c8] sm:$0xff]
    %v448 = vld [vmem:[#allocation3 + $0x1d0] sm:$0xff]
    %v449 = vld [vmem:[#allocation3 + $0x1d8] sm:$0xff]
    %v450 = vld [vmem:[#allocation3 + $0x1e0] sm:$0xff]
    %v451 = vld [vmem:[#allocation3 + $0x1e8] sm:$0xff]
    %v452 = vld [vmem:[#allocation3 + $0x1f0] sm:$0xff]
    %v453 = vld [vmem:[#allocation3 + $0x1f8] sm:$0xff]
    %v454 = vld [vmem:[#allocation6] sm:$0xff]
    %v455 = vld [vmem:[#allocation6 + $0x8] sm:$0xff]
    %v456 = vld [vmem:[#allocation6 + $0x10] sm:$0xff]
    %v457 = vld [vmem:[#allocation6 + $0x18] sm:$0xff]
    %v458 = vld [vmem:[#allocation6 + $0x20] sm:$0xff]
    %v459 = vld [vmem:[#allocation6 + $0x28] sm:$0xff]
    %v460 = vld [vmem:[#allocation6 + $0x30] sm:$0xff]
    %v461 = vld [vmem:[#allocation6 + $0x38] sm:$0xff]
    %v462 = vld [vmem:[#allocation6 + $0x40] sm:$0xff]
    %v463 = vld [vmem:[#allocation6 + $0x48] sm:$0xff]
    %v464 = vld [vmem:[#allocation6 + $0x50] sm:$0xff]
    %v465 = vld [vmem:[#allocation6 + $0x58] sm:$0xff]
    %v466 = vld [vmem:[#allocation6 + $0x60] sm:$0xff]
    %v467 = vld [vmem:[#allocation6 + $0x68] sm:$0xff]
    %v468 = vld [vmem:[#allocation6 + $0x70] sm:$0xff]
    %v469 = vld [vmem:[#allocation6 + $0x78] sm:$0xff]
    %v470 = vld [vmem:[#allocation6 + $0x80] sm:$0xff]
    %v471 = vld [vmem:[#allocation6 + $0x88] sm:$0xff]
    %v472 = vld [vmem:[#allocation6 + $0x90] sm:$0xff]
    %v473 = vld [vmem:[#allocation6 + $0x98] sm:$0xff]
    %v474 = vld [vmem:[#allocation6 + $0xa0] sm:$0xff]
    %v475 = vld [vmem:[#allocation6 + $0xa8] sm:$0xff]
    %v476 = vld [vmem:[#allocation6 + $0xb0] sm:$0xff]
    %v477 = vld [vmem:[#allocation6 + $0xb8] sm:$0xff]
    %v478 = vld [vmem:[#allocation6 + $0xc0] sm:$0xff]
    %v479 = vld [vmem:[#allocation6 + $0xc8] sm:$0xff]
    %v480 = vld [vmem:[#allocation6 + $0xd0] sm:$0xff]
    %v481 = vld [vmem:[#allocation6 + $0xd8] sm:$0xff]
    %v482 = vld [vmem:[#allocation6 + $0xe0] sm:$0xff]
    %v483 = vld [vmem:[#allocation6 + $0xe8] sm:$0xff]
    %v484 = vld [vmem:[#allocation6 + $0xf0] sm:$0xff]
    %v485 = vld [vmem:[#allocation6 + $0xf8] sm:$0xff]
    %v486 = vld [vmem:[#allocation6 + $0x100] sm:$0xff]
    %v487 = vld [vmem:[#allocation6 + $0x108] sm:$0xff]
    %v488 = vld [vmem:[#allocation6 + $0x110] sm:$0xff]
    %v489 = vld [vmem:[#allocation6 + $0x118] sm:$0xff]
    %v490 = vld [vmem:[#allocation6 + $0x120] sm:$0xff]
    %v491 = vld [vmem:[#allocation6 + $0x128] sm:$0xff]
    %v492 = vld [vmem:[#allocation6 + $0x130] sm:$0xff]
    %v493 = vld [vmem:[#allocation6 + $0x138] sm:$0xff]
    %v494 = vld [vmem:[#allocation6 + $0x140] sm:$0xff]
    %v495 = vld [vmem:[#allocation6 + $0x148] sm:$0xff]
    %v496 = vld [vmem:[#allocation6 + $0x150] sm:$0xff]
    %v497 = vld [vmem:[#allocation6 + $0x158] sm:$0xff]
    %v498 = vld [vmem:[#allocation6 + $0x160] sm:$0xff]
    %v499 = vld [vmem:[#allocation6 + $0x168] sm:$0xff]
    %v500 = vld [vmem:[#allocation6 + $0x170] sm:$0xff]
    %v501 = vld [vmem:[#allocation6 + $0x178] sm:$0xff]
    %v502 = vld [vmem:[#allocation6 + $0x180] sm:$0xff]
    %v503 = vld [vmem:[#allocation6 + $0x188] sm:$0xff]
    %v504 = vld [vmem:[#allocation6 + $0x190] sm:$0xff]
    %v505 = vld [vmem:[#allocation6 + $0x198] sm:$0xff]
    %v506 = vld [vmem:[#allocation6 + $0x1a0] sm:$0xff]
    %v507 = vld [vmem:[#allocation6 + $0x1a8] sm:$0xff]
    %v508 = vld [vmem:[#allocation6 + $0x1b0] sm:$0xff]
    %v509 = vld [vmem:[#allocation6 + $0x1b8] sm:$0xff]
    %v510 = vld [vmem:[#allocation6 + $0x1c0] sm:$0xff]
    %v511 = vld [vmem:[#allocation6 + $0x1c8] sm:$0xff]
    %v512 = vld [vmem:[#allocation6 + $0x1d0] sm:$0xff]
    %v513 = vld [vmem:[#allocation6 + $0x1d8] sm:$0xff]
    %v514 = vld [vmem:[#allocation6 + $0x1e0] sm:$0xff]
    %v515 = vld [vmem:[#allocation6 + $0x1e8] sm:$0xff]
    %v516 = vld [vmem:[#allocation6 + $0x1f0] sm:$0xff]
    %v517 = vld [vmem:[#allocation6 + $0x1f8] sm:$0xff]
    %v518 = vld [vmem:[#allocation6 + $0x200] sm:$0xff]
    %v519 = vld [vmem:[#allocation6 + $0x208] sm:$0xff]
    %v520 = vld [vmem:[#allocation6 + $0x210] sm:$0xff]
    %v521 = vld [vmem:[#allocation6 + $0x218] sm:$0xff]
    %v522 = vld [vmem:[#allocation6 + $0x220] sm:$0xff]
    %v523 = vld [vmem:[#allocation6 + $0x228] sm:$0xff]
    %v524 = vld [vmem:[#allocation6 + $0x230] sm:$0xff]
    %v525 = vld [vmem:[#allocation6 + $0x238] sm:$0xff]
    %v526 = vld [vmem:[#allocation6 + $0x240] sm:$0xff]
    %v527 = vld [vmem:[#allocation6 + $0x248] sm:$0xff]
    %v528 = vld [vmem:[#allocation6 + $0x250] sm:$0xff]
    %v529 = vld [vmem:[#allocation6 + $0x258] sm:$0xff]
    %v530 = vld [vmem:[#allocation6 + $0x260] sm:$0xff]
    %v531 = vld [vmem:[#allocation6 + $0x268] sm:$0xff]
    %v532 = vld [vmem:[#allocation6 + $0x270] sm:$0xff]
    %v533 = vld [vmem:[#allocation6 + $0x278] sm:$0xff]
    %v534 = vld [vmem:[#allocation6 + $0x280] sm:$0xff]
    %v535 = vld [vmem:[#allocation6 + $0x288] sm:$0xff]
    %v536 = vld [vmem:[#allocation6 + $0x290] sm:$0xff]
    %v537 = vld [vmem:[#allocation6 + $0x298] sm:$0xff]
    %v538 = vld [vmem:[#allocation6 + $0x2a0] sm:$0xff]
    %v539 = vld [vmem:[#allocation6 + $0x2a8] sm:$0xff]
    %v540 = vld [vmem:[#allocation6 + $0x2b0] sm:$0xff]
    %v541 = vld [vmem:[#allocation6 + $0x2b8] sm:$0xff]
    %v542 = vld [vmem:[#allocation6 + $0x2c0] sm:$0xff]
    %v543 = vld [vmem:[#allocation6 + $0x2c8] sm:$0xff]
    %v544 = vld [vmem:[#allocation6 + $0x2d0] sm:$0xff]
    %v545 = vld [vmem:[#allocation6 + $0x2d8] sm:$0xff]
    %v546 = vld [vmem:[#allocation6 + $0x2e0] sm:$0xff]
    %v547 = vld [vmem:[#allocation6 + $0x2e8] sm:$0xff]
    %v548 = vld [vmem:[#allocation6 + $0x2f0] sm:$0xff]
    %v549 = vld [vmem:[#allocation6 + $0x2f8] sm:$0xff]
    %v550 = vld [vmem:[#allocation6 + $0x300] sm:$0xff]
    %v551 = vld [vmem:[#allocation6 + $0x308] sm:$0xff]
    %v552 = vld [vmem:[#allocation6 + $0x310] sm:$0xff]
    %v553 = vld [vmem:[#allocation6 + $0x318] sm:$0xff]
    %v554 = vld [vmem:[#allocation6 + $0x320] sm:$0xff]
    %v555 = vld [vmem:[#allocation6 + $0x328] sm:$0xff]
    %v556 = vld [vmem:[#allocation6 + $0x330] sm:$0xff]
    %v557 = vld [vmem:[#allocation6 + $0x338] sm:$0xff]
    %v558 = vld [vmem:[#allocation6 + $0x340] sm:$0xff]
    %v559 = vld [vmem:[#allocation6 + $0x348] sm:$0xff]
    %v560 = vld [vmem:[#allocation6 + $0x350] sm:$0xff]
    %v561 = vld [vmem:[#allocation6 + $0x358] sm:$0xff]
    %v562 = vld [vmem:[#allocation6 + $0x360] sm:$0xff]
    %v563 = vld [vmem:[#allocation6 + $0x368] sm:$0xff]
    %v564 = vld [vmem:[#allocation6 + $0x370] sm:$0xff]
    %v565 = vld [vmem:[#allocation6 + $0x378] sm:$0xff]
    %v566 = vld [vmem:[#allocation6 + $0x380] sm:$0xff]
    %v567 = vld [vmem:[#allocation6 + $0x388] sm:$0xff]
    %v568 = vld [vmem:[#allocation6 + $0x390] sm:$0xff]
    %v569 = vld [vmem:[#allocation6 + $0x398] sm:$0xff]
    %v570 = vld [vmem:[#allocation6 + $0x3a0] sm:$0xff]
    %v571 = vld [vmem:[#allocation6 + $0x3a8] sm:$0xff]
    %v572 = vld [vmem:[#allocation6 + $0x3b0] sm:$0xff]
    %v573 = vld [vmem:[#allocation6 + $0x3b8] sm:$0xff]
    %v574 = vld [vmem:[#allocation6 + $0x3c0] sm:$0xff]
    %v575 = vld [vmem:[#allocation6 + $0x3c8] sm:$0xff]
    %v576 = vld [vmem:[#allocation6 + $0x3d0] sm:$0xff]
    %v577 = vld [vmem:[#allocation6 + $0x3d8] sm:$0xff]
    %v578 = vld [vmem:[#allocation6 + $0x3e0] sm:$0xff]
    %v579 = vld [vmem:[#allocation6 + $0x3e8] sm:$0xff]
    %v580 = vld [vmem:[#allocation6 + $0x3f0] sm:$0xff]
    %v581 = vld [vmem:[#allocation6 + $0x3f8] sm:$0xff]
    %v582 = vld [vmem:[%s5] sm:$0xf]
    %v583 = vld [vmem:[#allocation2] sm:$0xff]
    %v584 = vld [vmem:[#allocation2 + $0x8] sm:$0xff]
    %v585 = vld [vmem:[#allocation2 + $0x10] sm:$0xff]
    %v586 = vld [vmem:[#allocation2 + $0x18] sm:$0xff]
    %587 = vmatprep.subr.mxu0 %v451
    %588 = vmatpush1.msra.mxu0 %v450
    %589 = vmatprep.subr.mxu0 %v447
    %590 = vmatpush1.msra.mxu0 %v446
    %591 = vmatprep.subr.mxu0 %v443
    %592 = vmatpush1.msra.mxu0 %v442
    %593 = vmatprep.subr.mxu0 %v439
    %594 = vmatpush1.msra.mxu0 %v438
    %595 = vmatprep.subr.mxu0 %v435
    %596 = vmatpush1.msra.mxu0 %v434
    %597 = vmatprep.subr.mxu0 %v431
    %598 = vmatpush1.msra.mxu0 %v430
    %599 = vmatprep.subr.mxu0 %v427
    %600 = vmatpush1.msra.mxu0 %v426
    %601 = vmatprep.subr.mxu0 %v423
    %602 = vmatpush1.msra.mxu0 %v422
    %603 = vmatprep.subr.mxu0 %v419
    %604 = vmatpush1.msra.mxu0 %v418
    %605 = vmatprep.subr.mxu0 %v415
    %606 = vmatpush1.msra.mxu0 %v414
    %607 = vmatprep.subr.mxu0 %v411
    %608 = vmatpush1.msra.mxu0 %v410
    %609 = vmatprep.subr.mxu0 %v407
    %610 = vmatpush1.msra.mxu0 %v406
    %611 = vmatprep.subr.mxu0 %v403
    %612 = vmatpush1.msra.mxu0 %v402
    %613 = vmatprep.subr.mxu0 %v399
    %614 = vmatpush1.msra.mxu0 %v398
    %615 = vmatprep.subr.mxu0 %v395
    %616 = vmatpush1.msra.mxu0 %v394
    %617 = vmatprep.subr.mxu0 %v391
    %618 = vmatpush1.msra.mxu0 %v390
    %619 = vmatprep.subr.mxu0 0.0
    %620 = vmatpush2.msra.mxu0 0.0
    %621 = vmatprep.subr.mxu0 0.0
    %622 = vmatpush2.msra.mxu0 0.0
    %623 = vmatprep.subr.mxu0 0.0
    %624 = vmatpush2.msra.mxu0 0.0
    %625 = vmatprep.subr.mxu0 0.0
    %626 = vmatpush2.msra.mxu0 0.0
    %627 = vmatprep.subr.mxu0 0.0
    %628 = vmatpush2.msra.mxu0 0.0
    %629 = vmatprep.subr.mxu0 0.0
    %630 = vmatpush2.msra.mxu0 0.0
    %631 = vmatprep.subr.mxu0 0.0
    %632 = vmatpush2.msra.mxu0 0.0
    %633 = vmatprep.subr.mxu0 0.0
    %634 = vmatpush2.msra.mxu0 0.0
    %635 = vmatprep.subr.mxu0 0.0
    %636 = vmatpush2.msra.mxu0 0.0
    %637 = vmatprep.subr.mxu0 0.0
    %638 = vmatpush2.msra.mxu0 0.0
    %639 = vmatprep.subr.mxu0 0.0
    %640 = vmatpush2.msra.mxu0 0.0
    %641 = vmatprep.subr.mxu0 0.0
    %642 = vmatpush2.msra.mxu0 0.0
    %643 = vmatprep.subr.mxu0 0.0
    %644 = vmatpush2.msra.mxu0 0.0
    %645 = vmatprep.subr.mxu0 0.0
    %646 = vmatpush2.msra.mxu0 0.0
    %647 = vmatprep.subr.mxu0 0.0
    %648 = vmatpush2.msra.mxu0 0.0
    %649 = vmatprep.subr.mxu0 0.0
    %650 = vmatpush2.msra.mxu0 0.0
    %651 = vmatprep.mubr.f32.mxu0 0.0
    %652 = vmatmul.mubr.f32.gmra.mxu0 0.0
    %v653 = vpop.f32.mrf.mxu0
    %v654 = vadd.f32 0.0, %v653
    %v655 = vpop.f32.mrf.mxu0
    %v656 = vadd.f32 0.0, %v655
    %657 = vdwg.mxu0
    %658 = vmatprep.subr.mxu0 %v453
    %659 = vmatpush1.msra.mxu0 %v452
    %660 = vmatprep.subr.mxu0 %v449
    %661 = vmatpush1.msra.mxu0 %v448
    %662 = vmatprep.subr.mxu0 %v445
    %663 = vmatpush1.msra.mxu0 %v444
    %664 = vmatprep.subr.mxu0 %v441
    %665 = vmatpush1.msra.mxu0 %v440
    %666 = vmatprep.subr.mxu0 %v437
    %667 = vmatpush1.msra.mxu0 %v436
    %668 = vmatprep.subr.mxu0 %v433
    %669 = vmatpush1.msra.mxu0 %v432
    %670 = vmatprep.subr.mxu0 %v429
    %671 = vmatpush1.msra.mxu0 %v428
    %672 = vmatprep.subr.mxu0 %v425
    %673 = vmatpush1.msra.mxu0 %v424
    %674 = vmatprep.subr.mxu0 %v421
    %675 = vmatpush1.msra.mxu0 %v420
    %676 = vmatprep.subr.mxu0 %v417
    %677 = vmatpush1.msra.mxu0 %v416
    %678 = vmatprep.subr.mxu0 %v413
    %679 = vmatpush1.msra.mxu0 %v412
    %680 = vmatprep.subr.mxu0 %v409
    %681 = vmatpush1.msra.mxu0 %v408
    %682 = vmatprep.subr.mxu0 %v405
    %683 = vmatpush1.msra.mxu0 %v404
    %684 = vmatprep.subr.mxu0 %v401
    %685 = vmatpush1.msra.mxu0 %v400
    %686 = vmatprep.subr.mxu0 %v397
    %687 = vmatpush1.msra.mxu0 %v396
    %688 = vmatprep.subr.mxu0 %v393
    %689 = vmatpush1.msra.mxu0 %v392
    %690 = vmatprep.subr.mxu0 0.0
    %691 = vmatpush2.msra.mxu0 0.0
    %692 = vmatprep.subr.mxu0 0.0
    %693 = vmatpush2.msra.mxu0 0.0
    %694 = vmatprep.subr.mxu0 0.0
    %695 = vmatpush2.msra.mxu0 0.0
    %696 = vmatprep.subr.mxu0 0.0
    %697 = vmatpush2.msra.mxu0 0.0
    %698 = vmatprep.subr.mxu0 0.0
    %699 = vmatpush2.msra.mxu0 0.0
    %700 = vmatprep.subr.mxu0 0.0
    %701 = vmatpush2.msra.mxu0 0.0
    %702 = vmatprep.subr.mxu0 0.0
    %703 = vmatpush2.msra.mxu0 0.0
    %704 = vmatprep.subr.mxu0 0.0
    %705 = vmatpush2.msra.mxu0 0.0
    %706 = vmatprep.subr.mxu0 0.0
    %707 = vmatpush2.msra.mxu0 0.0
    %708 = vmatprep.subr.mxu0 0.0
    %709 = vmatpush2.msra.mxu0 0.0
    %710 = vmatprep.subr.mxu0 0.0
    %711 = vmatpush2.msra.mxu0 0.0
    %712 = vmatprep.subr.mxu0 0.0
    %713 = vmatpush2.msra.mxu0 0.0
    %714 = vmatprep.subr.mxu0 0.0
    %715 = vmatpush2.msra.mxu0 0.0
    %716 = vmatprep.subr.mxu0 0.0
    %717 = vmatpush2.msra.mxu0 0.0
    %718 = vmatprep.subr.mxu0 0.0
    %719 = vmatpush2.msra.mxu0 0.0
    %720 = vmatprep.subr.mxu0 0.0
    %721 = vmatpush2.msra.mxu0 0.0
    %722 = vmatprep.mubr.f32.mxu0 0.0
    %723 = vmatmul.mubr.f32.gmra.mxu0 0.0
    %v724 = vpop.f32.mrf.mxu0
    %v725 = vadd.f32 0.0, %v724
    %v726 = vpop.f32.mrf.mxu0
    %v727 = vadd.f32 0.0, %v726
    %728 = vdwg.mxu0
    %v729 = vadd.f32 %v583, %v654
    %v730 = vadd.f32 %v584, %v656
    %v731 = vadd.f32 %v585, %v725
    %v732 = vadd.f32 %v586, %v727
    %v733 = vxor.u32 %v729, 2147483648
    %v734 = vmul.f32 %v733, 1.442695
    %v735 = vpow.pop %v734
    %v736 = vadd.f32 %v735, 1.0
    %v737 = vrcp.pop %v736
    %v738 = vmul.f32 1.0, %v737
    %v739 = vxor.u32 %v730, 2147483648
    %v740 = vmul.f32 %v739, 1.442695
    %v741 = vpow.pop %v740
    %v742 = vadd.f32 %v741, 1.0
    %v743 = vrcp.pop %v742
    %v744 = vmul.f32 1.0, %v743
    %v745 = vtanh.pop %v731
    %v746 = vxor.u32 %v732, 2147483648
    %v747 = vmul.f32 %v746, 1.442695
    %v748 = vpow.pop %v747
    %v749 = vadd.f32 %v748, 1.0
    %v750 = vrcp.pop %v749
    %v751 = vmul.f32 1.0, %v750
    %v752 = vmul.f32 %v744, 0.0
    %v753 = vmul.f32 %v738, %v745
    %v754 = vadd.f32 %v752, %v753
    %v755 = vtanh.pop %v754
    %v756 = vmul.f32 %v751, %v755
    %v758 = vlaneseq
    %v759 = vshrl.u32 %v758, 7
    %v760 = vsub.s32 0, %v759
    %v761 = vrot.slane %v582, %v760
    %v762 = vlaneseq
    %v763 = vshrl.u32 %v762, 7
    %v764 = vsub.s32 1, %v763
    %v765 = vrot.slane %v582, %v764
    %v766 = vlaneseq
    %v767 = vshrl.u32 %v766, 7
    %v768 = vsub.s32 2, %v767
    %v769 = vrot.slane %v582, %v768
    %v770 = vlaneseq
    %v771 = vshrl.u32 %v770, 7
    %v772 = vsub.s32 3, %v771
    %v773 = vrot.slane %v582, %v772
    %778 = vmatprep.subr.mxu0 %v515
    %779 = vmatpush1.msra.mxu0 %v514
    %780 = vmatprep.subr.mxu0 %v511
    %781 = vmatpush1.msra.mxu0 %v510
    %782 = vmatprep.subr.mxu0 %v507
    %783 = vmatpush1.msra.mxu0 %v506
    %784 = vmatprep.subr.mxu0 %v503
    %785 = vmatpush1.msra.mxu0 %v502
    %786 = vmatprep.subr.mxu0 %v499
    %787 = vmatpush1.msra.mxu0 %v498
    %788 = vmatprep.subr.mxu0 %v495
    %789 = vmatpush1.msra.mxu0 %v494
    %790 = vmatprep.subr.mxu0 %v491
    %791 = vmatpush1.msra.mxu0 %v490
    %792 = vmatprep.subr.mxu0 %v487
    %793 = vmatpush1.msra.mxu0 %v486
    %794 = vmatprep.subr.mxu0 %v483
    %795 = vmatpush1.msra.mxu0 %v482
    %796 = vmatprep.subr.mxu0 %v479
    %797 = vmatpush1.msra.mxu0 %v478
    %798 = vmatprep.subr.mxu0 %v475
    %799 = vmatpush1.msra.mxu0 %v474
    %800 = vmatprep.subr.mxu0 %v471
    %801 = vmatpush1.msra.mxu0 %v470
    %802 = vmatprep.subr.mxu0 %v467
    %803 = vmatpush1.msra.mxu0 %v466
    %804 = vmatprep.subr.mxu0 %v463
    %805 = vmatpush1.msra.mxu0 %v462
    %806 = vmatprep.subr.mxu0 %v459
    %807 = vmatpush1.msra.mxu0 %v458
    %808 = vmatprep.subr.mxu0 %v455
    %809 = vmatpush1.msra.mxu0 %v454
    %810 = vmatprep.subr.mxu0 %v579
    %811 = vmatpush2.msra.mxu0 %v578
    %812 = vmatprep.subr.mxu0 %v575
    %813 = vmatpush2.msra.mxu0 %v574
    %814 = vmatprep.subr.mxu0 %v571
    %815 = vmatpush2.msra.mxu0 %v570
    %816 = vmatprep.subr.mxu0 %v567
    %817 = vmatpush2.msra.mxu0 %v566
    %818 = vmatprep.subr.mxu0 %v563
    %819 = vmatpush2.msra.mxu0 %v562
    %820 = vmatprep.subr.mxu0 %v559
    %821 = vmatpush2.msra.mxu0 %v558
    %822 = vmatprep.subr.mxu0 %v555
    %823 = vmatpush2.msra.mxu0 %v554
    %824 = vmatprep.subr.mxu0 %v551
    %825 = vmatpush2.msra.mxu0 %v550
    %826 = vmatprep.subr.mxu0 %v547
    %827 = vmatpush2.msra.mxu0 %v546
    %828 = vmatprep.subr.mxu0 %v543
    %829 = vmatpush2.msra.mxu0 %v542
    %830 = vmatprep.subr.mxu0 %v539
    %831 = vmatpush2.msra.mxu0 %v538
    %832 = vmatprep.subr.mxu0 %v535
    %833 = vmatpush2.msra.mxu0 %v534
    %834 = vmatprep.subr.mxu0 %v531
    %835 = vmatpush2.msra.mxu0 %v530
    %836 = vmatprep.subr.mxu0 %v527
    %837 = vmatpush2.msra.mxu0 %v526
    %838 = vmatprep.subr.mxu0 %v523
    %839 = vmatpush2.msra.mxu0 %v522
    %840 = vmatprep.subr.mxu0 %v519
    %841 = vmatpush2.msra.mxu0 %v518
    %842 = vmatprep.mubr.f32.mxu0 0.0
    %843 = vmatmul.mubr.f32.gmra.mxu0 %v756
    %v844 = vpop.f32.mrf.mxu0
    %v845 = vadd.f32 %v761, %v844
    %v846 = vpop.f32.mrf.mxu0
    %v847 = vadd.f32 %v765, %v846
    %848 = vdwg.mxu0
    %849 = vmatprep.subr.mxu0 %v517
    %850 = vmatpush1.msra.mxu0 %v516
    %851 = vmatprep.subr.mxu0 %v513
    %852 = vmatpush1.msra.mxu0 %v512
    %853 = vmatprep.subr.mxu0 %v509
    %854 = vmatpush1.msra.mxu0 %v508
    %855 = vmatprep.subr.mxu0 %v505
    %856 = vmatpush1.msra.mxu0 %v504
    %857 = vmatprep.subr.mxu0 %v501
    %858 = vmatpush1.msra.mxu0 %v500
    %859 = vmatprep.subr.mxu0 %v497
    %860 = vmatpush1.msra.mxu0 %v496
    %861 = vmatprep.subr.mxu0 %v493
    %862 = vmatpush1.msra.mxu0 %v492
    %863 = vmatprep.subr.mxu0 %v489
    %864 = vmatpush1.msra.mxu0 %v488
    %865 = vmatprep.subr.mxu0 %v485
    %866 = vmatpush1.msra.mxu0 %v484
    %867 = vmatprep.subr.mxu0 %v481
    %868 = vmatpush1.msra.mxu0 %v480
    %869 = vmatprep.subr.mxu0 %v477
    %870 = vmatpush1.msra.mxu0 %v476
    %871 = vmatprep.subr.mxu0 %v473
    %872 = vmatpush1.msra.mxu0 %v472
    %873 = vmatprep.subr.mxu0 %v469
    %874 = vmatpush1.msra.mxu0 %v468
    %875 = vmatprep.subr.mxu0 %v465
    %876 = vmatpush1.msra.mxu0 %v464
    %877 = vmatprep.subr.mxu0 %v461
    %878 = vmatpush1.msra.mxu0 %v460
    %879 = vmatprep.subr.mxu0 %v457
    %880 = vmatpush1.msra.mxu0 %v456
    %881 = vmatprep.subr.mxu0 %v581
    %882 = vmatpush2.msra.mxu0 %v580
    %883 = vmatprep.subr.mxu0 %v577
    %884 = vmatpush2.msra.mxu0 %v576
    %885 = vmatprep.subr.mxu0 %v573
    %886 = vmatpush2.msra.mxu0 %v572
    %887 = vmatprep.subr.mxu0 %v569
    %888 = vmatpush2.msra.mxu0 %v568
    %889 = vmatprep.subr.mxu0 %v565
    %890 = vmatpush2.msra.mxu0 %v564
    %891 = vmatprep.subr.mxu0 %v561
    %892 = vmatpush2.msra.mxu0 %v560
    %893 = vmatprep.subr.mxu0 %v557
    %894 = vmatpush2.msra.mxu0 %v556
    %895 = vmatprep.subr.mxu0 %v553
    %896 = vmatpush2.msra.mxu0 %v552
    %897 = vmatprep.subr.mxu0 %v549
    %898 = vmatpush2.msra.mxu0 %v548
    %899 = vmatprep.subr.mxu0 %v545
    %900 = vmatpush2.msra.mxu0 %v544
    %901 = vmatprep.subr.mxu0 %v541
    %902 = vmatpush2.msra.mxu0 %v540
    %903 = vmatprep.subr.mxu0 %v537
    %904 = vmatpush2.msra.mxu0 %v536
    %905 = vmatprep.subr.mxu0 %v533
    %906 = vmatpush2.msra.mxu0 %v532
    %907 = vmatprep.subr.mxu0 %v529
    %908 = vmatpush2.msra.mxu0 %v528
    %909 = vmatprep.subr.mxu0 %v525
    %910 = vmatpush2.msra.mxu0 %v524
    %911 = vmatprep.subr.mxu0 %v521
    %912 = vmatpush2.msra.mxu0 %v520
    %913 = vmatprep.mubr.f32.mxu0 0.0
    %914 = vmatmul.mubr.f32.gmra.mxu0 %v756
    %v915 = vpop.f32.mrf.mxu0
    %v916 = vadd.f32 %v769, %v915
    %v917 = vpop.f32.mrf.mxu0
    %v918 = vadd.f32 %v773, %v917
    %919 = vdwg.mxu0
    %v920 = vxor.u32 %v845, 2147483648
    %v921 = vmul.f32 %v920, 1.442695
    %v922 = vpow.pop %v921
    %v923 = vadd.f32 %v922, 1.0
    %v924 = vrcp.pop %v923
    %v925 = vmul.f32 1.0, %v924
    %v926 = vxor.u32 %v847, 2147483648
    %v927 = vmul.f32 %v926, 1.442695
    %v928 = vpow.pop %v927
    %v929 = vadd.f32 %v928, 1.0
    %v930 = vrcp.pop %v929
    %v931 = vmul.f32 1.0, %v930
    %v932 = vtanh.pop %v916
    %v933 = vxor.u32 %v918, 2147483648
    %v934 = vmul.f32 %v933, 1.442695
    %v935 = vpow.pop %v934
    %v936 = vadd.f32 %v935, 1.0
    %v937 = vrcp.pop %v936
    %v938 = vmul.f32 1.0, %v937
    %v939 = vmul.f32 %v931, 0.0
    %v940 = vmul.f32 %v925, %v932
    %v941 = vadd.f32 %v939, %v940
    %v942 = vtanh.pop %v941
    %v943 = vmul.f32 %v938, %v942
    %s944 = scalar_lea.vmem [#allocation2], 32
    %v945 = vld [vmem:[%s944] sm:$0xff]
    %v946 = vld [vmem:[%s944 + $0x8] sm:$0xff]
    %v947 = vld [vmem:[%s944 + $0x10] sm:$0xff]
    %v948 = vld [vmem:[%s944 + $0x18] sm:$0xff]
    %949 = vmatprep.subr.mxu0 %v451
    %950 = vmatpush1.msra.mxu0 %v450
    %951 = vmatprep.subr.mxu0 %v447
    %952 = vmatpush1.msra.mxu0 %v446
    %953 = vmatprep.subr.mxu0 %v443
    %954 = vmatpush1.msra.mxu0 %v442
    %955 = vmatprep.subr.mxu0 %v439
    %956 = vmatpush1.msra.mxu0 %v438
    %957 = vmatprep.subr.mxu0 %v435
    %958 = vmatpush1.msra.mxu0 %v434
    %959 = vmatprep.subr.mxu0 %v431
    %960 = vmatpush1.msra.mxu0 %v430
    %961 = vmatprep.subr.mxu0 %v427
    %962 = vmatpush1.msra.mxu0 %v426
    %963 = vmatprep.subr.mxu0 %v423
    %964 = vmatpush1.msra.mxu0 %v422
    %965 = vmatprep.subr.mxu0 %v419
    %966 = vmatpush1.msra.mxu0 %v418
    %967 = vmatprep.subr.mxu0 %v415
    %968 = vmatpush1.msra.mxu0 %v414
    %969 = vmatprep.subr.mxu0 %v411
    %970 = vmatpush1.msra.mxu0 %v410
    %971 = vmatprep.subr.mxu0 %v407
    %972 = vmatpush1.msra.mxu0 %v406
    %973 = vmatprep.subr.mxu0 %v403
    %974 = vmatpush1.msra.mxu0 %v402
    %975 = vmatprep.subr.mxu0 %v399
    %976 = vmatpush1.msra.mxu0 %v398
    %977 = vmatprep.subr.mxu0 %v395
    %978 = vmatpush1.msra.mxu0 %v394
    %979 = vmatprep.subr.mxu0 %v391
    %980 = vmatpush1.msra.mxu0 %v390
    %981 = vmatprep.subr.mxu0 0.0
    %982 = vmatpush2.msra.mxu0 0.0
    %983 = vmatprep.subr.mxu0 0.0
    %984 = vmatpush2.msra.mxu0 0.0
    %985 = vmatprep.subr.mxu0 0.0
    %986 = vmatpush2.msra.mxu0 0.0
    %987 = vmatprep.subr.mxu0 0.0
    %988 = vmatpush2.msra.mxu0 0.0
    %989 = vmatprep.subr.mxu0 0.0
    %990 = vmatpush2.msra.mxu0 0.0
    %991 = vmatprep.subr.mxu0 0.0
    %992 = vmatpush2.msra.mxu0 0.0
    %993 = vmatprep.subr.mxu0 0.0
    %994 = vmatpush2.msra.mxu0 0.0
    %995 = vmatprep.subr.mxu0 0.0
    %996 = vmatpush2.msra.mxu0 0.0
    %997 = vmatprep.subr.mxu0 0.0
    %998 = vmatpush2.msra.mxu0 0.0
    %999 = vmatprep.subr.mxu0 0.0
    %1000 = vmatpush2.msra.mxu0 0.0
    %1001 = vmatprep.subr.mxu0 0.0
    %1002 = vmatpush2.msra.mxu0 0.0
    %1003 = vmatprep.subr.mxu0 0.0
    %1004 = vmatpush2.msra.mxu0 0.0
    %1005 = vmatprep.subr.mxu0 0.0
    %1006 = vmatpush2.msra.mxu0 0.0
    %1007 = vmatprep.subr.mxu0 0.0
    %1008 = vmatpush2.msra.mxu0 0.0
    %1009 = vmatprep.subr.mxu0 0.0
    %1010 = vmatpush2.msra.mxu0 0.0
    %1011 = vmatprep.subr.mxu0 0.0
    %1012 = vmatpush2.msra.mxu0 0.0
    %1013 = vmatprep.mubr.f32.mxu0 0.0
    %1014 = vmatmul.mubr.f32.gmra.mxu0 %v756
    %v1015 = vpop.f32.mrf.mxu0
    %v1016 = vadd.f32 0.0, %v1015
    %v1017 = vpop.f32.mrf.mxu0
    %v1018 = vadd.f32 0.0, %v1017
    %1019 = vdwg.mxu0
    %1020 = vmatprep.subr.mxu0 %v453
    %1021 = vmatpush1.msra.mxu0 %v452
    %1022 = vmatprep.subr.mxu0 %v449
    %1023 = vmatpush1.msra.mxu0 %v448
    %1024 = vmatprep.subr.mxu0 %v445
    %1025 = vmatpush1.msra.mxu0 %v444
    %1026 = vmatprep.subr.mxu0 %v441
    %1027 = vmatpush1.msra.mxu0 %v440
    %1028 = vmatprep.subr.mxu0 %v437
    %1029 = vmatpush1.msra.mxu0 %v436
    %1030 = vmatprep.subr.mxu0 %v433
    %1031 = vmatpush1.msra.mxu0 %v432
    %1032 = vmatprep.subr.mxu0 %v429
    %1033 = vmatpush1.msra.mxu0 %v428
    %1034 = vmatprep.subr.mxu0 %v425
    %1035 = vmatpush1.msra.mxu0 %v424
    %1036 = vmatprep.subr.mxu0 %v421
    %1037 = vmatpush1.msra.mxu0 %v420
    %1038 = vmatprep.subr.mxu0 %v417
    %1039 = vmatpush1.msra.mxu0 %v416
    %1040 = vmatprep.subr.mxu0 %v413
    %1041 = vmatpush1.msra.mxu0 %v412
    %1042 = vmatprep.subr.mxu0 %v409
    %1043 = vmatpush1.msra.mxu0 %v408
    %1044 = vmatprep.subr.mxu0 %v405
    %1045 = vmatpush1.msra.mxu0 %v404
    %1046 = vmatprep.subr.mxu0 %v401
    %1047 = vmatpush1.msra.mxu0 %v400
    %1048 = vmatprep.subr.mxu0 %v397
    %1049 = vmatpush1.msra.mxu0 %v396
    %1050 = vmatprep.subr.mxu0 %v393
    %1051 = vmatpush1.msra.mxu0 %v392
    %1052 = vmatprep.subr.mxu0 0.0
    %1053 = vmatpush2.msra.mxu0 0.0
    %1054 = vmatprep.subr.mxu0 0.0
    %1055 = vmatpush2.msra.mxu0 0.0
    %1056 = vmatprep.subr.mxu0 0.0
    %1057 = vmatpush2.msra.mxu0 0.0
    %1058 = vmatprep.subr.mxu0 0.0
    %1059 = vmatpush2.msra.mxu0 0.0
    %1060 = vmatprep.subr.mxu0 0.0
    %1061 = vmatpush2.msra.mxu0 0.0
    %1062 = vmatprep.subr.mxu0 0.0
    %1063 = vmatpush2.msra.mxu0 0.0
    %1064 = vmatprep.subr.mxu0 0.0
    %1065 = vmatpush2.msra.mxu0 0.0
    %1066 = vmatprep.subr.mxu0 0.0
    %1067 = vmatpush2.msra.mxu0 0.0
    %1068 = vmatprep.subr.mxu0 0.0
    %1069 = vmatpush2.msra.mxu0 0.0
    %1070 = vmatprep.subr.mxu0 0.0
    %1071 = vmatpush2.msra.mxu0 0.0
    %1072 = vmatprep.subr.mxu0 0.0
    %1073 = vmatpush2.msra.mxu0 0.0
    %1074 = vmatprep.subr.mxu0 0.0
    %1075 = vmatpush2.msra.mxu0 0.0
    %1076 = vmatprep.subr.mxu0 0.0
    %1077 = vmatpush2.msra.mxu0 0.0
    %1078 = vmatprep.subr.mxu0 0.0
    %1079 = vmatpush2.msra.mxu0 0.0
    %1080 = vmatprep.subr.mxu0 0.0
    %1081 = vmatpush2.msra.mxu0 0.0
    %1082 = vmatprep.subr.mxu0 0.0
    %1083 = vmatpush2.msra.mxu0 0.0
    %1084 = vmatprep.mubr.f32.mxu0 0.0
    %1085 = vmatmul.mubr.f32.gmra.mxu0 %v756
    %v1086 = vpop.f32.mrf.mxu0
    %v1087 = vadd.f32 0.0, %v1086
    %v1088 = vpop.f32.mrf.mxu0
    %v1089 = vadd.f32 0.0, %v1088
    %1090 = vdwg.mxu0
    %v1091 = vadd.f32 %v945, %v1016
    %v1092 = vadd.f32 %v946, %v1018
    %v1093 = vadd.f32 %v947, %v1087
    %v1094 = vadd.f32 %v948, %v1089
    %v1095 = vxor.u32 %v1091, 2147483648
    %v1096 = vmul.f32 %v1095, 1.442695
    %v1097 = vpow.pop %v1096
    %v1098 = vadd.f32 %v1097, 1.0
    %v1099 = vrcp.pop %v1098
    %v1100 = vmul.f32 1.0, %v1099
    %v1101 = vxor.u32 %v1092, 2147483648
    %v1102 = vmul.f32 %v1101, 1.442695
    %v1103 = vpow.pop %v1102
    %v1104 = vadd.f32 %v1103, 1.0
    %v1105 = vrcp.pop %v1104
    %v1106 = vmul.f32 1.0, %v1105
    %v1107 = vtanh.pop %v1093
    %v1108 = vxor.u32 %v1094, 2147483648
    %v1109 = vmul.f32 %v1108, 1.442695
    %v1110 = vpow.pop %v1109
    %v1111 = vadd.f32 %v1110, 1.0
    %v1112 = vrcp.pop %v1111
    %v1113 = vmul.f32 1.0, %v1112
    %v1114 = vmul.f32 %v1106, %v754
    %v1115 = vmul.f32 %v1100, %v1107
    %v1116 = vadd.f32 %v1114, %v1115
    %v1117 = vtanh.pop %v1116
    %v1118 = vmul.f32 %v1113, %v1117
    %1119 = vmatprep.subr.mxu0 %v515
    %1120 = vmatpush1.msra.mxu0 %v514
    %1121 = vmatprep.subr.mxu0 %v511
    %1122 = vmatpush1.msra.mxu0 %v510
    %1123 = vmatprep.subr.mxu0 %v507
    %1124 = vmatpush1.msra.mxu0 %v506
    %1125 = vmatprep.subr.mxu0 %v503
    %1126 = vmatpush1.msra.mxu0 %v502
    %1127 = vmatprep.subr.mxu0 %v499
    %1128 = vmatpush1.msra.mxu0 %v498
    %1129 = vmatprep.subr.mxu0 %v495
    %1130 = vmatpush1.msra.mxu0 %v494
    %1131 = vmatprep.subr.mxu0 %v491
    %1132 = vmatpush1.msra.mxu0 %v490
    %1133 = vmatprep.subr.mxu0 %v487
    %1134 = vmatpush1.msra.mxu0 %v486
    %1135 = vmatprep.subr.mxu0 %v483
    %1136 = vmatpush1.msra.mxu0 %v482
    %1137 = vmatprep.subr.mxu0 %v479
    %1138 = vmatpush1.msra.mxu0 %v478
    %1139 = vmatprep.subr.mxu0 %v475
    %1140 = vmatpush1.msra.mxu0 %v474
    %1141 = vmatprep.subr.mxu0 %v471
    %1142 = vmatpush1.msra.mxu0 %v470
    %1143 = vmatprep.subr.mxu0 %v467
    %1144 = vmatpush1.msra.mxu0 %v466
    %1145 = vmatprep.subr.mxu0 %v463
    %1146 = vmatpush1.msra.mxu0 %v462
    %1147 = vmatprep.subr.mxu0 %v459
    %1148 = vmatpush1.msra.mxu0 %v458
    %1149 = vmatprep.subr.mxu0 %v455
    %1150 = vmatpush1.msra.mxu0 %v454
    %1151 = vmatprep.subr.mxu0 %v579
    %1152 = vmatpush2.msra.mxu0 %v578
    %1153 = vmatprep.subr.mxu0 %v575
    %1154 = vmatpush2.msra.mxu0 %v574
    %1155 = vmatprep.subr.mxu0 %v571
    %1156 = vmatpush2.msra.mxu0 %v570
    %1157 = vmatprep.subr.mxu0 %v567
    %1158 = vmatpush2.msra.mxu0 %v566
    %1159 = vmatprep.subr.mxu0 %v563
    %1160 = vmatpush2.msra.mxu0 %v562
    %1161 = vmatprep.subr.mxu0 %v559
    %1162 = vmatpush2.msra.mxu0 %v558
    %1163 = vmatprep.subr.mxu0 %v555
    %1164 = vmatpush2.msra.mxu0 %v554
    %1165 = vmatprep.subr.mxu0 %v551
    %1166 = vmatpush2.msra.mxu0 %v550
    %1167 = vmatprep.subr.mxu0 %v547
    %1168 = vmatpush2.msra.mxu0 %v546
    %1169 = vmatprep.subr.mxu0 %v543
    %1170 = vmatpush2.msra.mxu0 %v542
    %1171 = vmatprep.subr.mxu0 %v539
    %1172 = vmatpush2.msra.mxu0 %v538
    %1173 = vmatprep.subr.mxu0 %v535
    %1174 = vmatpush2.msra.mxu0 %v534
    %1175 = vmatprep.subr.mxu0 %v531
    %1176 = vmatpush2.msra.mxu0 %v530
    %1177 = vmatprep.subr.mxu0 %v527
    %1178 = vmatpush2.msra.mxu0 %v526
    %1179 = vmatprep.subr.mxu0 %v523
    %1180 = vmatpush2.msra.mxu0 %v522
    %1181 = vmatprep.subr.mxu0 %v519
    %1182 = vmatpush2.msra.mxu0 %v518
    %1183 = vmatprep.mubr.f32.mxu0 %v943
    %1184 = vmatmul.mubr.f32.gmra.mxu0 %v1118
    %v1185 = vpop.f32.mrf.mxu0
    %v1186 = vadd.f32 %v761, %v1185
    %v1187 = vpop.f32.mrf.mxu0
    %v1188 = vadd.f32 %v765, %v1187
    %1189 = vdwg.mxu0
    %1190 = vmatprep.subr.mxu0 %v517
    %1191 = vmatpush1.msra.mxu0 %v516
    %1192 = vmatprep.subr.mxu0 %v513
    %1193 = vmatpush1.msra.mxu0 %v512
    %1194 = vmatprep.subr.mxu0 %v509
    %1195 = vmatpush1.msra.mxu0 %v508
    %1196 = vmatprep.subr.mxu0 %v505
    %1197 = vmatpush1.msra.mxu0 %v504
    %1198 = vmatprep.subr.mxu0 %v501
    %1199 = vmatpush1.msra.mxu0 %v500
    %1200 = vmatprep.subr.mxu0 %v497
    %1201 = vmatpush1.msra.mxu0 %v496
    %1202 = vmatprep.subr.mxu0 %v493
    %1203 = vmatpush1.msra.mxu0 %v492
    %1204 = vmatprep.subr.mxu0 %v489
    %1205 = vmatpush1.msra.mxu0 %v488
    %1206 = vmatprep.subr.mxu0 %v485
    %1207 = vmatpush1.msra.mxu0 %v484
    %1208 = vmatprep.subr.mxu0 %v481
    %1209 = vmatpush1.msra.mxu0 %v480
    %1210 = vmatprep.subr.mxu0 %v477
    %1211 = vmatpush1.msra.mxu0 %v476
    %1212 = vmatprep.subr.mxu0 %v473
    %1213 = vmatpush1.msra.mxu0 %v472
    %1214 = vmatprep.subr.mxu0 %v469
    %1215 = vmatpush1.msra.mxu0 %v468
    %1216 = vmatprep.subr.mxu0 %v465
    %1217 = vmatpush1.msra.mxu0 %v464
    %1218 = vmatprep.subr.mxu0 %v461
    %1219 = vmatpush1.msra.mxu0 %v460
    %1220 = vmatprep.subr.mxu0 %v457
    %1221 = vmatpush1.msra.mxu0 %v456
    %1222 = vmatprep.subr.mxu0 %v581
    %1223 = vmatpush2.msra.mxu0 %v580
    %1224 = vmatprep.subr.mxu0 %v577
    %1225 = vmatpush2.msra.mxu0 %v576
    %1226 = vmatprep.subr.mxu0 %v573
    %1227 = vmatpush2.msra.mxu0 %v572
    %1228 = vmatprep.subr.mxu0 %v569
    %1229 = vmatpush2.msra.mxu0 %v568
    %1230 = vmatprep.subr.mxu0 %v565
    %1231 = vmatpush2.msra.mxu0 %v564
    %1232 = vmatprep.subr.mxu0 %v561
    %1233 = vmatpush2.msra.mxu0 %v560
    %1234 = vmatprep.subr.mxu0 %v557
    %1235 = vmatpush2.msra.mxu0 %v556
    %1236 = vmatprep.subr.mxu0 %v553
    %1237 = vmatpush2.msra.mxu0 %v552
    %1238 = vmatprep.subr.mxu0 %v549
    %1239 = vmatpush2.msra.mxu0 %v548
    %1240 = vmatprep.subr.mxu0 %v545
    %1241 = vmatpush2.msra.mxu0 %v544
    %1242 = vmatprep.subr.mxu0 %v541
    %1243 = vmatpush2.msra.mxu0 %v540
    %1244 = vmatprep.subr.mxu0 %v537
    %1245 = vmatpush2.msra.mxu0 %v536
    %1246 = vmatprep.subr.mxu0 %v533
    %1247 = vmatpush2.msra.mxu0 %v532
    %1248 = vmatprep.subr.mxu0 %v529
    %1249 = vmatpush2.msra.mxu0 %v528
    %1250 = vmatprep.subr.mxu0 %v525
    %1251 = vmatpush2.msra.mxu0 %v524
    %1252 = vmatprep.subr.mxu0 %v521
    %1253 = vmatpush2.msra.mxu0 %v520
    %1254 = vmatprep.mubr.f32.mxu0 %v943
    %1255 = vmatmul.mubr.f32.gmra.mxu0 %v1118
    %v1256 = vpop.f32.mrf.mxu0
    %v1257 = vadd.f32 %v769, %v1256
    %v1258 = vpop.f32.mrf.mxu0
    %v1259 = vadd.f32 %v773, %v1258
    %1260 = vdwg.mxu0
    %v1261 = vxor.u32 %v1186, 2147483648
    %v1262 = vmul.f32 %v1261, 1.442695
    %v1263 = vpow.pop %v1262
    %v1264 = vadd.f32 %v1263, 1.0
    %v1265 = vrcp.pop %v1264
    %v1266 = vmul.f32 1.0, %v1265
    %v1267 = vxor.u32 %v1188, 2147483648
    %v1268 = vmul.f32 %v1267, 1.442695
    %v1269 = vpow.pop %v1268
    %v1270 = vadd.f32 %v1269, 1.0
    %v1271 = vrcp.pop %v1270
    %v1272 = vmul.f32 1.0, %v1271
    %v1273 = vtanh.pop %v1257
    %v1274 = vxor.u32 %v1259, 2147483648
    %v1275 = vmul.f32 %v1274, 1.442695
    %v1276 = vpow.pop %v1275
    %v1277 = vadd.f32 %v1276, 1.0
    %v1278 = vrcp.pop %v1277
    %v1279 = vmul.f32 1.0, %v1278
    %v1280 = vmul.f32 %v1272, %v941
    %v1281 = vmul.f32 %v1266, %v1273
    %v1282 = vadd.f32 %v1280, %v1281
    %v1283 = vtanh.pop %v1282
    %v1284 = vmul.f32 %v1279, %v1283
    %s1285 = scalar_lea.vmem [#allocation2], 64
    %v1286 = vld [vmem:[%s1285] sm:$0xff]
    %v1287 = vld [vmem:[%s1285 + $0x8] sm:$0xff]
    %v1288 = vld [vmem:[%s1285 + $0x10] sm:$0xff]
    %v1289 = vld [vmem:[%s1285 + $0x18] sm:$0xff]
    %1290 = vmatprep.subr.mxu0 %v451
    %1291 = vmatpush1.msra.mxu0 %v450
    %1292 = vmatprep.subr.mxu0 %v447
    %1293 = vmatpush1.msra.mxu0 %v446
    %1294 = vmatprep.subr.mxu0 %v443
    %1295 = vmatpush1.msra.mxu0 %v442
    %1296 = vmatprep.subr.mxu0 %v439
    %1297 = vmatpush1.msra.mxu0 %v438
    %1298 = vmatprep.subr.mxu0 %v435
    %1299 = vmatpush1.msra.mxu0 %v434
    %1300 = vmatprep.subr.mxu0 %v431
    %1301 = vmatpush1.msra.mxu0 %v430
    %1302 = vmatprep.subr.mxu0 %v427
    %1303 = vmatpush1.msra.mxu0 %v426
    %1304 = vmatprep.subr.mxu0 %v423
    %1305 = vmatpush1.msra.mxu0 %v422
    %1306 = vmatprep.subr.mxu0 %v419
    %1307 = vmatpush1.msra.mxu0 %v418
    %1308 = vmatprep.subr.mxu0 %v415
    %1309 = vmatpush1.msra.mxu0 %v414
    %1310 = vmatprep.subr.mxu0 %v411
    %1311 = vmatpush1.msra.mxu0 %v410
    %1312 = vmatprep.subr.mxu0 %v407
    %1313 = vmatpush1.msra.mxu0 %v406
    %1314 = vmatprep.subr.mxu0 %v403
    %1315 = vmatpush1.msra.mxu0 %v402
    %1316 = vmatprep.subr.mxu0 %v399
    %1317 = vmatpush1.msra.mxu0 %v398
    %1318 = vmatprep.subr.mxu0 %v395
    %1319 = vmatpush1.msra.mxu0 %v394
    %1320 = vmatprep.subr.mxu0 %v391
    %1321 = vmatpush1.msra.mxu0 %v390
    %1322 = vmatprep.subr.mxu0 0.0
    %1323 = vmatpush2.msra.mxu0 0.0
    %1324 = vmatprep.subr.mxu0 0.0
    %1325 = vmatpush2.msra.mxu0 0.0
    %1326 = vmatprep.subr.mxu0 0.0
    %1327 = vmatpush2.msra.mxu0 0.0
    %1328 = vmatprep.subr.mxu0 0.0
    %1329 = vmatpush2.msra.mxu0 0.0
    %1330 = vmatprep.subr.mxu0 0.0
    %1331 = vmatpush2.msra.mxu0 0.0
    %1332 = vmatprep.subr.mxu0 0.0
    %1333 = vmatpush2.msra.mxu0 0.0
    %1334 = vmatprep.subr.mxu0 0.0
    %1335 = vmatpush2.msra.mxu0 0.0
    %1336 = vmatprep.subr.mxu0 0.0
    %1337 = vmatpush2.msra.mxu0 0.0
    %1338 = vmatprep.subr.mxu0 0.0
    %1339 = vmatpush2.msra.mxu0 0.0
    %1340 = vmatprep.subr.mxu0 0.0
    %1341 = vmatpush2.msra.mxu0 0.0
    %1342 = vmatprep.subr.mxu0 0.0
    %1343 = vmatpush2.msra.mxu0 0.0
    %1344 = vmatprep.subr.mxu0 0.0
    %1345 = vmatpush2.msra.mxu0 0.0
    %1346 = vmatprep.subr.mxu0 0.0
    %1347 = vmatpush2.msra.mxu0 0.0
    %1348 = vmatprep.subr.mxu0 0.0
    %1349 = vmatpush2.msra.mxu0 0.0
    %1350 = vmatprep.subr.mxu0 0.0
    %1351 = vmatpush2.msra.mxu0 0.0
    %1352 = vmatprep.subr.mxu0 0.0
    %1353 = vmatpush2.msra.mxu0 0.0
    %1354 = vmatprep.mubr.f32.mxu0 0.0
    %1355 = vmatmul.mubr.f32.gmra.mxu0 %v1118
    %v1356 = vpop.f32.mrf.mxu0
    %v1357 = vadd.f32 0.0, %v1356
    %v1358 = vpop.f32.mrf.mxu0
    %v1359 = vadd.f32 0.0, %v1358
    %1360 = vdwg.mxu0
    %1361 = vmatprep.subr.mxu0 %v453
    %1362 = vmatpush1.msra.mxu0 %v452
    %1363 = vmatprep.subr.mxu0 %v449
    %1364 = vmatpush1.msra.mxu0 %v448
    %1365 = vmatprep.subr.mxu0 %v445
    %1366 = vmatpush1.msra.mxu0 %v444
    %1367 = vmatprep.subr.mxu0 %v441
    %1368 = vmatpush1.msra.mxu0 %v440
    %1369 = vmatprep.subr.mxu0 %v437
    %1370 = vmatpush1.msra.mxu0 %v436
    %1371 = vmatprep.subr.mxu0 %v433
    %1372 = vmatpush1.msra.mxu0 %v432
    %1373 = vmatprep.subr.mxu0 %v429
    %1374 = vmatpush1.msra.mxu0 %v428
    %1375 = vmatprep.subr.mxu0 %v425
    %1376 = vmatpush1.msra.mxu0 %v424
    %1377 = vmatprep.subr.mxu0 %v421
    %1378 = vmatpush1.msra.mxu0 %v420
    %1379 = vmatprep.subr.mxu0 %v417
    %1380 = vmatpush1.msra.mxu0 %v416
    %1381 = vmatprep.subr.mxu0 %v413
    %1382 = vmatpush1.msra.mxu0 %v412
    %1383 = vmatprep.subr.mxu0 %v409
    %1384 = vmatpush1.msra.mxu0 %v408
    %1385 = vmatprep.subr.mxu0 %v405
    %1386 = vmatpush1.msra.mxu0 %v404
    %1387 = vmatprep.subr.mxu0 %v401
    %1388 = vmatpush1.msra.mxu0 %v400
    %1389 = vmatprep.subr.mxu0 %v397
    %1390 = vmatpush1.msra.mxu0 %v396
    %1391 = vmatprep.subr.mxu0 %v393
    %1392 = vmatpush1.msra.mxu0 %v392
    %1393 = vmatprep.subr.mxu0 0.0
    %1394 = vmatpush2.msra.mxu0 0.0
    %1395 = vmatprep.subr.mxu0 0.0
    %1396 = vmatpush2.msra.mxu0 0.0
    %1397 = vmatprep.subr.mxu0 0.0
    %1398 = vmatpush2.msra.mxu0 0.0
    %1399 = vmatprep.subr.mxu0 0.0
    %1400 = vmatpush2.msra.mxu0 0.0
    %1401 = vmatprep.subr.mxu0 0.0
    %1402 = vmatpush2.msra.mxu0 0.0
    %1403 = vmatprep.subr.mxu0 0.0
    %1404 = vmatpush2.msra.mxu0 0.0
    %1405 = vmatprep.subr.mxu0 0.0
    %1406 = vmatpush2.msra.mxu0 0.0
    %1407 = vmatprep.subr.mxu0 0.0
    %1408 = vmatpush2.msra.mxu0 0.0
    %1409 = vmatprep.subr.mxu0 0.0
    %1410 = vmatpush2.msra.mxu0 0.0
    %1411 = vmatprep.subr.mxu0 0.0
    %1412 = vmatpush2.msra.mxu0 0.0
    %1413 = vmatprep.subr.mxu0 0.0
    %1414 = vmatpush2.msra.mxu0 0.0
    %1415 = vmatprep.subr.mxu0 0.0
    %1416 = vmatpush2.msra.mxu0 0.0
    %1417 = vmatprep.subr.mxu0 0.0
    %1418 = vmatpush2.msra.mxu0 0.0
    %1419 = vmatprep.subr.mxu0 0.0
    %1420 = vmatpush2.msra.mxu0 0.0
    %1421 = vmatprep.subr.mxu0 0.0
    %1422 = vmatpush2.msra.mxu0 0.0
    %1423 = vmatprep.subr.mxu0 0.0
    %1424 = vmatpush2.msra.mxu0 0.0
    %1425 = vmatprep.mubr.f32.mxu0 0.0
    %1426 = vmatmul.mubr.f32.gmra.mxu0 %v1118
    %v1427 = vpop.f32.mrf.mxu0
    %v1428 = vadd.f32 0.0, %v1427
    %v1429 = vpop.f32.mrf.mxu0
    %v1430 = vadd.f32 0.0, %v1429
    %1431 = vdwg.mxu0
    %v1432 = vadd.f32 %v1286, %v1357
    %v1433 = vadd.f32 %v1287, %v1359
    %v1434 = vadd.f32 %v1288, %v1428
    %v1435 = vadd.f32 %v1289, %v1430
    %v1436 = vxor.u32 %v1432, 2147483648
    %v1437 = vmul.f32 %v1436, 1.442695
    %v1438 = vpow.pop %v1437
    %v1439 = vadd.f32 %v1438, 1.0
    %v1440 = vrcp.pop %v1439
    %v1441 = vmul.f32 1.0, %v1440
    %v1442 = vxor.u32 %v1433, 2147483648
    %v1443 = vmul.f32 %v1442, 1.442695
    %v1444 = vpow.pop %v1443
    %v1445 = vadd.f32 %v1444, 1.0
    %v1446 = vrcp.pop %v1445
    %v1447 = vmul.f32 1.0, %v1446
    %v1448 = vtanh.pop %v1434
    %v1449 = vxor.u32 %v1435, 2147483648
    %v1450 = vmul.f32 %v1449, 1.442695
    %v1451 = vpow.pop %v1450
    %v1452 = vadd.f32 %v1451, 1.0
    %v1453 = vrcp.pop %v1452
    %v1454 = vmul.f32 1.0, %v1453
    %v1455 = vmul.f32 %v1447, %v1116
    %v1456 = vmul.f32 %v1441, %v1448
    %v1457 = vadd.f32 %v1455, %v1456
    %v1458 = vtanh.pop %v1457
    %v1459 = vmul.f32 %v1454, %v1458
    %1460 = vmatprep.subr.mxu0 %v515
    %1461 = vmatpush1.msra.mxu0 %v514
    %1462 = vmatprep.subr.mxu0 %v511
    %1463 = vmatpush1.msra.mxu0 %v510
    %1464 = vmatprep.subr.mxu0 %v507
    %1465 = vmatpush1.msra.mxu0 %v506
    %1466 = vmatprep.subr.mxu0 %v503
    %1467 = vmatpush1.msra.mxu0 %v502
    %1468 = vmatprep.subr.mxu0 %v499
    %1469 = vmatpush1.msra.mxu0 %v498
    %1470 = vmatprep.subr.mxu0 %v495
    %1471 = vmatpush1.msra.mxu0 %v494
    %1472 = vmatprep.subr.mxu0 %v491
    %1473 = vmatpush1.msra.mxu0 %v490
    %1474 = vmatprep.subr.mxu0 %v487
    %1475 = vmatpush1.msra.mxu0 %v486
    %1476 = vmatprep.subr.mxu0 %v483
    %1477 = vmatpush1.msra.mxu0 %v482
    %1478 = vmatprep.subr.mxu0 %v479
    %1479 = vmatpush1.msra.mxu0 %v478
    %1480 = vmatprep.subr.mxu0 %v475
    %1481 = vmatpush1.msra.mxu0 %v474
    %1482 = vmatprep.subr.mxu0 %v471
    %1483 = vmatpush1.msra.mxu0 %v470
    %1484 = vmatprep.subr.mxu0 %v467
    %1485 = vmatpush1.msra.mxu0 %v466
    %1486 = vmatprep.subr.mxu0 %v463
    %1487 = vmatpush1.msra.mxu0 %v462
    %1488 = vmatprep.subr.mxu0 %v459
    %1489 = vmatpush1.msra.mxu0 %v458
    %1490 = vmatprep.subr.mxu0 %v455
    %1491 = vmatpush1.msra.mxu0 %v454
    %1492 = vmatprep.subr.mxu0 %v579
    %1493 = vmatpush2.msra.mxu0 %v578
    %1494 = vmatprep.subr.mxu0 %v575
    %1495 = vmatpush2.msra.mxu0 %v574
    %1496 = vmatprep.subr.mxu0 %v571
    %1497 = vmatpush2.msra.mxu0 %v570
    %1498 = vmatprep.subr.mxu0 %v567
    %1499 = vmatpush2.msra.mxu0 %v566
    %1500 = vmatprep.subr.mxu0 %v563
    %1501 = vmatpush2.msra.mxu0 %v562
    %1502 = vmatprep.subr.mxu0 %v559
    %1503 = vmatpush2.msra.mxu0 %v558
    %1504 = vmatprep.subr.mxu0 %v555
    %1505 = vmatpush2.msra.mxu0 %v554
    %1506 = vmatprep.subr.mxu0 %v551
    %1507 = vmatpush2.msra.mxu0 %v550
    %1508 = vmatprep.subr.mxu0 %v547
    %1509 = vmatpush2.msra.mxu0 %v546
    %1510 = vmatprep.subr.mxu0 %v543
    %1511 = vmatpush2.msra.mxu0 %v542
    %1512 = vmatprep.subr.mxu0 %v539
    %1513 = vmatpush2.msra.mxu0 %v538
    %1514 = vmatprep.subr.mxu0 %v535
    %1515 = vmatpush2.msra.mxu0 %v534
    %1516 = vmatprep.subr.mxu0 %v531
    %1517 = vmatpush2.msra.mxu0 %v530
    %1518 = vmatprep.subr.mxu0 %v527
    %1519 = vmatpush2.msra.mxu0 %v526
    %1520 = vmatprep.subr.mxu0 %v523
    %1521 = vmatpush2.msra.mxu0 %v522
    %1522 = vmatprep.subr.mxu0 %v519
    %1523 = vmatpush2.msra.mxu0 %v518
    %1524 = vmatprep.mubr.f32.mxu0 %v1284
    %1525 = vmatmul.mubr.f32.gmra.mxu0 %v1459
    %v1526 = vpop.f32.mrf.mxu0
    %v1527 = vadd.f32 %v761, %v1526
    %v1528 = vpop.f32.mrf.mxu0
    %v1529 = vadd.f32 %v765, %v1528
    %1530 = vdwg.mxu0
    %1531 = vmatprep.subr.mxu0 %v517
    %1532 = vmatpush1.msra.mxu0 %v516
    %1533 = vmatprep.subr.mxu0 %v513
    %1534 = vmatpush1.msra.mxu0 %v512
    %1535 = vmatprep.subr.mxu0 %v509
    %1536 = vmatpush1.msra.mxu0 %v508
    %1537 = vmatprep.subr.mxu0 %v505
    %1538 = vmatpush1.msra.mxu0 %v504
    %1539 = vmatprep.subr.mxu0 %v501
    %1540 = vmatpush1.msra.mxu0 %v500
    %1541 = vmatprep.subr.mxu0 %v497
    %1542 = vmatpush1.msra.mxu0 %v496
    %1543 = vmatprep.subr.mxu0 %v493
    %1544 = vmatpush1.msra.mxu0 %v492
    %1545 = vmatprep.subr.mxu0 %v489
    %1546 = vmatpush1.msra.mxu0 %v488
    %1547 = vmatprep.subr.mxu0 %v485
    %1548 = vmatpush1.msra.mxu0 %v484
    %1549 = vmatprep.subr.mxu0 %v481
    %1550 = vmatpush1.msra.mxu0 %v480
    %1551 = vmatprep.subr.mxu0 %v477
    %1552 = vmatpush1.msra.mxu0 %v476
    %1553 = vmatprep.subr.mxu0 %v473
    %1554 = vmatpush1.msra.mxu0 %v472
    %1555 = vmatprep.subr.mxu0 %v469
    %1556 = vmatpush1.msra.mxu0 %v468
    %1557 = vmatprep.subr.mxu0 %v465
    %1558 = vmatpush1.msra.mxu0 %v464
    %1559 = vmatprep.subr.mxu0 %v461
    %1560 = vmatpush1.msra.mxu0 %v460
    %1561 = vmatprep.subr.mxu0 %v457
    %1562 = vmatpush1.msra.mxu0 %v456
    %1563 = vmatprep.subr.mxu0 %v581
    %1564 = vmatpush2.msra.mxu0 %v580
    %1565 = vmatprep.subr.mxu0 %v577
    %1566 = vmatpush2.msra.mxu0 %v576
    %1567 = vmatprep.subr.mxu0 %v573
    %1568 = vmatpush2.msra.mxu0 %v572
    %1569 = vmatprep.subr.mxu0 %v569
    %1570 = vmatpush2.msra.mxu0 %v568
    %1571 = vmatprep.subr.mxu0 %v565
    %1572 = vmatpush2.msra.mxu0 %v564
    %1573 = vmatprep.subr.mxu0 %v561
    %1574 = vmatpush2.msra.mxu0 %v560
    %1575 = vmatprep.subr.mxu0 %v557
    %1576 = vmatpush2.msra.mxu0 %v556
    %1577 = vmatprep.subr.mxu0 %v553
    %1578 = vmatpush2.msra.mxu0 %v552
    %1579 = vmatprep.subr.mxu0 %v549
    %1580 = vmatpush2.msra.mxu0 %v548
    %1581 = vmatprep.subr.mxu0 %v545
    %1582 = vmatpush2.msra.mxu0 %v544
    %1583 = vmatprep.subr.mxu0 %v541
    %1584 = vmatpush2.msra.mxu0 %v540
    %1585 = vmatprep.subr.mxu0 %v537
    %1586 = vmatpush2.msra.mxu0 %v536
    %1587 = vmatprep.subr.mxu0 %v533
    %1588 = vmatpush2.msra.mxu0 %v532
    %1589 = vmatprep.subr.mxu0 %v529
    %1590 = vmatpush2.msra.mxu0 %v528
    %1591 = vmatprep.subr.mxu0 %v525
    %1592 = vmatpush2.msra.mxu0 %v524
    %1593 = vmatprep.subr.mxu0 %v521
    %1594 = vmatpush2.msra.mxu0 %v520
    %1595 = vmatprep.mubr.f32.mxu0 %v1284
    %1596 = vmatmul.mubr.f32.gmra.mxu0 %v1459
    %v1597 = vpop.f32.mrf.mxu0
    %v1598 = vadd.f32 %v769, %v1597
    %v1599 = vpop.f32.mrf.mxu0
    %v1600 = vadd.f32 %v773, %v1599
    %1601 = vdwg.mxu0
    %v1602 = vxor.u32 %v1527, 2147483648
    %v1603 = vmul.f32 %v1602, 1.442695
    %v1604 = vpow.pop %v1603
    %v1605 = vadd.f32 %v1604, 1.0
    %v1606 = vrcp.pop %v1605
    %v1607 = vmul.f32 1.0, %v1606
    %v1608 = vxor.u32 %v1529, 2147483648
    %v1609 = vmul.f32 %v1608, 1.442695
    %v1610 = vpow.pop %v1609
    %v1611 = vadd.f32 %v1610, 1.0
    %v1612 = vrcp.pop %v1611
    %v1613 = vmul.f32 1.0, %v1612
    %v1614 = vtanh.pop %v1598
    %v1615 = vxor.u32 %v1600, 2147483648
    %v1616 = vmul.f32 %v1615, 1.442695
    %v1617 = vpow.pop %v1616
    %v1618 = vadd.f32 %v1617, 1.0
    %v1619 = vrcp.pop %v1618
    %v1620 = vmul.f32 1.0, %v1619
    %v1621 = vmul.f32 %v1613, %v1282
    %v1622 = vmul.f32 %v1607, %v1614
    %v1623 = vadd.f32 %v1621, %v1622
    %v1624 = vtanh.pop %v1623
    %v1625 = vmul.f32 %v1620, %v1624
    %s1626 = scalar_lea.vmem [#allocation2], 96
    %v1627 = vld [vmem:[%s1626] sm:$0xff]
    %v1628 = vld [vmem:[%s1626 + $0x8] sm:$0xff]
    %v1629 = vld [vmem:[%s1626 + $0x10] sm:$0xff]
    %v1630 = vld [vmem:[%s1626 + $0x18] sm:$0xff]
    %1631 = vmatprep.subr.mxu0 %v451
    %1632 = vmatpush1.msra.mxu0 %v450
    %1633 = vmatprep.subr.mxu0 %v447
    %1634 = vmatpush1.msra.mxu0 %v446
    %1635 = vmatprep.subr.mxu0 %v443
    %1636 = vmatpush1.msra.mxu0 %v442
    %1637 = vmatprep.subr.mxu0 %v439
    %1638 = vmatpush1.msra.mxu0 %v438
    %1639 = vmatprep.subr.mxu0 %v435
    %1640 = vmatpush1.msra.mxu0 %v434
    %1641 = vmatprep.subr.mxu0 %v431
    %1642 = vmatpush1.msra.mxu0 %v430
    %1643 = vmatprep.subr.mxu0 %v427
    %1644 = vmatpush1.msra.mxu0 %v426
    %1645 = vmatprep.subr.mxu0 %v423
    %1646 = vmatpush1.msra.mxu0 %v422
    %1647 = vmatprep.subr.mxu0 %v419
    %1648 = vmatpush1.msra.mxu0 %v418
    %1649 = vmatprep.subr.mxu0 %v415
    %1650 = vmatpush1.msra.mxu0 %v414
    %1651 = vmatprep.subr.mxu0 %v411
    %1652 = vmatpush1.msra.mxu0 %v410
    %1653 = vmatprep.subr.mxu0 %v407
    %1654 = vmatpush1.msra.mxu0 %v406
    %1655 = vmatprep.subr.mxu0 %v403
    %1656 = vmatpush1.msra.mxu0 %v402
    %1657 = vmatprep.subr.mxu0 %v399
    %1658 = vmatpush1.msra.mxu0 %v398
    %1659 = vmatprep.subr.mxu0 %v395
    %1660 = vmatpush1.msra.mxu0 %v394
    %1661 = vmatprep.subr.mxu0 %v391
    %1662 = vmatpush1.msra.mxu0 %v390
    %1663 = vmatprep.subr.mxu0 0.0
    %1664 = vmatpush2.msra.mxu0 0.0
    %1665 = vmatprep.subr.mxu0 0.0
    %1666 = vmatpush2.msra.mxu0 0.0
    %1667 = vmatprep.subr.mxu0 0.0
    %1668 = vmatpush2.msra.mxu0 0.0
    %1669 = vmatprep.subr.mxu0 0.0
    %1670 = vmatpush2.msra.mxu0 0.0
    %1671 = vmatprep.subr.mxu0 0.0
    %1672 = vmatpush2.msra.mxu0 0.0
    %1673 = vmatprep.subr.mxu0 0.0
    %1674 = vmatpush2.msra.mxu0 0.0
    %1675 = vmatprep.subr.mxu0 0.0
    %1676 = vmatpush2.msra.mxu0 0.0
    %1677 = vmatprep.subr.mxu0 0.0
    %1678 = vmatpush2.msra.mxu0 0.0
    %1679 = vmatprep.subr.mxu0 0.0
    %1680 = vmatpush2.msra.mxu0 0.0
    %1681 = vmatprep.subr.mxu0 0.0
    %1682 = vmatpush2.msra.mxu0 0.0
    %1683 = vmatprep.subr.mxu0 0.0
    %1684 = vmatpush2.msra.mxu0 0.0
    %1685 = vmatprep.subr.mxu0 0.0
    %1686 = vmatpush2.msra.mxu0 0.0
    %1687 = vmatprep.subr.mxu0 0.0
    %1688 = vmatpush2.msra.mxu0 0.0
    %1689 = vmatprep.subr.mxu0 0.0
    %1690 = vmatpush2.msra.mxu0 0.0
    %1691 = vmatprep.subr.mxu0 0.0
    %1692 = vmatpush2.msra.mxu0 0.0
    %1693 = vmatprep.subr.mxu0 0.0
    %1694 = vmatpush2.msra.mxu0 0.0
    %1695 = vmatprep.mubr.f32.mxu0 0.0
    %1696 = vmatmul.mubr.f32.gmra.mxu0 %v1459
    %v1697 = vpop.f32.mrf.mxu0
    %v1698 = vadd.f32 0.0, %v1697
    %v1699 = vpop.f32.mrf.mxu0
    %v1700 = vadd.f32 0.0, %v1699
    %1701 = vdwg.mxu0
    %1702 = vmatprep.subr.mxu0 %v453
    %1703 = vmatpush1.msra.mxu0 %v452
    %1704 = vmatprep.subr.mxu0 %v449
    %1705 = vmatpush1.msra.mxu0 %v448
    %1706 = vmatprep.subr.mxu0 %v445
    %1707 = vmatpush1.msra.mxu0 %v444
    %1708 = vmatprep.subr.mxu0 %v441
    %1709 = vmatpush1.msra.mxu0 %v440
    %1710 = vmatprep.subr.mxu0 %v437
    %1711 = vmatpush1.msra.mxu0 %v436
    %1712 = vmatprep.subr.mxu0 %v433
    %1713 = vmatpush1.msra.mxu0 %v432
    %1714 = vmatprep.subr.mxu0 %v429
    %1715 = vmatpush1.msra.mxu0 %v428
    %1716 = vmatprep.subr.mxu0 %v425
    %1717 = vmatpush1.msra.mxu0 %v424
    %1718 = vmatprep.subr.mxu0 %v421
    %1719 = vmatpush1.msra.mxu0 %v420
    %1720 = vmatprep.subr.mxu0 %v417
    %1721 = vmatpush1.msra.mxu0 %v416
    %1722 = vmatprep.subr.mxu0 %v413
    %1723 = vmatpush1.msra.mxu0 %v412
    %1724 = vmatprep.subr.mxu0 %v409
    %1725 = vmatpush1.msra.mxu0 %v408
    %1726 = vmatprep.subr.mxu0 %v405
    %1727 = vmatpush1.msra.mxu0 %v404
    %1728 = vmatprep.subr.mxu0 %v401
    %1729 = vmatpush1.msra.mxu0 %v400
    %1730 = vmatprep.subr.mxu0 %v397
    %1731 = vmatpush1.msra.mxu0 %v396
    %1732 = vmatprep.subr.mxu0 %v393
    %1733 = vmatpush1.msra.mxu0 %v392
    %1734 = vmatprep.subr.mxu0 0.0
    %1735 = vmatpush2.msra.mxu0 0.0
    %1736 = vmatprep.subr.mxu0 0.0
    %1737 = vmatpush2.msra.mxu0 0.0
    %1738 = vmatprep.subr.mxu0 0.0
    %1739 = vmatpush2.msra.mxu0 0.0
    %1740 = vmatprep.subr.mxu0 0.0
    %1741 = vmatpush2.msra.mxu0 0.0
    %1742 = vmatprep.subr.mxu0 0.0
    %1743 = vmatpush2.msra.mxu0 0.0
    %1744 = vmatprep.subr.mxu0 0.0
    %1745 = vmatpush2.msra.mxu0 0.0
    %1746 = vmatprep.subr.mxu0 0.0
    %1747 = vmatpush2.msra.mxu0 0.0
    %1748 = vmatprep.subr.mxu0 0.0
    %1749 = vmatpush2.msra.mxu0 0.0
    %1750 = vmatprep.subr.mxu0 0.0
    %1751 = vmatpush2.msra.mxu0 0.0
    %1752 = vmatprep.subr.mxu0 0.0
    %1753 = vmatpush2.msra.mxu0 0.0
    %1754 = vmatprep.subr.mxu0 0.0
    %1755 = vmatpush2.msra.mxu0 0.0
    %1756 = vmatprep.subr.mxu0 0.0
    %1757 = vmatpush2.msra.mxu0 0.0
    %1758 = vmatprep.subr.mxu0 0.0
    %1759 = vmatpush2.msra.mxu0 0.0
    %1760 = vmatprep.subr.mxu0 0.0
    %1761 = vmatpush2.msra.mxu0 0.0
    %1762 = vmatprep.subr.mxu0 0.0
    %1763 = vmatpush2.msra.mxu0 0.0
    %1764 = vmatprep.subr.mxu0 0.0
    %1765 = vmatpush2.msra.mxu0 0.0
    %1766 = vmatprep.mubr.f32.mxu0 0.0
    %1767 = vmatmul.mubr.f32.gmra.mxu0 %v1459
    %v1768 = vpop.f32.mrf.mxu0
    %v1769 = vadd.f32 0.0, %v1768
    %v1770 = vpop.f32.mrf.mxu0
    %v1771 = vadd.f32 0.0, %v1770
    %1772 = vdwg.mxu0
    %v1773 = vadd.f32 %v1627, %v1698
    %v1774 = vadd.f32 %v1628, %v1700
    %v1775 = vadd.f32 %v1629, %v1769
    %v1776 = vadd.f32 %v1630, %v1771
    %v1777 = vxor.u32 %v1773, 2147483648
    %v1778 = vmul.f32 %v1777, 1.442695
    %v1779 = vpow.pop %v1778
    %v1780 = vadd.f32 %v1779, 1.0
    %v1781 = vrcp.pop %v1780
    %v1782 = vmul.f32 1.0, %v1781
    %v1783 = vxor.u32 %v1774, 2147483648
    %v1784 = vmul.f32 %v1783, 1.442695
    %v1785 = vpow.pop %v1784
    %v1786 = vadd.f32 %v1785, 1.0
    %v1787 = vrcp.pop %v1786
    %v1788 = vmul.f32 1.0, %v1787
    %v1789 = vtanh.pop %v1775
    %v1790 = vxor.u32 %v1776, 2147483648
    %v1791 = vmul.f32 %v1790, 1.442695
    %v1792 = vpow.pop %v1791
    %v1793 = vadd.f32 %v1792, 1.0
    %v1794 = vrcp.pop %v1793
    %v1795 = vmul.f32 1.0, %v1794
    %v1796 = vmul.f32 %v1788, %v1457
    %v1797 = vmul.f32 %v1782, %v1789
    %v1798 = vadd.f32 %v1796, %v1797
    %v1799 = vtanh.pop %v1798
    %v1800 = vmul.f32 %v1795, %v1799
    %1801 = vmatprep.subr.mxu0 %v515
    %1802 = vmatpush1.msra.mxu0 %v514
    %1803 = vmatprep.subr.mxu0 %v511
    %1804 = vmatpush1.msra.mxu0 %v510
    %1805 = vmatprep.subr.mxu0 %v507
    %1806 = vmatpush1.msra.mxu0 %v506
    %1807 = vmatprep.subr.mxu0 %v503
    %1808 = vmatpush1.msra.mxu0 %v502
    %1809 = vmatprep.subr.mxu0 %v499
    %1810 = vmatpush1.msra.mxu0 %v498
    %1811 = vmatprep.subr.mxu0 %v495
    %1812 = vmatpush1.msra.mxu0 %v494
    %1813 = vmatprep.subr.mxu0 %v491
    %1814 = vmatpush1.msra.mxu0 %v490
    %1815 = vmatprep.subr.mxu0 %v487
    %1816 = vmatpush1.msra.mxu0 %v486
    %1817 = vmatprep.subr.mxu0 %v483
    %1818 = vmatpush1.msra.mxu0 %v482
    %1819 = vmatprep.subr.mxu0 %v479
    %1820 = vmatpush1.msra.mxu0 %v478
    %1821 = vmatprep.subr.mxu0 %v475
    %1822 = vmatpush1.msra.mxu0 %v474
    %1823 = vmatprep.subr.mxu0 %v471
    %1824 = vmatpush1.msra.mxu0 %v470
    %1825 = vmatprep.subr.mxu0 %v467
    %1826 = vmatpush1.msra.mxu0 %v466
    %1827 = vmatprep.subr.mxu0 %v463
    %1828 = vmatpush1.msra.mxu0 %v462
    %1829 = vmatprep.subr.mxu0 %v459
    %1830 = vmatpush1.msra.mxu0 %v458
    %1831 = vmatprep.subr.mxu0 %v455
    %1832 = vmatpush1.msra.mxu0 %v454
    %1833 = vmatprep.subr.mxu0 %v579
    %1834 = vmatpush2.msra.mxu0 %v578
    %1835 = vmatprep.subr.mxu0 %v575
    %1836 = vmatpush2.msra.mxu0 %v574
    %1837 = vmatprep.subr.mxu0 %v571
    %1838 = vmatpush2.msra.mxu0 %v570
    %1839 = vmatprep.subr.mxu0 %v567
    %1840 = vmatpush2.msra.mxu0 %v566
    %1841 = vmatprep.subr.mxu0 %v563
    %1842 = vmatpush2.msra.mxu0 %v562
    %1843 = vmatprep.subr.mxu0 %v559
    %1844 = vmatpush2.msra.mxu0 %v558
    %1845 = vmatprep.subr.mxu0 %v555
    %1846 = vmatpush2.msra.mxu0 %v554
    %1847 = vmatprep.subr.mxu0 %v551
    %1848 = vmatpush2.msra.mxu0 %v550
    %1849 = vmatprep.subr.mxu0 %v547
    %1850 = vmatpush2.msra.mxu0 %v546
    %1851 = vmatprep.subr.mxu0 %v543
    %1852 = vmatpush2.msra.mxu0 %v542
    %1853 = vmatprep.subr.mxu0 %v539
    %1854 = vmatpush2.msra.mxu0 %v538
    %1855 = vmatprep.subr.mxu0 %v535
    %1856 = vmatpush2.msra.mxu0 %v534
    %1857 = vmatprep.subr.mxu0 %v531
    %1858 = vmatpush2.msra.mxu0 %v530
    %1859 = vmatprep.subr.mxu0 %v527
    %1860 = vmatpush2.msra.mxu0 %v526
    %1861 = vmatprep.subr.mxu0 %v523
    %1862 = vmatpush2.msra.mxu0 %v522
    %1863 = vmatprep.subr.mxu0 %v519
    %1864 = vmatpush2.msra.mxu0 %v518
    %1865 = vmatprep.mubr.f32.mxu0 %v1625
    %1866 = vmatmul.mubr.f32.gmra.mxu0 %v1800
    %v1867 = vpop.f32.mrf.mxu0
    %v1868 = vadd.f32 %v761, %v1867
    %v1869 = vpop.f32.mrf.mxu0
    %v1870 = vadd.f32 %v765, %v1869
    %1871 = vdwg.mxu0
    %1872 = vmatprep.subr.mxu0 %v517
    %1873 = vmatpush1.msra.mxu0 %v516
    %1874 = vmatprep.subr.mxu0 %v513
    %1875 = vmatpush1.msra.mxu0 %v512
    %1876 = vmatprep.subr.mxu0 %v509
    %1877 = vmatpush1.msra.mxu0 %v508
    %1878 = vmatprep.subr.mxu0 %v505
    %1879 = vmatpush1.msra.mxu0 %v504
    %1880 = vmatprep.subr.mxu0 %v501
    %1881 = vmatpush1.msra.mxu0 %v500
    %1882 = vmatprep.subr.mxu0 %v497
    %1883 = vmatpush1.msra.mxu0 %v496
    %1884 = vmatprep.subr.mxu0 %v493
    %1885 = vmatpush1.msra.mxu0 %v492
    %1886 = vmatprep.subr.mxu0 %v489
    %1887 = vmatpush1.msra.mxu0 %v488
    %1888 = vmatprep.subr.mxu0 %v485
    %1889 = vmatpush1.msra.mxu0 %v484
    %1890 = vmatprep.subr.mxu0 %v481
    %1891 = vmatpush1.msra.mxu0 %v480
    %1892 = vmatprep.subr.mxu0 %v477
    %1893 = vmatpush1.msra.mxu0 %v476
    %1894 = vmatprep.subr.mxu0 %v473
    %1895 = vmatpush1.msra.mxu0 %v472
    %1896 = vmatprep.subr.mxu0 %v469
    %1897 = vmatpush1.msra.mxu0 %v468
    %1898 = vmatprep.subr.mxu0 %v465
    %1899 = vmatpush1.msra.mxu0 %v464
    %1900 = vmatprep.subr.mxu0 %v461
    %1901 = vmatpush1.msra.mxu0 %v460
    %1902 = vmatprep.subr.mxu0 %v457
    %1903 = vmatpush1.msra.mxu0 %v456
    %1904 = vmatprep.subr.mxu0 %v581
    %1905 = vmatpush2.msra.mxu0 %v580
    %1906 = vmatprep.subr.mxu0 %v577
    %1907 = vmatpush2.msra.mxu0 %v576
    %1908 = vmatprep.subr.mxu0 %v573
    %1909 = vmatpush2.msra.mxu0 %v572
    %1910 = vmatprep.subr.mxu0 %v569
    %1911 = vmatpush2.msra.mxu0 %v568
    %1912 = vmatprep.subr.mxu0 %v565
    %1913 = vmatpush2.msra.mxu0 %v564
    %1914 = vmatprep.subr.mxu0 %v561
    %1915 = vmatpush2.msra.mxu0 %v560
    %1916 = vmatprep.subr.mxu0 %v557
    %1917 = vmatpush2.msra.mxu0 %v556
    %1918 = vmatprep.subr.mxu0 %v553
    %1919 = vmatpush2.msra.mxu0 %v552
    %1920 = vmatprep.subr.mxu0 %v549
    %1921 = vmatpush2.msra.mxu0 %v548
    %1922 = vmatprep.subr.mxu0 %v545
    %1923 = vmatpush2.msra.mxu0 %v544
    %1924 = vmatprep.subr.mxu0 %v541
    %1925 = vmatpush2.msra.mxu0 %v540
    %1926 = vmatprep.subr.mxu0 %v537
    %1927 = vmatpush2.msra.mxu0 %v536
    %1928 = vmatprep.subr.mxu0 %v533
    %1929 = vmatpush2.msra.mxu0 %v532
    %1930 = vmatprep.subr.mxu0 %v529
    %1931 = vmatpush2.msra.mxu0 %v528
    %1932 = vmatprep.subr.mxu0 %v525
    %1933 = vmatpush2.msra.mxu0 %v524
    %1934 = vmatprep.subr.mxu0 %v521
    %1935 = vmatpush2.msra.mxu0 %v520
    %1936 = vmatprep.mubr.f32.mxu0 %v1625
    %1937 = vmatmul.mubr.f32.gmra.mxu0 %v1800
    %v1938 = vpop.f32.mrf.mxu0
    %v1939 = vadd.f32 %v769, %v1938
    %v1940 = vpop.f32.mrf.mxu0
    %v1941 = vadd.f32 %v773, %v1940
    %1942 = vdwg.mxu0
    %v1943 = vxor.u32 %v1868, 2147483648
    %v1944 = vmul.f32 %v1943, 1.442695
    %v1945 = vpow.pop %v1944
    %v1946 = vadd.f32 %v1945, 1.0
    %v1947 = vrcp.pop %v1946
    %v1948 = vmul.f32 1.0, %v1947
    %v1949 = vxor.u32 %v1870, 2147483648
    %v1950 = vmul.f32 %v1949, 1.442695
    %v1951 = vpow.pop %v1950
    %v1952 = vadd.f32 %v1951, 1.0
    %v1953 = vrcp.pop %v1952
    %v1954 = vmul.f32 1.0, %v1953
    %v1955 = vtanh.pop %v1939
    %v1956 = vxor.u32 %v1941, 2147483648
    %v1957 = vmul.f32 %v1956, 1.442695
    %v1958 = vpow.pop %v1957
    %v1959 = vadd.f32 %v1958, 1.0
    %v1960 = vrcp.pop %v1959
    %v1961 = vmul.f32 1.0, %v1960
    %v1962 = vmul.f32 %v1954, %v1623
    %v1963 = vmul.f32 %v1948, %v1955
    %v1964 = vadd.f32 %v1962, %v1963
    %v1965 = vtanh.pop %v1964
    %v1966 = vmul.f32 %v1961, %v1965
    %s1967 = scalar_lea.vmem [#allocation2], 128
    %v1968 = vld [vmem:[%s1967] sm:$0xff]
    %v1969 = vld [vmem:[%s1967 + $0x8] sm:$0xff]
    %v1970 = vld [vmem:[%s1967 + $0x10] sm:$0xff]
    %v1971 = vld [vmem:[%s1967 + $0x18] sm:$0xff]
    %1972 = vmatprep.subr.mxu0 %v451
    %1973 = vmatpush1.msra.mxu0 %v450
    %1974 = vmatprep.subr.mxu0 %v447
    %1975 = vmatpush1.msra.mxu0 %v446
    %1976 = vmatprep.subr.mxu0 %v443
    %1977 = vmatpush1.msra.mxu0 %v442
    %1978 = vmatprep.subr.mxu0 %v439
    %1979 = vmatpush1.msra.mxu0 %v438
    %1980 = vmatprep.subr.mxu0 %v435
    %1981 = vmatpush1.msra.mxu0 %v434
    %1982 = vmatprep.subr.mxu0 %v431
    %1983 = vmatpush1.msra.mxu0 %v430
    %1984 = vmatprep.subr.mxu0 %v427
    %1985 = vmatpush1.msra.mxu0 %v426
    %1986 = vmatprep.subr.mxu0 %v423
    %1987 = vmatpush1.msra.mxu0 %v422
    %1988 = vmatprep.subr.mxu0 %v419
    %1989 = vmatpush1.msra.mxu0 %v418
    %1990 = vmatprep.subr.mxu0 %v415
    %1991 = vmatpush1.msra.mxu0 %v414
    %1992 = vmatprep.subr.mxu0 %v411
    %1993 = vmatpush1.msra.mxu0 %v410
    %1994 = vmatprep.subr.mxu0 %v407
    %1995 = vmatpush1.msra.mxu0 %v406
    %1996 = vmatprep.subr.mxu0 %v403
    %1997 = vmatpush1.msra.mxu0 %v402
    %1998 = vmatprep.subr.mxu0 %v399
    %1999 = vmatpush1.msra.mxu0 %v398
    %2000 = vmatprep.subr.mxu0 %v395
    %2001 = vmatpush1.msra.mxu0 %v394
    %2002 = vmatprep.subr.mxu0 %v391
    %2003 = vmatpush1.msra.mxu0 %v390
    %2004 = vmatprep.subr.mxu0 0.0
    %2005 = vmatpush2.msra.mxu0 0.0
    %2006 = vmatprep.subr.mxu0 0.0
    %2007 = vmatpush2.msra.mxu0 0.0
    %2008 = vmatprep.subr.mxu0 0.0
    %2009 = vmatpush2.msra.mxu0 0.0
    %2010 = vmatprep.subr.mxu0 0.0
    %2011 = vmatpush2.msra.mxu0 0.0
    %2012 = vmatprep.subr.mxu0 0.0
    %2013 = vmatpush2.msra.mxu0 0.0
    %2014 = vmatprep.subr.mxu0 0.0
    %2015 = vmatpush2.msra.mxu0 0.0
    %2016 = vmatprep.subr.mxu0 0.0
    %2017 = vmatpush2.msra.mxu0 0.0
    %2018 = vmatprep.subr.mxu0 0.0
    %2019 = vmatpush2.msra.mxu0 0.0
    %2020 = vmatprep.subr.mxu0 0.0
    %2021 = vmatpush2.msra.mxu0 0.0
    %2022 = vmatprep.subr.mxu0 0.0
    %2023 = vmatpush2.msra.mxu0 0.0
    %2024 = vmatprep.subr.mxu0 0.0
    %2025 = vmatpush2.msra.mxu0 0.0
    %2026 = vmatprep.subr.mxu0 0.0
    %2027 = vmatpush2.msra.mxu0 0.0
    %2028 = vmatprep.subr.mxu0 0.0
    %2029 = vmatpush2.msra.mxu0 0.0
    %2030 = vmatprep.subr.mxu0 0.0
    %2031 = vmatpush2.msra.mxu0 0.0
    %2032 = vmatprep.subr.mxu0 0.0
    %2033 = vmatpush2.msra.mxu0 0.0
    %2034 = vmatprep.subr.mxu0 0.0
    %2035 = vmatpush2.msra.mxu0 0.0
    %2036 = vmatprep.mubr.f32.mxu0 0.0
    %2037 = vmatmul.mubr.f32.gmra.mxu0 %v1800
    %v2038 = vpop.f32.mrf.mxu0
    %v2039 = vadd.f32 0.0, %v2038
    %v2040 = vpop.f32.mrf.mxu0
    %v2041 = vadd.f32 0.0, %v2040
    %2042 = vdwg.mxu0
    %2043 = vmatprep.subr.mxu0 %v453
    %2044 = vmatpush1.msra.mxu0 %v452
    %2045 = vmatprep.subr.mxu0 %v449
    %2046 = vmatpush1.msra.mxu0 %v448
    %2047 = vmatprep.subr.mxu0 %v445
    %2048 = vmatpush1.msra.mxu0 %v444
    %2049 = vmatprep.subr.mxu0 %v441
    %2050 = vmatpush1.msra.mxu0 %v440
    %2051 = vmatprep.subr.mxu0 %v437
    %2052 = vmatpush1.msra.mxu0 %v436
    %2053 = vmatprep.subr.mxu0 %v433
    %2054 = vmatpush1.msra.mxu0 %v432
    %2055 = vmatprep.subr.mxu0 %v429
    %2056 = vmatpush1.msra.mxu0 %v428
    %2057 = vmatprep.subr.mxu0 %v425
    %2058 = vmatpush1.msra.mxu0 %v424
    %2059 = vmatprep.subr.mxu0 %v421
    %2060 = vmatpush1.msra.mxu0 %v420
    %2061 = vmatprep.subr.mxu0 %v417
    %2062 = vmatpush1.msra.mxu0 %v416
    %2063 = vmatprep.subr.mxu0 %v413
    %2064 = vmatpush1.msra.mxu0 %v412
    %2065 = vmatprep.subr.mxu0 %v409
    %2066 = vmatpush1.msra.mxu0 %v408
    %2067 = vmatprep.subr.mxu0 %v405
    %2068 = vmatpush1.msra.mxu0 %v404
    %2069 = vmatprep.subr.mxu0 %v401
    %2070 = vmatpush1.msra.mxu0 %v400
    %2071 = vmatprep.subr.mxu0 %v397
    %2072 = vmatpush1.msra.mxu0 %v396
    %2073 = vmatprep.subr.mxu0 %v393
    %2074 = vmatpush1.msra.mxu0 %v392
    %2075 = vmatprep.subr.mxu0 0.0
    %2076 = vmatpush2.msra.mxu0 0.0
    %2077 = vmatprep.subr.mxu0 0.0
    %2078 = vmatpush2.msra.mxu0 0.0
    %2079 = vmatprep.subr.mxu0 0.0
    %2080 = vmatpush2.msra.mxu0 0.0
    %2081 = vmatprep.subr.mxu0 0.0
    %2082 = vmatpush2.msra.mxu0 0.0
    %2083 = vmatprep.subr.mxu0 0.0
    %2084 = vmatpush2.msra.mxu0 0.0
    %2085 = vmatprep.subr.mxu0 0.0
    %2086 = vmatpush2.msra.mxu0 0.0
    %2087 = vmatprep.subr.mxu0 0.0
    %2088 = vmatpush2.msra.mxu0 0.0
    %2089 = vmatprep.subr.mxu0 0.0
    %2090 = vmatpush2.msra.mxu0 0.0
    %2091 = vmatprep.subr.mxu0 0.0
    %2092 = vmatpush2.msra.mxu0 0.0
    %2093 = vmatprep.subr.mxu0 0.0
    %2094 = vmatpush2.msra.mxu0 0.0
    %2095 = vmatprep.subr.mxu0 0.0
    %2096 = vmatpush2.msra.mxu0 0.0
    %2097 = vmatprep.subr.mxu0 0.0
    %2098 = vmatpush2.msra.mxu0 0.0
    %2099 = vmatprep.subr.mxu0 0.0
    %2100 = vmatpush2.msra.mxu0 0.0
    %2101 = vmatprep.subr.mxu0 0.0
    %2102 = vmatpush2.msra.mxu0 0.0
    %2103 = vmatprep.subr.mxu0 0.0
    %2104 = vmatpush2.msra.mxu0 0.0
    %2105 = vmatprep.subr.mxu0 0.0
    %2106 = vmatpush2.msra.mxu0 0.0
    %2107 = vmatprep.mubr.f32.mxu0 0.0
    %2108 = vmatmul.mubr.f32.gmra.mxu0 %v1800
    %v2109 = vpop.f32.mrf.mxu0
    %v2110 = vadd.f32 0.0, %v2109
    %v2111 = vpop.f32.mrf.mxu0
    %v2112 = vadd.f32 0.0, %v2111
    %2113 = vdwg.mxu0
    %v2114 = vadd.f32 %v1968, %v2039
    %v2115 = vadd.f32 %v1969, %v2041
    %v2116 = vadd.f32 %v1970, %v2110
    %v2117 = vadd.f32 %v1971, %v2112
    %v2118 = vxor.u32 %v2114, 2147483648
    %v2119 = vmul.f32 %v2118, 1.442695
    %v2120 = vpow.pop %v2119
    %v2121 = vadd.f32 %v2120, 1.0
    %v2122 = vrcp.pop %v2121
    %v2123 = vmul.f32 1.0, %v2122
    %v2124 = vxor.u32 %v2115, 2147483648
    %v2125 = vmul.f32 %v2124, 1.442695
    %v2126 = vpow.pop %v2125
    %v2127 = vadd.f32 %v2126, 1.0
    %v2128 = vrcp.pop %v2127
    %v2129 = vmul.f32 1.0, %v2128
    %v2130 = vtanh.pop %v2116
    %v2131 = vxor.u32 %v2117, 2147483648
    %v2132 = vmul.f32 %v2131, 1.442695
    %v2133 = vpow.pop %v2132
    %v2134 = vadd.f32 %v2133, 1.0
    %v2135 = vrcp.pop %v2134
    %v2136 = vmul.f32 1.0, %v2135
    %v2137 = vmul.f32 %v2129, %v1798
    %v2138 = vmul.f32 %v2123, %v2130
    %v2139 = vadd.f32 %v2137, %v2138
    %v2140 = vtanh.pop %v2139
    %v2141 = vmul.f32 %v2136, %v2140
    %2142 = vmatprep.subr.mxu0 %v515
    %2143 = vmatpush1.msra.mxu0 %v514
    %2144 = vmatprep.subr.mxu0 %v511
    %2145 = vmatpush1.msra.mxu0 %v510
    %2146 = vmatprep.subr.mxu0 %v507
    %2147 = vmatpush1.msra.mxu0 %v506
    %2148 = vmatprep.subr.mxu0 %v503
    %2149 = vmatpush1.msra.mxu0 %v502
    %2150 = vmatprep.subr.mxu0 %v499
    %2151 = vmatpush1.msra.mxu0 %v498
    %2152 = vmatprep.subr.mxu0 %v495
    %2153 = vmatpush1.msra.mxu0 %v494
    %2154 = vmatprep.subr.mxu0 %v491
    %2155 = vmatpush1.msra.mxu0 %v490
    %2156 = vmatprep.subr.mxu0 %v487
    %2157 = vmatpush1.msra.mxu0 %v486
    %2158 = vmatprep.subr.mxu0 %v483
    %2159 = vmatpush1.msra.mxu0 %v482
    %2160 = vmatprep.subr.mxu0 %v479
    %2161 = vmatpush1.msra.mxu0 %v478
    %2162 = vmatprep.subr.mxu0 %v475
    %2163 = vmatpush1.msra.mxu0 %v474
    %2164 = vmatprep.subr.mxu0 %v471
    %2165 = vmatpush1.msra.mxu0 %v470
    %2166 = vmatprep.subr.mxu0 %v467
    %2167 = vmatpush1.msra.mxu0 %v466
    %2168 = vmatprep.subr.mxu0 %v463
    %2169 = vmatpush1.msra.mxu0 %v462
    %2170 = vmatprep.subr.mxu0 %v459
    %2171 = vmatpush1.msra.mxu0 %v458
    %2172 = vmatprep.subr.mxu0 %v455
    %2173 = vmatpush1.msra.mxu0 %v454
    %2174 = vmatprep.subr.mxu0 %v579
    %2175 = vmatpush2.msra.mxu0 %v578
    %2176 = vmatprep.subr.mxu0 %v575
    %2177 = vmatpush2.msra.mxu0 %v574
    %2178 = vmatprep.subr.mxu0 %v571
    %2179 = vmatpush2.msra.mxu0 %v570
    %2180 = vmatprep.subr.mxu0 %v567
    %2181 = vmatpush2.msra.mxu0 %v566
    %2182 = vmatprep.subr.mxu0 %v563
    %2183 = vmatpush2.msra.mxu0 %v562
    %2184 = vmatprep.subr.mxu0 %v559
    %2185 = vmatpush2.msra.mxu0 %v558
    %2186 = vmatprep.subr.mxu0 %v555
    %2187 = vmatpush2.msra.mxu0 %v554
    %2188 = vmatprep.subr.mxu0 %v551
    %2189 = vmatpush2.msra.mxu0 %v550
    %2190 = vmatprep.subr.mxu0 %v547
    %2191 = vmatpush2.msra.mxu0 %v546
    %2192 = vmatprep.subr.mxu0 %v543
    %2193 = vmatpush2.msra.mxu0 %v542
    %2194 = vmatprep.subr.mxu0 %v539
    %2195 = vmatpush2.msra.mxu0 %v538
    %2196 = vmatprep.subr.mxu0 %v535
    %2197 = vmatpush2.msra.mxu0 %v534
    %2198 = vmatprep.subr.mxu0 %v531
    %2199 = vmatpush2.msra.mxu0 %v530
    %2200 = vmatprep.subr.mxu0 %v527
    %2201 = vmatpush2.msra.mxu0 %v526
    %2202 = vmatprep.subr.mxu0 %v523
    %2203 = vmatpush2.msra.mxu0 %v522
    %2204 = vmatprep.subr.mxu0 %v519
    %2205 = vmatpush2.msra.mxu0 %v518
    %2206 = vmatprep.mubr.f32.mxu0 %v1966
    %2207 = vmatmul.mubr.f32.gmra.mxu0 %v2141
    %v2208 = vpop.f32.mrf.mxu0
    %v2209 = vadd.f32 %v761, %v2208
    %v2210 = vpop.f32.mrf.mxu0
    %v2211 = vadd.f32 %v765, %v2210
    %2212 = vdwg.mxu0
    %2213 = vmatprep.subr.mxu0 %v517
    %2214 = vmatpush1.msra.mxu0 %v516
    %2215 = vmatprep.subr.mxu0 %v513
    %2216 = vmatpush1.msra.mxu0 %v512
    %2217 = vmatprep.subr.mxu0 %v509
    %2218 = vmatpush1.msra.mxu0 %v508
    %2219 = vmatprep.subr.mxu0 %v505
    %2220 = vmatpush1.msra.mxu0 %v504
    %2221 = vmatprep.subr.mxu0 %v501
    %2222 = vmatpush1.msra.mxu0 %v500
    %2223 = vmatprep.subr.mxu0 %v497
    %2224 = vmatpush1.msra.mxu0 %v496
    %2225 = vmatprep.subr.mxu0 %v493
    %2226 = vmatpush1.msra.mxu0 %v492
    %2227 = vmatprep.subr.mxu0 %v489
    %2228 = vmatpush1.msra.mxu0 %v488
    %2229 = vmatprep.subr.mxu0 %v485
    %2230 = vmatpush1.msra.mxu0 %v484
    %2231 = vmatprep.subr.mxu0 %v481
    %2232 = vmatpush1.msra.mxu0 %v480
    %2233 = vmatprep.subr.mxu0 %v477
    %2234 = vmatpush1.msra.mxu0 %v476
    %2235 = vmatprep.subr.mxu0 %v473
    %2236 = vmatpush1.msra.mxu0 %v472
    %2237 = vmatprep.subr.mxu0 %v469
    %2238 = vmatpush1.msra.mxu0 %v468
    %2239 = vmatprep.subr.mxu0 %v465
    %2240 = vmatpush1.msra.mxu0 %v464
    %2241 = vmatprep.subr.mxu0 %v461
    %2242 = vmatpush1.msra.mxu0 %v460
    %2243 = vmatprep.subr.mxu0 %v457
    %2244 = vmatpush1.msra.mxu0 %v456
    %2245 = vmatprep.subr.mxu0 %v581
    %2246 = vmatpush2.msra.mxu0 %v580
    %2247 = vmatprep.subr.mxu0 %v577
    %2248 = vmatpush2.msra.mxu0 %v576
    %2249 = vmatprep.subr.mxu0 %v573
    %2250 = vmatpush2.msra.mxu0 %v572
    %2251 = vmatprep.subr.mxu0 %v569
    %2252 = vmatpush2.msra.mxu0 %v568
    %2253 = vmatprep.subr.mxu0 %v565
    %2254 = vmatpush2.msra.mxu0 %v564
    %2255 = vmatprep.subr.mxu0 %v561
    %2256 = vmatpush2.msra.mxu0 %v560
    %2257 = vmatprep.subr.mxu0 %v557
    %2258 = vmatpush2.msra.mxu0 %v556
    %2259 = vmatprep.subr.mxu0 %v553
    %2260 = vmatpush2.msra.mxu0 %v552
    %2261 = vmatprep.subr.mxu0 %v549
    %2262 = vmatpush2.msra.mxu0 %v548
    %2263 = vmatprep.subr.mxu0 %v545
    %2264 = vmatpush2.msra.mxu0 %v544
    %2265 = vmatprep.subr.mxu0 %v541
    %2266 = vmatpush2.msra.mxu0 %v540
    %2267 = vmatprep.subr.mxu0 %v537
    %2268 = vmatpush2.msra.mxu0 %v536
    %2269 = vmatprep.subr.mxu0 %v533
    %2270 = vmatpush2.msra.mxu0 %v532
    %2271 = vmatprep.subr.mxu0 %v529
    %2272 = vmatpush2.msra.mxu0 %v528
    %2273 = vmatprep.subr.mxu0 %v525
    %2274 = vmatpush2.msra.mxu0 %v524
    %2275 = vmatprep.subr.mxu0 %v521
    %2276 = vmatpush2.msra.mxu0 %v520
    %2277 = vmatprep.mubr.f32.mxu0 %v1966
    %2278 = vmatmul.mubr.f32.gmra.mxu0 %v2141
    %v2279 = vpop.f32.mrf.mxu0
    %v2280 = vadd.f32 %v769, %v2279
    %v2281 = vpop.f32.mrf.mxu0
    %v2282 = vadd.f32 %v773, %v2281
    %2283 = vdwg.mxu0
    %v2284 = vxor.u32 %v2209, 2147483648
    %v2285 = vmul.f32 %v2284, 1.442695
    %v2286 = vpow.pop %v2285
    %v2287 = vadd.f32 %v2286, 1.0
    %v2288 = vrcp.pop %v2287
    %v2289 = vmul.f32 1.0, %v2288
    %v2290 = vxor.u32 %v2211, 2147483648
    %v2291 = vmul.f32 %v2290, 1.442695
    %v2292 = vpow.pop %v2291
    %v2293 = vadd.f32 %v2292, 1.0
    %v2294 = vrcp.pop %v2293
    %v2295 = vmul.f32 1.0, %v2294
    %v2296 = vtanh.pop %v2280
    %v2297 = vxor.u32 %v2282, 2147483648
    %v2298 = vmul.f32 %v2297, 1.442695
    %v2299 = vpow.pop %v2298
    %v2300 = vadd.f32 %v2299, 1.0
    %v2301 = vrcp.pop %v2300
    %v2302 = vmul.f32 1.0, %v2301
    %v2303 = vmul.f32 %v2295, %v1964
    %v2304 = vmul.f32 %v2289, %v2296
    %v2305 = vadd.f32 %v2303, %v2304
    %v2306 = vtanh.pop %v2305
    %v2307 = vmul.f32 %v2302, %v2306
    %s2308 = scalar_lea.vmem [#allocation2], 160
    %v2309 = vld [vmem:[%s2308] sm:$0xff]
    %v2310 = vld [vmem:[%s2308 + $0x8] sm:$0xff]
    %v2311 = vld [vmem:[%s2308 + $0x10] sm:$0xff]
    %v2312 = vld [vmem:[%s2308 + $0x18] sm:$0xff]
    %2313 = vmatprep.subr.mxu0 %v451
    %2314 = vmatpush1.msra.mxu0 %v450
    %2315 = vmatprep.subr.mxu0 %v447
    %2316 = vmatpush1.msra.mxu0 %v446
    %2317 = vmatprep.subr.mxu0 %v443
    %2318 = vmatpush1.msra.mxu0 %v442
    %2319 = vmatprep.subr.mxu0 %v439
    %2320 = vmatpush1.msra.mxu0 %v438
    %2321 = vmatprep.subr.mxu0 %v435
    %2322 = vmatpush1.msra.mxu0 %v434
    %2323 = vmatprep.subr.mxu0 %v431
    %2324 = vmatpush1.msra.mxu0 %v430
    %2325 = vmatprep.subr.mxu0 %v427
    %2326 = vmatpush1.msra.mxu0 %v426
    %2327 = vmatprep.subr.mxu0 %v423
    %2328 = vmatpush1.msra.mxu0 %v422
    %2329 = vmatprep.subr.mxu0 %v419
    %2330 = vmatpush1.msra.mxu0 %v418
    %2331 = vmatprep.subr.mxu0 %v415
    %2332 = vmatpush1.msra.mxu0 %v414
    %2333 = vmatprep.subr.mxu0 %v411
    %2334 = vmatpush1.msra.mxu0 %v410
    %2335 = vmatprep.subr.mxu0 %v407
    %2336 = vmatpush1.msra.mxu0 %v406
    %2337 = vmatprep.subr.mxu0 %v403
    %2338 = vmatpush1.msra.mxu0 %v402
    %2339 = vmatprep.subr.mxu0 %v399
    %2340 = vmatpush1.msra.mxu0 %v398
    %2341 = vmatprep.subr.mxu0 %v395
    %2342 = vmatpush1.msra.mxu0 %v394
    %2343 = vmatprep.subr.mxu0 %v391
    %2344 = vmatpush1.msra.mxu0 %v390
    %2345 = vmatprep.subr.mxu0 0.0
    %2346 = vmatpush2.msra.mxu0 0.0
    %2347 = vmatprep.subr.mxu0 0.0
    %2348 = vmatpush2.msra.mxu0 0.0
    %2349 = vmatprep.subr.mxu0 0.0
    %2350 = vmatpush2.msra.mxu0 0.0
    %2351 = vmatprep.subr.mxu0 0.0
    %2352 = vmatpush2.msra.mxu0 0.0
    %2353 = vmatprep.subr.mxu0 0.0
    %2354 = vmatpush2.msra.mxu0 0.0
    %2355 = vmatprep.subr.mxu0 0.0
    %2356 = vmatpush2.msra.mxu0 0.0
    %2357 = vmatprep.subr.mxu0 0.0
    %2358 = vmatpush2.msra.mxu0 0.0
    %2359 = vmatprep.subr.mxu0 0.0
    %2360 = vmatpush2.msra.mxu0 0.0
    %2361 = vmatprep.subr.mxu0 0.0
    %2362 = vmatpush2.msra.mxu0 0.0
    %2363 = vmatprep.subr.mxu0 0.0
    %2364 = vmatpush2.msra.mxu0 0.0
    %2365 = vmatprep.subr.mxu0 0.0
    %2366 = vmatpush2.msra.mxu0 0.0
    %2367 = vmatprep.subr.mxu0 0.0
    %2368 = vmatpush2.msra.mxu0 0.0
    %2369 = vmatprep.subr.mxu0 0.0
    %2370 = vmatpush2.msra.mxu0 0.0
    %2371 = vmatprep.subr.mxu0 0.0
    %2372 = vmatpush2.msra.mxu0 0.0
    %2373 = vmatprep.subr.mxu0 0.0
    %2374 = vmatpush2.msra.mxu0 0.0
    %2375 = vmatprep.subr.mxu0 0.0
    %2376 = vmatpush2.msra.mxu0 0.0
    %2377 = vmatprep.mubr.f32.mxu0 0.0
    %2378 = vmatmul.mubr.f32.gmra.mxu0 %v2141
    %v2379 = vpop.f32.mrf.mxu0
    %v2380 = vadd.f32 0.0, %v2379
    %v2381 = vpop.f32.mrf.mxu0
    %v2382 = vadd.f32 0.0, %v2381
    %2383 = vdwg.mxu0
    %2384 = vmatprep.subr.mxu0 %v453
    %2385 = vmatpush1.msra.mxu0 %v452
    %2386 = vmatprep.subr.mxu0 %v449
    %2387 = vmatpush1.msra.mxu0 %v448
    %2388 = vmatprep.subr.mxu0 %v445
    %2389 = vmatpush1.msra.mxu0 %v444
    %2390 = vmatprep.subr.mxu0 %v441
    %2391 = vmatpush1.msra.mxu0 %v440
    %2392 = vmatprep.subr.mxu0 %v437
    %2393 = vmatpush1.msra.mxu0 %v436
    %2394 = vmatprep.subr.mxu0 %v433
    %2395 = vmatpush1.msra.mxu0 %v432
    %2396 = vmatprep.subr.mxu0 %v429
    %2397 = vmatpush1.msra.mxu0 %v428
    %2398 = vmatprep.subr.mxu0 %v425
    %2399 = vmatpush1.msra.mxu0 %v424
    %2400 = vmatprep.subr.mxu0 %v421
    %2401 = vmatpush1.msra.mxu0 %v420
    %2402 = vmatprep.subr.mxu0 %v417
    %2403 = vmatpush1.msra.mxu0 %v416
    %2404 = vmatprep.subr.mxu0 %v413
    %2405 = vmatpush1.msra.mxu0 %v412
    %2406 = vmatprep.subr.mxu0 %v409
    %2407 = vmatpush1.msra.mxu0 %v408
    %2408 = vmatprep.subr.mxu0 %v405
    %2409 = vmatpush1.msra.mxu0 %v404
    %2410 = vmatprep.subr.mxu0 %v401
    %2411 = vmatpush1.msra.mxu0 %v400
    %2412 = vmatprep.subr.mxu0 %v397
    %2413 = vmatpush1.msra.mxu0 %v396
    %2414 = vmatprep.subr.mxu0 %v393
    %2415 = vmatpush1.msra.mxu0 %v392
    %2416 = vmatprep.subr.mxu0 0.0
    %2417 = vmatpush2.msra.mxu0 0.0
    %2418 = vmatprep.subr.mxu0 0.0
    %2419 = vmatpush2.msra.mxu0 0.0
    %2420 = vmatprep.subr.mxu0 0.0
    %2421 = vmatpush2.msra.mxu0 0.0
    %2422 = vmatprep.subr.mxu0 0.0
    %2423 = vmatpush2.msra.mxu0 0.0
    %2424 = vmatprep.subr.mxu0 0.0
    %2425 = vmatpush2.msra.mxu0 0.0
    %2426 = vmatprep.subr.mxu0 0.0
    %2427 = vmatpush2.msra.mxu0 0.0
    %2428 = vmatprep.subr.mxu0 0.0
    %2429 = vmatpush2.msra.mxu0 0.0
    %2430 = vmatprep.subr.mxu0 0.0
    %2431 = vmatpush2.msra.mxu0 0.0
    %2432 = vmatprep.subr.mxu0 0.0
    %2433 = vmatpush2.msra.mxu0 0.0
    %2434 = vmatprep.subr.mxu0 0.0
    %2435 = vmatpush2.msra.mxu0 0.0
    %2436 = vmatprep.subr.mxu0 0.0
    %2437 = vmatpush2.msra.mxu0 0.0
    %2438 = vmatprep.subr.mxu0 0.0
    %2439 = vmatpush2.msra.mxu0 0.0
    %2440 = vmatprep.subr.mxu0 0.0
    %2441 = vmatpush2.msra.mxu0 0.0
    %2442 = vmatprep.subr.mxu0 0.0
    %2443 = vmatpush2.msra.mxu0 0.0
    %2444 = vmatprep.subr.mxu0 0.0
    %2445 = vmatpush2.msra.mxu0 0.0
    %2446 = vmatprep.subr.mxu0 0.0
    %2447 = vmatpush2.msra.mxu0 0.0
    %2448 = vmatprep.mubr.f32.mxu0 0.0
    %2449 = vmatmul.mubr.f32.gmra.mxu0 %v2141
    %v2450 = vpop.f32.mrf.mxu0
    %v2451 = vadd.f32 0.0, %v2450
    %v2452 = vpop.f32.mrf.mxu0
    %v2453 = vadd.f32 0.0, %v2452
    %2454 = vdwg.mxu0
    %v2455 = vadd.f32 %v2309, %v2380
    %v2456 = vadd.f32 %v2310, %v2382
    %v2457 = vadd.f32 %v2311, %v2451
    %v2458 = vadd.f32 %v2312, %v2453
    %v2459 = vxor.u32 %v2455, 2147483648
    %v2460 = vmul.f32 %v2459, 1.442695
    %v2461 = vpow.pop %v2460
    %v2462 = vadd.f32 %v2461, 1.0
    %v2463 = vrcp.pop %v2462
    %v2464 = vmul.f32 1.0, %v2463
    %v2465 = vxor.u32 %v2456, 2147483648
    %v2466 = vmul.f32 %v2465, 1.442695
    %v2467 = vpow.pop %v2466
    %v2468 = vadd.f32 %v2467, 1.0
    %v2469 = vrcp.pop %v2468
    %v2470 = vmul.f32 1.0, %v2469
    %v2471 = vtanh.pop %v2457
    %v2472 = vxor.u32 %v2458, 2147483648
    %v2473 = vmul.f32 %v2472, 1.442695
    %v2474 = vpow.pop %v2473
    %v2475 = vadd.f32 %v2474, 1.0
    %v2476 = vrcp.pop %v2475
    %v2477 = vmul.f32 1.0, %v2476
    %v2478 = vmul.f32 %v2470, %v2139
    %v2479 = vmul.f32 %v2464, %v2471
    %v2480 = vadd.f32 %v2478, %v2479
    %v2481 = vtanh.pop %v2480
    %v2482 = vmul.f32 %v2477, %v2481
    %2483 = vmatprep.subr.mxu0 %v515
    %2484 = vmatpush1.msra.mxu0 %v514
    %2485 = vmatprep.subr.mxu0 %v511
    %2486 = vmatpush1.msra.mxu0 %v510
    %2487 = vmatprep.subr.mxu0 %v507
    %2488 = vmatpush1.msra.mxu0 %v506
    %2489 = vmatprep.subr.mxu0 %v503
    %2490 = vmatpush1.msra.mxu0 %v502
    %2491 = vmatprep.subr.mxu0 %v499
    %2492 = vmatpush1.msra.mxu0 %v498
    %2493 = vmatprep.subr.mxu0 %v495
    %2494 = vmatpush1.msra.mxu0 %v494
    %2495 = vmatprep.subr.mxu0 %v491
    %2496 = vmatpush1.msra.mxu0 %v490
    %2497 = vmatprep.subr.mxu0 %v487
    %2498 = vmatpush1.msra.mxu0 %v486
    %2499 = vmatprep.subr.mxu0 %v483
    %2500 = vmatpush1.msra.mxu0 %v482
    %2501 = vmatprep.subr.mxu0 %v479
    %2502 = vmatpush1.msra.mxu0 %v478
    %2503 = vmatprep.subr.mxu0 %v475
    %2504 = vmatpush1.msra.mxu0 %v474
    %2505 = vmatprep.subr.mxu0 %v471
    %2506 = vmatpush1.msra.mxu0 %v470
    %2507 = vmatprep.subr.mxu0 %v467
    %2508 = vmatpush1.msra.mxu0 %v466
    %2509 = vmatprep.subr.mxu0 %v463
    %2510 = vmatpush1.msra.mxu0 %v462
    %2511 = vmatprep.subr.mxu0 %v459
    %2512 = vmatpush1.msra.mxu0 %v458
    %2513 = vmatprep.subr.mxu0 %v455
    %2514 = vmatpush1.msra.mxu0 %v454
    %2515 = vmatprep.subr.mxu0 %v579
    %2516 = vmatpush2.msra.mxu0 %v578
    %2517 = vmatprep.subr.mxu0 %v575
    %2518 = vmatpush2.msra.mxu0 %v574
    %2519 = vmatprep.subr.mxu0 %v571
    %2520 = vmatpush2.msra.mxu0 %v570
    %2521 = vmatprep.subr.mxu0 %v567
    %2522 = vmatpush2.msra.mxu0 %v566
    %2523 = vmatprep.subr.mxu0 %v563
    %2524 = vmatpush2.msra.mxu0 %v562
    %2525 = vmatprep.subr.mxu0 %v559
    %2526 = vmatpush2.msra.mxu0 %v558
    %2527 = vmatprep.subr.mxu0 %v555
    %2528 = vmatpush2.msra.mxu0 %v554
    %2529 = vmatprep.subr.mxu0 %v551
    %2530 = vmatpush2.msra.mxu0 %v550
    %2531 = vmatprep.subr.mxu0 %v547
    %2532 = vmatpush2.msra.mxu0 %v546
    %2533 = vmatprep.subr.mxu0 %v543
    %2534 = vmatpush2.msra.mxu0 %v542
    %2535 = vmatprep.subr.mxu0 %v539
    %2536 = vmatpush2.msra.mxu0 %v538
    %2537 = vmatprep.subr.mxu0 %v535
    %2538 = vmatpush2.msra.mxu0 %v534
    %2539 = vmatprep.subr.mxu0 %v531
    %2540 = vmatpush2.msra.mxu0 %v530
    %2541 = vmatprep.subr.mxu0 %v527
    %2542 = vmatpush2.msra.mxu0 %v526
    %2543 = vmatprep.subr.mxu0 %v523
    %2544 = vmatpush2.msra.mxu0 %v522
    %2545 = vmatprep.subr.mxu0 %v519
    %2546 = vmatpush2.msra.mxu0 %v518
    %2547 = vmatprep.mubr.f32.mxu0 %v2307
    %2548 = vmatmul.mubr.f32.gmra.mxu0 %v2482
    %v2549 = vpop.f32.mrf.mxu0
    %v2550 = vadd.f32 %v761, %v2549
    %v2551 = vpop.f32.mrf.mxu0
    %v2552 = vadd.f32 %v765, %v2551
    %2553 = vdwg.mxu0
    %2554 = vmatprep.subr.mxu0 %v517
    %2555 = vmatpush1.msra.mxu0 %v516
    %2556 = vmatprep.subr.mxu0 %v513
    %2557 = vmatpush1.msra.mxu0 %v512
    %2558 = vmatprep.subr.mxu0 %v509
    %2559 = vmatpush1.msra.mxu0 %v508
    %2560 = vmatprep.subr.mxu0 %v505
    %2561 = vmatpush1.msra.mxu0 %v504
    %2562 = vmatprep.subr.mxu0 %v501
    %2563 = vmatpush1.msra.mxu0 %v500
    %2564 = vmatprep.subr.mxu0 %v497
    %2565 = vmatpush1.msra.mxu0 %v496
    %2566 = vmatprep.subr.mxu0 %v493
    %2567 = vmatpush1.msra.mxu0 %v492
    %2568 = vmatprep.subr.mxu0 %v489
    %2569 = vmatpush1.msra.mxu0 %v488
    %2570 = vmatprep.subr.mxu0 %v485
    %2571 = vmatpush1.msra.mxu0 %v484
    %2572 = vmatprep.subr.mxu0 %v481
    %2573 = vmatpush1.msra.mxu0 %v480
    %2574 = vmatprep.subr.mxu0 %v477
    %2575 = vmatpush1.msra.mxu0 %v476
    %2576 = vmatprep.subr.mxu0 %v473
    %2577 = vmatpush1.msra.mxu0 %v472
    %2578 = vmatprep.subr.mxu0 %v469
    %2579 = vmatpush1.msra.mxu0 %v468
    %2580 = vmatprep.subr.mxu0 %v465
    %2581 = vmatpush1.msra.mxu0 %v464
    %2582 = vmatprep.subr.mxu0 %v461
    %2583 = vmatpush1.msra.mxu0 %v460
    %2584 = vmatprep.subr.mxu0 %v457
    %2585 = vmatpush1.msra.mxu0 %v456
    %2586 = vmatprep.subr.mxu0 %v581
    %2587 = vmatpush2.msra.mxu0 %v580
    %2588 = vmatprep.subr.mxu0 %v577
    %2589 = vmatpush2.msra.mxu0 %v576
    %2590 = vmatprep.subr.mxu0 %v573
    %2591 = vmatpush2.msra.mxu0 %v572
    %2592 = vmatprep.subr.mxu0 %v569
    %2593 = vmatpush2.msra.mxu0 %v568
    %2594 = vmatprep.subr.mxu0 %v565
    %2595 = vmatpush2.msra.mxu0 %v564
    %2596 = vmatprep.subr.mxu0 %v561
    %2597 = vmatpush2.msra.mxu0 %v560
    %2598 = vmatprep.subr.mxu0 %v557
    %2599 = vmatpush2.msra.mxu0 %v556
    %2600 = vmatprep.subr.mxu0 %v553
    %2601 = vmatpush2.msra.mxu0 %v552
    %2602 = vmatprep.subr.mxu0 %v549
    %2603 = vmatpush2.msra.mxu0 %v548
    %2604 = vmatprep.subr.mxu0 %v545
    %2605 = vmatpush2.msra.mxu0 %v544
    %2606 = vmatprep.subr.mxu0 %v541
    %2607 = vmatpush2.msra.mxu0 %v540
    %2608 = vmatprep.subr.mxu0 %v537
    %2609 = vmatpush2.msra.mxu0 %v536
    %2610 = vmatprep.subr.mxu0 %v533
    %2611 = vmatpush2.msra.mxu0 %v532
    %2612 = vmatprep.subr.mxu0 %v529
    %2613 = vmatpush2.msra.mxu0 %v528
    %2614 = vmatprep.subr.mxu0 %v525
    %2615 = vmatpush2.msra.mxu0 %v524
    %2616 = vmatprep.subr.mxu0 %v521
    %2617 = vmatpush2.msra.mxu0 %v520
    %2618 = vmatprep.mubr.f32.mxu0 %v2307
    %2619 = vmatmul.mubr.f32.gmra.mxu0 %v2482
    %v2620 = vpop.f32.mrf.mxu0
    %v2621 = vadd.f32 %v769, %v2620
    %v2622 = vpop.f32.mrf.mxu0
    %v2623 = vadd.f32 %v773, %v2622
    %2624 = vdwg.mxu0
    %v2625 = vxor.u32 %v2550, 2147483648
    %v2626 = vmul.f32 %v2625, 1.442695
    %v2627 = vpow.pop %v2626
    %v2628 = vadd.f32 %v2627, 1.0
    %v2629 = vrcp.pop %v2628
    %v2630 = vmul.f32 1.0, %v2629
    %v2631 = vxor.u32 %v2552, 2147483648
    %v2632 = vmul.f32 %v2631, 1.442695
    %v2633 = vpow.pop %v2632
    %v2634 = vadd.f32 %v2633, 1.0
    %v2635 = vrcp.pop %v2634
    %v2636 = vmul.f32 1.0, %v2635
    %v2637 = vtanh.pop %v2621
    %v2638 = vxor.u32 %v2623, 2147483648
    %v2639 = vmul.f32 %v2638, 1.442695
    %v2640 = vpow.pop %v2639
    %v2641 = vadd.f32 %v2640, 1.0
    %v2642 = vrcp.pop %v2641
    %v2643 = vmul.f32 1.0, %v2642
    %v2644 = vmul.f32 %v2636, %v2305
    %v2645 = vmul.f32 %v2630, %v2637
    %v2646 = vadd.f32 %v2644, %v2645
    %v2647 = vtanh.pop %v2646
    %v2648 = vmul.f32 %v2643, %v2647
    %s2649 = scalar_lea.vmem [#allocation2], 192
    %v2650 = vld [vmem:[%s2649] sm:$0xff]
    %v2651 = vld [vmem:[%s2649 + $0x8] sm:$0xff]
    %v2652 = vld [vmem:[%s2649 + $0x10] sm:$0xff]
    %v2653 = vld [vmem:[%s2649 + $0x18] sm:$0xff]
    %2654 = vmatprep.subr.mxu0 %v451
    %2655 = vmatpush1.msra.mxu0 %v450
    %2656 = vmatprep.subr.mxu0 %v447
    %2657 = vmatpush1.msra.mxu0 %v446
    %2658 = vmatprep.subr.mxu0 %v443
    %2659 = vmatpush1.msra.mxu0 %v442
    %2660 = vmatprep.subr.mxu0 %v439
    %2661 = vmatpush1.msra.mxu0 %v438
    %2662 = vmatprep.subr.mxu0 %v435
    %2663 = vmatpush1.msra.mxu0 %v434
    %2664 = vmatprep.subr.mxu0 %v431
    %2665 = vmatpush1.msra.mxu0 %v430
    %2666 = vmatprep.subr.mxu0 %v427
    %2667 = vmatpush1.msra.mxu0 %v426
    %2668 = vmatprep.subr.mxu0 %v423
    %2669 = vmatpush1.msra.mxu0 %v422
    %2670 = vmatprep.subr.mxu0 %v419
    %2671 = vmatpush1.msra.mxu0 %v418
    %2672 = vmatprep.subr.mxu0 %v415
    %2673 = vmatpush1.msra.mxu0 %v414
    %2674 = vmatprep.subr.mxu0 %v411
    %2675 = vmatpush1.msra.mxu0 %v410
    %2676 = vmatprep.subr.mxu0 %v407
    %2677 = vmatpush1.msra.mxu0 %v406
    %2678 = vmatprep.subr.mxu0 %v403
    %2679 = vmatpush1.msra.mxu0 %v402
    %2680 = vmatprep.subr.mxu0 %v399
    %2681 = vmatpush1.msra.mxu0 %v398
    %2682 = vmatprep.subr.mxu0 %v395
    %2683 = vmatpush1.msra.mxu0 %v394
    %2684 = vmatprep.subr.mxu0 %v391
    %2685 = vmatpush1.msra.mxu0 %v390
    %2686 = vmatprep.subr.mxu0 0.0
    %2687 = vmatpush2.msra.mxu0 0.0
    %2688 = vmatprep.subr.mxu0 0.0
    %2689 = vmatpush2.msra.mxu0 0.0
    %2690 = vmatprep.subr.mxu0 0.0
    %2691 = vmatpush2.msra.mxu0 0.0
    %2692 = vmatprep.subr.mxu0 0.0
    %2693 = vmatpush2.msra.mxu0 0.0
    %2694 = vmatprep.subr.mxu0 0.0
    %2695 = vmatpush2.msra.mxu0 0.0
    %2696 = vmatprep.subr.mxu0 0.0
    %2697 = vmatpush2.msra.mxu0 0.0
    %2698 = vmatprep.subr.mxu0 0.0
    %2699 = vmatpush2.msra.mxu0 0.0
    %2700 = vmatprep.subr.mxu0 0.0
    %2701 = vmatpush2.msra.mxu0 0.0
    %2702 = vmatprep.subr.mxu0 0.0
    %2703 = vmatpush2.msra.mxu0 0.0
    %2704 = vmatprep.subr.mxu0 0.0
    %2705 = vmatpush2.msra.mxu0 0.0
    %2706 = vmatprep.subr.mxu0 0.0
    %2707 = vmatpush2.msra.mxu0 0.0
    %2708 = vmatprep.subr.mxu0 0.0
    %2709 = vmatpush2.msra.mxu0 0.0
    %2710 = vmatprep.subr.mxu0 0.0
    %2711 = vmatpush2.msra.mxu0 0.0
    %2712 = vmatprep.subr.mxu0 0.0
    %2713 = vmatpush2.msra.mxu0 0.0
    %2714 = vmatprep.subr.mxu0 0.0
    %2715 = vmatpush2.msra.mxu0 0.0
    %2716 = vmatprep.subr.mxu0 0.0
    %2717 = vmatpush2.msra.mxu0 0.0
    %2718 = vmatprep.mubr.f32.mxu0 0.0
    %2719 = vmatmul.mubr.f32.gmra.mxu0 %v2482
    %v2720 = vpop.f32.mrf.mxu0
    %v2721 = vadd.f32 0.0, %v2720
    %v2722 = vpop.f32.mrf.mxu0
    %v2723 = vadd.f32 0.0, %v2722
    %2724 = vdwg.mxu0
    %2725 = vmatprep.subr.mxu0 %v453
    %2726 = vmatpush1.msra.mxu0 %v452
    %2727 = vmatprep.subr.mxu0 %v449
    %2728 = vmatpush1.msra.mxu0 %v448
    %2729 = vmatprep.subr.mxu0 %v445
    %2730 = vmatpush1.msra.mxu0 %v444
    %2731 = vmatprep.subr.mxu0 %v441
    %2732 = vmatpush1.msra.mxu0 %v440
    %2733 = vmatprep.subr.mxu0 %v437
    %2734 = vmatpush1.msra.mxu0 %v436
    %2735 = vmatprep.subr.mxu0 %v433
    %2736 = vmatpush1.msra.mxu0 %v432
    %2737 = vmatprep.subr.mxu0 %v429
    %2738 = vmatpush1.msra.mxu0 %v428
    %2739 = vmatprep.subr.mxu0 %v425
    %2740 = vmatpush1.msra.mxu0 %v424
    %2741 = vmatprep.subr.mxu0 %v421
    %2742 = vmatpush1.msra.mxu0 %v420
    %2743 = vmatprep.subr.mxu0 %v417
    %2744 = vmatpush1.msra.mxu0 %v416
    %2745 = vmatprep.subr.mxu0 %v413
    %2746 = vmatpush1.msra.mxu0 %v412
    %2747 = vmatprep.subr.mxu0 %v409
    %2748 = vmatpush1.msra.mxu0 %v408
    %2749 = vmatprep.subr.mxu0 %v405
    %2750 = vmatpush1.msra.mxu0 %v404
    %2751 = vmatprep.subr.mxu0 %v401
    %2752 = vmatpush1.msra.mxu0 %v400
    %2753 = vmatprep.subr.mxu0 %v397
    %2754 = vmatpush1.msra.mxu0 %v396
    %2755 = vmatprep.subr.mxu0 %v393
    %2756 = vmatpush1.msra.mxu0 %v392
    %2757 = vmatprep.subr.mxu0 0.0
    %2758 = vmatpush2.msra.mxu0 0.0
    %2759 = vmatprep.subr.mxu0 0.0
    %2760 = vmatpush2.msra.mxu0 0.0
    %2761 = vmatprep.subr.mxu0 0.0
    %2762 = vmatpush2.msra.mxu0 0.0
    %2763 = vmatprep.subr.mxu0 0.0
    %2764 = vmatpush2.msra.mxu0 0.0
    %2765 = vmatprep.subr.mxu0 0.0
    %2766 = vmatpush2.msra.mxu0 0.0
    %2767 = vmatprep.subr.mxu0 0.0
    %2768 = vmatpush2.msra.mxu0 0.0
    %2769 = vmatprep.subr.mxu0 0.0
    %2770 = vmatpush2.msra.mxu0 0.0
    %2771 = vmatprep.subr.mxu0 0.0
    %2772 = vmatpush2.msra.mxu0 0.0
    %2773 = vmatprep.subr.mxu0 0.0
    %2774 = vmatpush2.msra.mxu0 0.0
    %2775 = vmatprep.subr.mxu0 0.0
    %2776 = vmatpush2.msra.mxu0 0.0
    %2777 = vmatprep.subr.mxu0 0.0
    %2778 = vmatpush2.msra.mxu0 0.0
    %2779 = vmatprep.subr.mxu0 0.0
    %2780 = vmatpush2.msra.mxu0 0.0
    %2781 = vmatprep.subr.mxu0 0.0
    %2782 = vmatpush2.msra.mxu0 0.0
    %2783 = vmatprep.subr.mxu0 0.0
    %2784 = vmatpush2.msra.mxu0 0.0
    %2785 = vmatprep.subr.mxu0 0.0
    %2786 = vmatpush2.msra.mxu0 0.0
    %2787 = vmatprep.subr.mxu0 0.0
    %2788 = vmatpush2.msra.mxu0 0.0
    %2789 = vmatprep.mubr.f32.mxu0 0.0
    %2790 = vmatmul.mubr.f32.gmra.mxu0 %v2482
    %v2791 = vpop.f32.mrf.mxu0
    %v2792 = vadd.f32 0.0, %v2791
    %v2793 = vpop.f32.mrf.mxu0
    %v2794 = vadd.f32 0.0, %v2793
    %2795 = vdwg.mxu0
    %v2796 = vadd.f32 %v2650, %v2721
    %v2797 = vadd.f32 %v2651, %v2723
    %v2798 = vadd.f32 %v2652, %v2792
    %v2799 = vadd.f32 %v2653, %v2794
    %v2800 = vxor.u32 %v2796, 2147483648
    %v2801 = vmul.f32 %v2800, 1.442695
    %v2802 = vpow.pop %v2801
    %v2803 = vadd.f32 %v2802, 1.0
    %v2804 = vrcp.pop %v2803
    %v2805 = vmul.f32 1.0, %v2804
    %v2806 = vxor.u32 %v2797, 2147483648
    %v2807 = vmul.f32 %v2806, 1.442695
    %v2808 = vpow.pop %v2807
    %v2809 = vadd.f32 %v2808, 1.0
    %v2810 = vrcp.pop %v2809
    %v2811 = vmul.f32 1.0, %v2810
    %v2812 = vtanh.pop %v2798
    %v2813 = vxor.u32 %v2799, 2147483648
    %v2814 = vmul.f32 %v2813, 1.442695
    %v2815 = vpow.pop %v2814
    %v2816 = vadd.f32 %v2815, 1.0
    %v2817 = vrcp.pop %v2816
    %v2818 = vmul.f32 1.0, %v2817
    %v2819 = vmul.f32 %v2811, %v2480
    %v2820 = vmul.f32 %v2805, %v2812
    %v2821 = vadd.f32 %v2819, %v2820
    %v2822 = vtanh.pop %v2821
    %v2823 = vmul.f32 %v2818, %v2822
    %2824 = vmatprep.subr.mxu0 %v515
    %2825 = vmatpush1.msra.mxu0 %v514
    %2826 = vmatprep.subr.mxu0 %v511
    %2827 = vmatpush1.msra.mxu0 %v510
    %2828 = vmatprep.subr.mxu0 %v507
    %2829 = vmatpush1.msra.mxu0 %v506
    %2830 = vmatprep.subr.mxu0 %v503
    %2831 = vmatpush1.msra.mxu0 %v502
    %2832 = vmatprep.subr.mxu0 %v499
    %2833 = vmatpush1.msra.mxu0 %v498
    %2834 = vmatprep.subr.mxu0 %v495
    %2835 = vmatpush1.msra.mxu0 %v494
    %2836 = vmatprep.subr.mxu0 %v491
    %2837 = vmatpush1.msra.mxu0 %v490
    %2838 = vmatprep.subr.mxu0 %v487
    %2839 = vmatpush1.msra.mxu0 %v486
    %2840 = vmatprep.subr.mxu0 %v483
    %2841 = vmatpush1.msra.mxu0 %v482
    %2842 = vmatprep.subr.mxu0 %v479
    %2843 = vmatpush1.msra.mxu0 %v478
    %2844 = vmatprep.subr.mxu0 %v475
    %2845 = vmatpush1.msra.mxu0 %v474
    %2846 = vmatprep.subr.mxu0 %v471
    %2847 = vmatpush1.msra.mxu0 %v470
    %2848 = vmatprep.subr.mxu0 %v467
    %2849 = vmatpush1.msra.mxu0 %v466
    %2850 = vmatprep.subr.mxu0 %v463
    %2851 = vmatpush1.msra.mxu0 %v462
    %2852 = vmatprep.subr.mxu0 %v459
    %2853 = vmatpush1.msra.mxu0 %v458
    %2854 = vmatprep.subr.mxu0 %v455
    %2855 = vmatpush1.msra.mxu0 %v454
    %2856 = vmatprep.subr.mxu0 %v579
    %2857 = vmatpush2.msra.mxu0 %v578
    %2858 = vmatprep.subr.mxu0 %v575
    %2859 = vmatpush2.msra.mxu0 %v574
    %2860 = vmatprep.subr.mxu0 %v571
    %2861 = vmatpush2.msra.mxu0 %v570
    %2862 = vmatprep.subr.mxu0 %v567
    %2863 = vmatpush2.msra.mxu0 %v566
    %2864 = vmatprep.subr.mxu0 %v563
    %2865 = vmatpush2.msra.mxu0 %v562
    %2866 = vmatprep.subr.mxu0 %v559
    %2867 = vmatpush2.msra.mxu0 %v558
    %2868 = vmatprep.subr.mxu0 %v555
    %2869 = vmatpush2.msra.mxu0 %v554
    %2870 = vmatprep.subr.mxu0 %v551
    %2871 = vmatpush2.msra.mxu0 %v550
    %2872 = vmatprep.subr.mxu0 %v547
    %2873 = vmatpush2.msra.mxu0 %v546
    %2874 = vmatprep.subr.mxu0 %v543
    %2875 = vmatpush2.msra.mxu0 %v542
    %2876 = vmatprep.subr.mxu0 %v539
    %2877 = vmatpush2.msra.mxu0 %v538
    %2878 = vmatprep.subr.mxu0 %v535
    %2879 = vmatpush2.msra.mxu0 %v534
    %2880 = vmatprep.subr.mxu0 %v531
    %2881 = vmatpush2.msra.mxu0 %v530
    %2882 = vmatprep.subr.mxu0 %v527
    %2883 = vmatpush2.msra.mxu0 %v526
    %2884 = vmatprep.subr.mxu0 %v523
    %2885 = vmatpush2.msra.mxu0 %v522
    %2886 = vmatprep.subr.mxu0 %v519
    %2887 = vmatpush2.msra.mxu0 %v518
    %2888 = vmatprep.mubr.f32.mxu0 %v2648
    %2889 = vmatmul.mubr.f32.gmra.mxu0 %v2823
    %v2890 = vpop.f32.mrf.mxu0
    %v2891 = vadd.f32 %v761, %v2890
    %v2892 = vpop.f32.mrf.mxu0
    %v2893 = vadd.f32 %v765, %v2892
    %2894 = vdwg.mxu0
    %2895 = vmatprep.subr.mxu0 %v517
    %2896 = vmatpush1.msra.mxu0 %v516
    %2897 = vmatprep.subr.mxu0 %v513
    %2898 = vmatpush1.msra.mxu0 %v512
    %2899 = vmatprep.subr.mxu0 %v509
    %2900 = vmatpush1.msra.mxu0 %v508
    %2901 = vmatprep.subr.mxu0 %v505
    %2902 = vmatpush1.msra.mxu0 %v504
    %2903 = vmatprep.subr.mxu0 %v501
    %2904 = vmatpush1.msra.mxu0 %v500
    %2905 = vmatprep.subr.mxu0 %v497
    %2906 = vmatpush1.msra.mxu0 %v496
    %2907 = vmatprep.subr.mxu0 %v493
    %2908 = vmatpush1.msra.mxu0 %v492
    %2909 = vmatprep.subr.mxu0 %v489
    %2910 = vmatpush1.msra.mxu0 %v488
    %2911 = vmatprep.subr.mxu0 %v485
    %2912 = vmatpush1.msra.mxu0 %v484
    %2913 = vmatprep.subr.mxu0 %v481
    %2914 = vmatpush1.msra.mxu0 %v480
    %2915 = vmatprep.subr.mxu0 %v477
    %2916 = vmatpush1.msra.mxu0 %v476
    %2917 = vmatprep.subr.mxu0 %v473
    %2918 = vmatpush1.msra.mxu0 %v472
    %2919 = vmatprep.subr.mxu0 %v469
    %2920 = vmatpush1.msra.mxu0 %v468
    %2921 = vmatprep.subr.mxu0 %v465
    %2922 = vmatpush1.msra.mxu0 %v464
    %2923 = vmatprep.subr.mxu0 %v461
    %2924 = vmatpush1.msra.mxu0 %v460
    %2925 = vmatprep.subr.mxu0 %v457
    %2926 = vmatpush1.msra.mxu0 %v456
    %2927 = vmatprep.subr.mxu0 %v581
    %2928 = vmatpush2.msra.mxu0 %v580
    %2929 = vmatprep.subr.mxu0 %v577
    %2930 = vmatpush2.msra.mxu0 %v576
    %2931 = vmatprep.subr.mxu0 %v573
    %2932 = vmatpush2.msra.mxu0 %v572
    %2933 = vmatprep.subr.mxu0 %v569
    %2934 = vmatpush2.msra.mxu0 %v568
    %2935 = vmatprep.subr.mxu0 %v565
    %2936 = vmatpush2.msra.mxu0 %v564
    %2937 = vmatprep.subr.mxu0 %v561
    %2938 = vmatpush2.msra.mxu0 %v560
    %2939 = vmatprep.subr.mxu0 %v557
    %2940 = vmatpush2.msra.mxu0 %v556
    %2941 = vmatprep.subr.mxu0 %v553
    %2942 = vmatpush2.msra.mxu0 %v552
    %2943 = vmatprep.subr.mxu0 %v549
    %2944 = vmatpush2.msra.mxu0 %v548
    %2945 = vmatprep.subr.mxu0 %v545
    %2946 = vmatpush2.msra.mxu0 %v544
    %2947 = vmatprep.subr.mxu0 %v541
    %2948 = vmatpush2.msra.mxu0 %v540
    %2949 = vmatprep.subr.mxu0 %v537
    %2950 = vmatpush2.msra.mxu0 %v536
    %2951 = vmatprep.subr.mxu0 %v533
    %2952 = vmatpush2.msra.mxu0 %v532
    %2953 = vmatprep.subr.mxu0 %v529
    %2954 = vmatpush2.msra.mxu0 %v528
    %2955 = vmatprep.subr.mxu0 %v525
    %2956 = vmatpush2.msra.mxu0 %v524
    %2957 = vmatprep.subr.mxu0 %v521
    %2958 = vmatpush2.msra.mxu0 %v520
    %2959 = vmatprep.mubr.f32.mxu0 %v2648
    %2960 = vmatmul.mubr.f32.gmra.mxu0 %v2823
    %v2961 = vpop.f32.mrf.mxu0
    %v2962 = vadd.f32 %v769, %v2961
    %v2963 = vpop.f32.mrf.mxu0
    %v2964 = vadd.f32 %v773, %v2963
    %2965 = vdwg.mxu0
    %v2966 = vxor.u32 %v2891, 2147483648
    %v2967 = vmul.f32 %v2966, 1.442695
    %v2968 = vpow.pop %v2967
    %v2969 = vadd.f32 %v2968, 1.0
    %v2970 = vrcp.pop %v2969
    %v2971 = vmul.f32 1.0, %v2970
    %v2972 = vxor.u32 %v2893, 2147483648
    %v2973 = vmul.f32 %v2972, 1.442695
    %v2974 = vpow.pop %v2973
    %v2975 = vadd.f32 %v2974, 1.0
    %v2976 = vrcp.pop %v2975
    %v2977 = vmul.f32 1.0, %v2976
    %v2978 = vtanh.pop %v2962
    %v2979 = vxor.u32 %v2964, 2147483648
    %v2980 = vmul.f32 %v2979, 1.442695
    %v2981 = vpow.pop %v2980
    %v2982 = vadd.f32 %v2981, 1.0
    %v2983 = vrcp.pop %v2982
    %v2984 = vmul.f32 1.0, %v2983
    %v2985 = vmul.f32 %v2977, %v2646
    %v2986 = vmul.f32 %v2971, %v2978
    %v2987 = vadd.f32 %v2985, %v2986
    %v2988 = vtanh.pop %v2987
    %v2989 = vmul.f32 %v2984, %v2988
    %s2990 = scalar_lea.vmem [#allocation2], 224
    %v2991 = vld [vmem:[%s2990] sm:$0xff]
    %v2992 = vld [vmem:[%s2990 + $0x8] sm:$0xff]
    %v2993 = vld [vmem:[%s2990 + $0x10] sm:$0xff]
    %v2994 = vld [vmem:[%s2990 + $0x18] sm:$0xff]
    %2995 = vmatprep.subr.mxu0 %v451
    %2996 = vmatpush1.msra.mxu0 %v450
    %2997 = vmatprep.subr.mxu0 %v447
    %2998 = vmatpush1.msra.mxu0 %v446
    %2999 = vmatprep.subr.mxu0 %v443
    %3000 = vmatpush1.msra.mxu0 %v442
    %3001 = vmatprep.subr.mxu0 %v439
    %3002 = vmatpush1.msra.mxu0 %v438
    %3003 = vmatprep.subr.mxu0 %v435
    %3004 = vmatpush1.msra.mxu0 %v434
    %3005 = vmatprep.subr.mxu0 %v431
    %3006 = vmatpush1.msra.mxu0 %v430
    %3007 = vmatprep.subr.mxu0 %v427
    %3008 = vmatpush1.msra.mxu0 %v426
    %3009 = vmatprep.subr.mxu0 %v423
    %3010 = vmatpush1.msra.mxu0 %v422
    %3011 = vmatprep.subr.mxu0 %v419
    %3012 = vmatpush1.msra.mxu0 %v418
    %3013 = vmatprep.subr.mxu0 %v415
    %3014 = vmatpush1.msra.mxu0 %v414
    %3015 = vmatprep.subr.mxu0 %v411
    %3016 = vmatpush1.msra.mxu0 %v410
    %3017 = vmatprep.subr.mxu0 %v407
    %3018 = vmatpush1.msra.mxu0 %v406
    %3019 = vmatprep.subr.mxu0 %v403
    %3020 = vmatpush1.msra.mxu0 %v402
    %3021 = vmatprep.subr.mxu0 %v399
    %3022 = vmatpush1.msra.mxu0 %v398
    %3023 = vmatprep.subr.mxu0 %v395
    %3024 = vmatpush1.msra.mxu0 %v394
    %3025 = vmatprep.subr.mxu0 %v391
    %3026 = vmatpush1.msra.mxu0 %v390
    %3027 = vmatprep.subr.mxu0 0.0
    %3028 = vmatpush2.msra.mxu0 0.0
    %3029 = vmatprep.subr.mxu0 0.0
    %3030 = vmatpush2.msra.mxu0 0.0
    %3031 = vmatprep.subr.mxu0 0.0
    %3032 = vmatpush2.msra.mxu0 0.0
    %3033 = vmatprep.subr.mxu0 0.0
    %3034 = vmatpush2.msra.mxu0 0.0
    %3035 = vmatprep.subr.mxu0 0.0
    %3036 = vmatpush2.msra.mxu0 0.0
    %3037 = vmatprep.subr.mxu0 0.0
    %3038 = vmatpush2.msra.mxu0 0.0
    %3039 = vmatprep.subr.mxu0 0.0
    %3040 = vmatpush2.msra.mxu0 0.0
    %3041 = vmatprep.subr.mxu0 0.0
    %3042 = vmatpush2.msra.mxu0 0.0
    %3043 = vmatprep.subr.mxu0 0.0
    %3044 = vmatpush2.msra.mxu0 0.0
    %3045 = vmatprep.subr.mxu0 0.0
    %3046 = vmatpush2.msra.mxu0 0.0
    %3047 = vmatprep.subr.mxu0 0.0
    %3048 = vmatpush2.msra.mxu0 0.0
    %3049 = vmatprep.subr.mxu0 0.0
    %3050 = vmatpush2.msra.mxu0 0.0
    %3051 = vmatprep.subr.mxu0 0.0
    %3052 = vmatpush2.msra.mxu0 0.0
    %3053 = vmatprep.subr.mxu0 0.0
    %3054 = vmatpush2.msra.mxu0 0.0
    %3055 = vmatprep.subr.mxu0 0.0
    %3056 = vmatpush2.msra.mxu0 0.0
    %3057 = vmatprep.subr.mxu0 0.0
    %3058 = vmatpush2.msra.mxu0 0.0
    %3059 = vmatprep.mubr.f32.mxu0 0.0
    %3060 = vmatmul.mubr.f32.gmra.mxu0 %v2823
    %v3061 = vpop.f32.mrf.mxu0
    %v3062 = vadd.f32 0.0, %v3061
    %v3063 = vpop.f32.mrf.mxu0
    %v3064 = vadd.f32 0.0, %v3063
    %3065 = vdwg.mxu0
    %3066 = vmatprep.subr.mxu0 %v453
    %3067 = vmatpush1.msra.mxu0 %v452
    %3068 = vmatprep.subr.mxu0 %v449
    %3069 = vmatpush1.msra.mxu0 %v448
    %3070 = vmatprep.subr.mxu0 %v445
    %3071 = vmatpush1.msra.mxu0 %v444
    %3072 = vmatprep.subr.mxu0 %v441
    %3073 = vmatpush1.msra.mxu0 %v440
    %3074 = vmatprep.subr.mxu0 %v437
    %3075 = vmatpush1.msra.mxu0 %v436
    %3076 = vmatprep.subr.mxu0 %v433
    %3077 = vmatpush1.msra.mxu0 %v432
    %3078 = vmatprep.subr.mxu0 %v429
    %3079 = vmatpush1.msra.mxu0 %v428
    %3080 = vmatprep.subr.mxu0 %v425
    %3081 = vmatpush1.msra.mxu0 %v424
    %3082 = vmatprep.subr.mxu0 %v421
    %3083 = vmatpush1.msra.mxu0 %v420
    %3084 = vmatprep.subr.mxu0 %v417
    %3085 = vmatpush1.msra.mxu0 %v416
    %3086 = vmatprep.subr.mxu0 %v413
    %3087 = vmatpush1.msra.mxu0 %v412
    %3088 = vmatprep.subr.mxu0 %v409
    %3089 = vmatpush1.msra.mxu0 %v408
    %3090 = vmatprep.subr.mxu0 %v405
    %3091 = vmatpush1.msra.mxu0 %v404
    %3092 = vmatprep.subr.mxu0 %v401
    %3093 = vmatpush1.msra.mxu0 %v400
    %3094 = vmatprep.subr.mxu0 %v397
    %3095 = vmatpush1.msra.mxu0 %v396
    %3096 = vmatprep.subr.mxu0 %v393
    %3097 = vmatpush1.msra.mxu0 %v392
    %3098 = vmatprep.subr.mxu0 0.0
    %3099 = vmatpush2.msra.mxu0 0.0
    %3100 = vmatprep.subr.mxu0 0.0
    %3101 = vmatpush2.msra.mxu0 0.0
    %3102 = vmatprep.subr.mxu0 0.0
    %3103 = vmatpush2.msra.mxu0 0.0
    %3104 = vmatprep.subr.mxu0 0.0
    %3105 = vmatpush2.msra.mxu0 0.0
    %3106 = vmatprep.subr.mxu0 0.0
    %3107 = vmatpush2.msra.mxu0 0.0
    %3108 = vmatprep.subr.mxu0 0.0
    %3109 = vmatpush2.msra.mxu0 0.0
    %3110 = vmatprep.subr.mxu0 0.0
    %3111 = vmatpush2.msra.mxu0 0.0
    %3112 = vmatprep.subr.mxu0 0.0
    %3113 = vmatpush2.msra.mxu0 0.0
    %3114 = vmatprep.subr.mxu0 0.0
    %3115 = vmatpush2.msra.mxu0 0.0
    %3116 = vmatprep.subr.mxu0 0.0
    %3117 = vmatpush2.msra.mxu0 0.0
    %3118 = vmatprep.subr.mxu0 0.0
    %3119 = vmatpush2.msra.mxu0 0.0
    %3120 = vmatprep.subr.mxu0 0.0
    %3121 = vmatpush2.msra.mxu0 0.0
    %3122 = vmatprep.subr.mxu0 0.0
    %3123 = vmatpush2.msra.mxu0 0.0
    %3124 = vmatprep.subr.mxu0 0.0
    %3125 = vmatpush2.msra.mxu0 0.0
    %3126 = vmatprep.subr.mxu0 0.0
    %3127 = vmatpush2.msra.mxu0 0.0
    %3128 = vmatprep.subr.mxu0 0.0
    %3129 = vmatpush2.msra.mxu0 0.0
    %3130 = vmatprep.mubr.f32.mxu0 0.0
    %3131 = vmatmul.mubr.f32.gmra.mxu0 %v2823
    %v3132 = vpop.f32.mrf.mxu0
    %v3133 = vadd.f32 0.0, %v3132
    %v3134 = vpop.f32.mrf.mxu0
    %v3135 = vadd.f32 0.0, %v3134
    %3136 = vdwg.mxu0
    %v3137 = vadd.f32 %v2991, %v3062
    %v3138 = vadd.f32 %v2992, %v3064
    %v3139 = vadd.f32 %v2993, %v3133
    %v3140 = vadd.f32 %v2994, %v3135
    %v3141 = vxor.u32 %v3137, 2147483648
    %v3142 = vmul.f32 %v3141, 1.442695
    %v3143 = vpow.pop %v3142
    %v3144 = vadd.f32 %v3143, 1.0
    %v3145 = vrcp.pop %v3144
    %v3146 = vmul.f32 1.0, %v3145
    %v3147 = vxor.u32 %v3138, 2147483648
    %v3148 = vmul.f32 %v3147, 1.442695
    %v3149 = vpow.pop %v3148
    %v3150 = vadd.f32 %v3149, 1.0
    %v3151 = vrcp.pop %v3150
    %v3152 = vmul.f32 1.0, %v3151
    %v3153 = vtanh.pop %v3139
    %v3154 = vxor.u32 %v3140, 2147483648
    %v3155 = vmul.f32 %v3154, 1.442695
    %v3156 = vpow.pop %v3155
    %v3157 = vadd.f32 %v3156, 1.0
    %v3158 = vrcp.pop %v3157
    %v3159 = vmul.f32 1.0, %v3158
    %v3160 = vmul.f32 %v3152, %v2821
    %v3161 = vmul.f32 %v3146, %v3153
    %v3162 = vadd.f32 %v3160, %v3161
    %v3163 = vtanh.pop %v3162
    %v3164 = vmul.f32 %v3159, %v3163
    %3165 = vmatprep.subr.mxu0 %v515
    %3166 = vmatpush1.msra.mxu0 %v514
    %3167 = vmatprep.subr.mxu0 %v511
    %3168 = vmatpush1.msra.mxu0 %v510
    %3169 = vmatprep.subr.mxu0 %v507
    %3170 = vmatpush1.msra.mxu0 %v506
    %3171 = vmatprep.subr.mxu0 %v503
    %3172 = vmatpush1.msra.mxu0 %v502
    %3173 = vmatprep.subr.mxu0 %v499
    %3174 = vmatpush1.msra.mxu0 %v498
    %3175 = vmatprep.subr.mxu0 %v495
    %3176 = vmatpush1.msra.mxu0 %v494
    %3177 = vmatprep.subr.mxu0 %v491
    %3178 = vmatpush1.msra.mxu0 %v490
    %3179 = vmatprep.subr.mxu0 %v487
    %3180 = vmatpush1.msra.mxu0 %v486
    %3181 = vmatprep.subr.mxu0 %v483
    %3182 = vmatpush1.msra.mxu0 %v482
    %3183 = vmatprep.subr.mxu0 %v479
    %3184 = vmatpush1.msra.mxu0 %v478
    %3185 = vmatprep.subr.mxu0 %v475
    %3186 = vmatpush1.msra.mxu0 %v474
    %3187 = vmatprep.subr.mxu0 %v471
    %3188 = vmatpush1.msra.mxu0 %v470
    %3189 = vmatprep.subr.mxu0 %v467
    %3190 = vmatpush1.msra.mxu0 %v466
    %3191 = vmatprep.subr.mxu0 %v463
    %3192 = vmatpush1.msra.mxu0 %v462
    %3193 = vmatprep.subr.mxu0 %v459
    %3194 = vmatpush1.msra.mxu0 %v458
    %3195 = vmatprep.subr.mxu0 %v455
    %3196 = vmatpush1.msra.mxu0 %v454
    %3197 = vmatprep.subr.mxu0 %v579
    %3198 = vmatpush2.msra.mxu0 %v578
    %3199 = vmatprep.subr.mxu0 %v575
    %3200 = vmatpush2.msra.mxu0 %v574
    %3201 = vmatprep.subr.mxu0 %v571
    %3202 = vmatpush2.msra.mxu0 %v570
    %3203 = vmatprep.subr.mxu0 %v567
    %3204 = vmatpush2.msra.mxu0 %v566
    %3205 = vmatprep.subr.mxu0 %v563
    %3206 = vmatpush2.msra.mxu0 %v562
    %3207 = vmatprep.subr.mxu0 %v559
    %3208 = vmatpush2.msra.mxu0 %v558
    %3209 = vmatprep.subr.mxu0 %v555
    %3210 = vmatpush2.msra.mxu0 %v554
    %3211 = vmatprep.subr.mxu0 %v551
    %3212 = vmatpush2.msra.mxu0 %v550
    %3213 = vmatprep.subr.mxu0 %v547
    %3214 = vmatpush2.msra.mxu0 %v546
    %3215 = vmatprep.subr.mxu0 %v543
    %3216 = vmatpush2.msra.mxu0 %v542
    %3217 = vmatprep.subr.mxu0 %v539
    %3218 = vmatpush2.msra.mxu0 %v538
    %3219 = vmatprep.subr.mxu0 %v535
    %3220 = vmatpush2.msra.mxu0 %v534
    %3221 = vmatprep.subr.mxu0 %v531
    %3222 = vmatpush2.msra.mxu0 %v530
    %3223 = vmatprep.subr.mxu0 %v527
    %3224 = vmatpush2.msra.mxu0 %v526
    %3225 = vmatprep.subr.mxu0 %v523
    %3226 = vmatpush2.msra.mxu0 %v522
    %3227 = vmatprep.subr.mxu0 %v519
    %3228 = vmatpush2.msra.mxu0 %v518
    %3229 = vmatprep.mubr.f32.mxu0 %v2989
    %3230 = vmatmul.mubr.f32.gmra.mxu0 %v3164
    %v3231 = vpop.f32.mrf.mxu0
    %v3232 = vadd.f32 %v761, %v3231
    %v3233 = vpop.f32.mrf.mxu0
    %v3234 = vadd.f32 %v765, %v3233
    %3235 = vdwg.mxu0
    %3236 = vmatprep.subr.mxu0 %v517
    %3237 = vmatpush1.msra.mxu0 %v516
    %3238 = vmatprep.subr.mxu0 %v513
    %3239 = vmatpush1.msra.mxu0 %v512
    %3240 = vmatprep.subr.mxu0 %v509
    %3241 = vmatpush1.msra.mxu0 %v508
    %3242 = vmatprep.subr.mxu0 %v505
    %3243 = vmatpush1.msra.mxu0 %v504
    %3244 = vmatprep.subr.mxu0 %v501
    %3245 = vmatpush1.msra.mxu0 %v500
    %3246 = vmatprep.subr.mxu0 %v497
    %3247 = vmatpush1.msra.mxu0 %v496
    %3248 = vmatprep.subr.mxu0 %v493
    %3249 = vmatpush1.msra.mxu0 %v492
    %3250 = vmatprep.subr.mxu0 %v489
    %3251 = vmatpush1.msra.mxu0 %v488
    %3252 = vmatprep.subr.mxu0 %v485
    %3253 = vmatpush1.msra.mxu0 %v484
    %3254 = vmatprep.subr.mxu0 %v481
    %3255 = vmatpush1.msra.mxu0 %v480
    %3256 = vmatprep.subr.mxu0 %v477
    %3257 = vmatpush1.msra.mxu0 %v476
    %3258 = vmatprep.subr.mxu0 %v473
    %3259 = vmatpush1.msra.mxu0 %v472
    %3260 = vmatprep.subr.mxu0 %v469
    %3261 = vmatpush1.msra.mxu0 %v468
    %3262 = vmatprep.subr.mxu0 %v465
    %3263 = vmatpush1.msra.mxu0 %v464
    %3264 = vmatprep.subr.mxu0 %v461
    %3265 = vmatpush1.msra.mxu0 %v460
    %3266 = vmatprep.subr.mxu0 %v457
    %3267 = vmatpush1.msra.mxu0 %v456
    %3268 = vmatprep.subr.mxu0 %v581
    %3269 = vmatpush2.msra.mxu0 %v580
    %3270 = vmatprep.subr.mxu0 %v577
    %3271 = vmatpush2.msra.mxu0 %v576
    %3272 = vmatprep.subr.mxu0 %v573
    %3273 = vmatpush2.msra.mxu0 %v572
    %3274 = vmatprep.subr.mxu0 %v569
    %3275 = vmatpush2.msra.mxu0 %v568
    %3276 = vmatprep.subr.mxu0 %v565
    %3277 = vmatpush2.msra.mxu0 %v564
    %3278 = vmatprep.subr.mxu0 %v561
    %3279 = vmatpush2.msra.mxu0 %v560
    %3280 = vmatprep.subr.mxu0 %v557
    %3281 = vmatpush2.msra.mxu0 %v556
    %3282 = vmatprep.subr.mxu0 %v553
    %3283 = vmatpush2.msra.mxu0 %v552
    %3284 = vmatprep.subr.mxu0 %v549
    %3285 = vmatpush2.msra.mxu0 %v548
    %3286 = vmatprep.subr.mxu0 %v545
    %3287 = vmatpush2.msra.mxu0 %v544
    %3288 = vmatprep.subr.mxu0 %v541
    %3289 = vmatpush2.msra.mxu0 %v540
    %3290 = vmatprep.subr.mxu0 %v537
    %3291 = vmatpush2.msra.mxu0 %v536
    %3292 = vmatprep.subr.mxu0 %v533
    %3293 = vmatpush2.msra.mxu0 %v532
    %3294 = vmatprep.subr.mxu0 %v529
    %3295 = vmatpush2.msra.mxu0 %v528
    %3296 = vmatprep.subr.mxu0 %v525
    %3297 = vmatpush2.msra.mxu0 %v524
    %3298 = vmatprep.subr.mxu0 %v521
    %3299 = vmatpush2.msra.mxu0 %v520
    %3300 = vmatprep.mubr.f32.mxu0 %v2989
    %3301 = vmatmul.mubr.f32.gmra.mxu0 %v3164
    %v3302 = vpop.f32.mrf.mxu0
    %v3303 = vadd.f32 %v769, %v3302
    %v3304 = vpop.f32.mrf.mxu0
    %v3305 = vadd.f32 %v773, %v3304
    %3306 = vdwg.mxu0
    %v3307 = vxor.u32 %v3232, 2147483648
    %v3308 = vmul.f32 %v3307, 1.442695
    %v3309 = vpow.pop %v3308
    %v3310 = vadd.f32 %v3309, 1.0
    %v3311 = vrcp.pop %v3310
    %v3312 = vmul.f32 1.0, %v3311
    %v3313 = vxor.u32 %v3234, 2147483648
    %v3314 = vmul.f32 %v3313, 1.442695
    %v3315 = vpow.pop %v3314
    %v3316 = vadd.f32 %v3315, 1.0
    %v3317 = vrcp.pop %v3316
    %v3318 = vmul.f32 1.0, %v3317
    %v3319 = vtanh.pop %v3303
    %v3320 = vxor.u32 %v3305, 2147483648
    %v3321 = vmul.f32 %v3320, 1.442695
    %v3322 = vpow.pop %v3321
    %v3323 = vadd.f32 %v3322, 1.0
    %v3324 = vrcp.pop %v3323
    %v3325 = vmul.f32 1.0, %v3324
    %v3326 = vmul.f32 %v3318, %v2987
    %v3327 = vmul.f32 %v3312, %v3319
    %v3328 = vadd.f32 %v3326, %v3327
    %v3329 = vtanh.pop %v3328
    %v3330 = vmul.f32 %v3325, %v3329
    %3331 = vst [vmem:[#allocation8] sm:$0xff] %v3164
    %3332 = vst [vmem:[#allocation9] sm:$0xff] %v3162
    %s3333 = scalar_lea.vmem [#allocation8], 8
    %3334 = vst [vmem:[%s3333] sm:$0xff] %v3330
    %s3335 = scalar_lea.vmem [#allocation9], 8
    %3336 = vst [vmem:[%s3335] sm:$0xff] %v3328
    %v3337 = vld [vmem:[%s6] sm:$0xff]
    %v3338 = vld [vmem:[%s6 + $0x8] sm:$0xff]
    %v3339 = vld [vmem:[%s6 + $0x10] sm:$0xff]
    %v3340 = vld [vmem:[%s6 + $0x18] sm:$0xff]
    %v3341 = vld [vmem:[%s6 + $0x20] sm:$0xff]
    %v3342 = vld [vmem:[%s6 + $0x28] sm:$0xff]
    %v3343 = vld [vmem:[%s6 + $0x30] sm:$0xff]
    %v3344 = vld [vmem:[%s6 + $0x38] sm:$0xff]
    %v3345 = vld [vmem:[%s6 + $0x40] sm:$0xff]
    %v3346 = vld [vmem:[%s6 + $0x48] sm:$0xff]
    %v3347 = vld [vmem:[%s6 + $0x50] sm:$0xff]
    %v3348 = vld [vmem:[%s6 + $0x58] sm:$0xff]
    %v3349 = vld [vmem:[%s6 + $0x60] sm:$0xff]
    %v3350 = vld [vmem:[%s6 + $0x68] sm:$0xff]
    %v3351 = vld [vmem:[%s6 + $0x70] sm:$0xff]
    %v3352 = vld [vmem:[%s6 + $0x78] sm:$0xff]
    %v3353 = vld [vmem:[%s7] sm:$0x1]
    %v3355 = vlaneseq
    %v3356 = vshrl.u32 %v3355, 7
    %v3357 = vsub.s32 0, %v3356
    %v3358 = vrot.slane %v3353, %v3357
    %3360 = vmatprep.subr.mxu0 0.0
    %3361 = vmatpush1.msra.mxu0 %v3352
    %3362 = vmatprep.subr.mxu0 0.0
    %3363 = vmatpush1.msra.mxu0 %v3351
    %3364 = vmatprep.subr.mxu0 0.0
    %3365 = vmatpush1.msra.mxu0 %v3350
    %3366 = vmatprep.subr.mxu0 0.0
    %3367 = vmatpush1.msra.mxu0 %v3349
    %3368 = vmatprep.subr.mxu0 0.0
    %3369 = vmatpush1.msra.mxu0 %v3348
    %3370 = vmatprep.subr.mxu0 0.0
    %3371 = vmatpush1.msra.mxu0 %v3347
    %3372 = vmatprep.subr.mxu0 0.0
    %3373 = vmatpush1.msra.mxu0 %v3346
    %3374 = vmatprep.subr.mxu0 0.0
    %3375 = vmatpush1.msra.mxu0 %v3345
    %3376 = vmatprep.subr.mxu0 0.0
    %3377 = vmatpush1.msra.mxu0 %v3344
    %3378 = vmatprep.subr.mxu0 0.0
    %3379 = vmatpush1.msra.mxu0 %v3343
    %3380 = vmatprep.subr.mxu0 0.0
    %3381 = vmatpush1.msra.mxu0 %v3342
    %3382 = vmatprep.subr.mxu0 0.0
    %3383 = vmatpush1.msra.mxu0 %v3341
    %3384 = vmatprep.subr.mxu0 0.0
    %3385 = vmatpush1.msra.mxu0 %v3340
    %3386 = vmatprep.subr.mxu0 0.0
    %3387 = vmatpush1.msra.mxu0 %v3339
    %3388 = vmatprep.subr.mxu0 0.0
    %3389 = vmatpush1.msra.mxu0 %v3338
    %3390 = vmatprep.subr.mxu0 0.0
    %3391 = vmatpush1.msra.mxu0 %v3337
    %3392 = vmatprep.subr.mxu0 0.0
    %3393 = vmatpush2.msra.mxu0 0.0
    %3394 = vmatprep.subr.mxu0 0.0
    %3395 = vmatpush2.msra.mxu0 0.0
    %3396 = vmatprep.subr.mxu0 0.0
    %3397 = vmatpush2.msra.mxu0 0.0
    %3398 = vmatprep.subr.mxu0 0.0
    %3399 = vmatpush2.msra.mxu0 0.0
    %3400 = vmatprep.subr.mxu0 0.0
    %3401 = vmatpush2.msra.mxu0 0.0
    %3402 = vmatprep.subr.mxu0 0.0
    %3403 = vmatpush2.msra.mxu0 0.0
    %3404 = vmatprep.subr.mxu0 0.0
    %3405 = vmatpush2.msra.mxu0 0.0
    %3406 = vmatprep.subr.mxu0 0.0
    %3407 = vmatpush2.msra.mxu0 0.0
    %3408 = vmatprep.subr.mxu0 0.0
    %3409 = vmatpush2.msra.mxu0 0.0
    %3410 = vmatprep.subr.mxu0 0.0
    %3411 = vmatpush2.msra.mxu0 0.0
    %3412 = vmatprep.subr.mxu0 0.0
    %3413 = vmatpush2.msra.mxu0 0.0
    %3414 = vmatprep.subr.mxu0 0.0
    %3415 = vmatpush2.msra.mxu0 0.0
    %3416 = vmatprep.subr.mxu0 0.0
    %3417 = vmatpush2.msra.mxu0 0.0
    %3418 = vmatprep.subr.mxu0 0.0
    %3419 = vmatpush2.msra.mxu0 0.0
    %3420 = vmatprep.subr.mxu0 0.0
    %3421 = vmatpush2.msra.mxu0 0.0
    %3422 = vmatprep.subr.mxu0 0.0
    %3423 = vmatpush2.msra.mxu0 0.0
    %3424 = vmatprep.mubr.f32.mxu0 0.0
    %3425 = vmatmul.mubr.f32.gmra.mxu0 %v3330
    %v3426 = vpop.f32.mrf.mxu0
    %v3427 = vadd.f32 %v3358, %v3426
    %v3428 = vpop.f32.mrf.mxu0
    %3429 = vdwg.mxu0
    %v3430 = vtanh.pop %v3427
    %vm3431 = vcmask 15360
    %3432 = vst.msk [vmem:[%s8] sm:$0xff] %vm3431, %v3430
    // Predicated region
    $region42: #{tpu_custom_call.1} parent=1 // pred_check
      _
    $region43: #{tpu_custom_call.1} parent=1 // pred_check_branch
      %3434 = sbr.rel (0) target = $region45
    $region44: #{tpu_custom_call.1} parent=1 // pred_region
      _
    $region45: #{tpu_custom_call.1} parent=1 // pred_fallthru
      _
    // Predicated region
    $region46: #{tpu_custom_call.1} parent=1 // pred_check
      _
    $region47: #{tpu_custom_call.1} parent=1 // pred_check_branch
      %3436 = sbr.rel (0) target = $region49
    $region48: #{tpu_custom_call.1} parent=1 // pred_region
      %s3438 = ssub.s32 256, 256
      %3439 = vsyncadd [#allocation5], %s3438
      %s3440 = sshll.u32 [#allocation8], 4
      %s3441 = int_to_ptr.vmem [resolvable:$true] %s3440
      %3446 = dma.vmem_to_hbm [thread:$0]  %s3441, 256, %s9, [#allocation5], 128, 128, 8
    $region49: #{tpu_custom_call.1} parent=1 // pred_fallthru
      _
    // Predicated region
    $region50: #{tpu_custom_call.1} parent=1 // pred_check
      _
    $region51: #{tpu_custom_call.1} parent=1 // pred_check_branch
      %3448 = sbr.rel (0) target = $region53
    $region52: #{tpu_custom_call.1} parent=1 // pred_region
      %s3450 = ssub.s32 256, 256
      %3451 = vsyncadd [#allocation10], %s3450
      %s3452 = sshll.u32 [#allocation9], 4
      %s3453 = int_to_ptr.vmem [resolvable:$true] %s3452
      %3458 = dma.vmem_to_hbm [thread:$0]  %s3453, 256, %s10, [#allocation10], 128, 128, 8
    $region53: #{tpu_custom_call.1} parent=1 // pred_fallthru
      _
    // Predicated region
    $region54: #{tpu_custom_call.1} parent=1 // pred_check
      _
    $region55: #{tpu_custom_call.1} parent=1 // pred_check_branch
      %3460 = sbr.rel (0) target = $region57
    $region56: #{tpu_custom_call.1} parent=1 // pred_region
      _
    $region57: #{tpu_custom_call.1} parent=1 // pred_fallthru
      _
    // Predicated region
    $region58: #{tpu_custom_call.1} parent=1 // pred_check
      _
    $region59: #{tpu_custom_call.1} parent=1 // pred_check_branch
      %3462 = sbr.rel (0) target = $region61
    $region60: #{tpu_custom_call.1} parent=1 // pred_region
      %3463 = dma.done [#allocation5], 256
    $region61: #{tpu_custom_call.1} parent=1 // pred_fallthru
      _
    // Predicated region
    $region62: #{tpu_custom_call.1} parent=1 // pred_check
      _
    $region63: #{tpu_custom_call.1} parent=1 // pred_check_branch
      %3465 = sbr.rel (0) target = $region65
    $region64: #{tpu_custom_call.1} parent=1 // pred_region
      %3466 = dma.done [#allocation10], 256
    $region65: #{tpu_custom_call.1} parent=1 // pred_fallthru
      _
    %3467 = vsyncpa [#allocation4], 1
    %3468 = vsyncpa [#allocation7], 1
    %3469 = vsyncpa [#allocation5], 1
    %3470 = vsyncpa [#allocation10], 1

</llo_original>
